<compile_context>
chip_gen: v7x
topology: tpu7x:2x2x1
jax: 0.10.0
libtpu: 0.0.40
codegen_flags: <defaults>
</compile_context>

<pallas_src>
import numpy as np
import jax
import jax.numpy as jnp
from jax.experimental import pallas as pl
from jax.experimental.pallas import tpu as pltpu


# ----------------------- host-side constant preprocessing -----------------------

def _upsample_matrix(out_size, in_size):
    """PyTorch bilinear interpolation weights, align_corners=False."""
    scale = in_size / out_size
    t = np.arange(out_size, dtype=np.float64)
    src = np.maximum(scale * (t + 0.5) - 0.5, 0.0)
    i0 = np.clip(np.floor(src).astype(np.int64), 0, in_size - 1)
    i1 = np.minimum(i0 + 1, in_size - 1)
    lam = src - i0
    U = np.zeros((out_size, in_size), np.float32)
    U[np.arange(out_size), i0] += (1.0 - lam).astype(np.float32)
    U[np.arange(out_size), i1] += lam.astype(np.float32)
    return U


def _upsample_kron(ht, wt, hs, ws):
    """(Ht*Wt, Hs*Ws) operator: bilinear upsample on the row-major flattened spatial index."""
    return np.kron(_upsample_matrix(ht, hs), _upsample_matrix(wt, ws))


def _rearrange_smooth(w, b, E, H, W):
    """Fold torch's `.view(B, c_view, -1).mean(-1)` regrouping into the Linear weight.

    Returns (w_r, b_r, band_rows, nb) such that, for a channels-last-flattened feature
    p of shape (H*W, E):  out = sum_s mean(rows of band s of p) @ w_r[s] + b_r
    equals  Linear(mean(p_nchw.view(B, c_view, -1), -1)).
    """
    c_view, e_out = w.shape
    S = H * W
    total = E * S
    assert total % c_view == 0, "torch .view(B,C,-1) regrouping requires divisibility"
    G = total // c_view                       # elements per group (NCHW flat order)
    if G <= S:                                # each group lives inside one channel
        assert S % G == 0 and G % W == 0, "group must align to whole spatial rows"
        nb = S // G                           # row-bands per channel
        w_r = jnp.stack([w[s::nb, :] for s in range(nb)], axis=0)     # (nb, E, e_out)
        band_rows = G
    else:                                     # each group spans k whole channels
        assert G % S == 0, "group must cover whole channels"
        k = G // S
        w_r = (jnp.repeat(w, k, axis=0) / float(k))[None, :, :]       # (1, E, e_out)
        nb, band_rows = 1, S
    b_r = jnp.asarray(b, jnp.float32).reshape(1, e_out)
    return w_r, b_r, band_rows, nb


def _band_rows(S, nb, band_rows):
    """(nb, S) lane-weight rows: row s averages the spatial band [s*band_rows, (s+1)*band_rows)."""
    A = np.zeros((nb, S), np.float32)
    for s in range(nb):
        A[s, s * band_rows:(s + 1) * band_rows] = 1.0 / band_rows
    return A


# --------------------------------- fused kernel --------------------------------

def fpn_forward(params, c2, c3, c4, c5):
    """Fused FPN forward. Returns [smooth1(p2), smooth2(p3), smooth3(p4), smooth4(p5)]."""
    f32 = jnp.float32
    B, C2, H2, W2 = c2.shape
    _, C3, H3, W3 = c3.shape
    _, C4, H4, W4 = c4.shape
    _, C5, H5, W5 = c5.shape
    S2, S3, S4, S5 = H2 * W2, H3 * W3, H4 * W4, H5 * W5
    E = params["toplayer_w"].shape[1]

    # NCHW -> (B, C, H*W): pure reshape, no transpose, no extra HBM round trip.
    X2 = c2.reshape(B, C2, S2)
    X3 = c3.reshape(B, C3, S3)
    X4 = c4.reshape(B, C4, S4)
    X5 = c5.reshape(B, C5, S5)

    # Smooth heads with the torch `.view(B, c, -1).mean(-1)` regrouping folded in.
    w5r, b5r, br5, nb5 = _rearrange_smooth(params["smooth4_w"], params["smooth4_b"], E, H5, W5)
    w4r, b4r, br4, nb4 = _rearrange_smooth(params["smooth3_w"], params["smooth3_b"], E, H4, W4)
    w3r, b3r, _br3, nb3 = _rearrange_smooth(params["smooth2_w"], params["smooth2_b"], E, H3, W3)
    w2r, b2r, _br2, nb2 = _rearrange_smooth(params["smooth1_w"], params["smooth1_b"], E, H2, W2)
    # The p2/p3 algebraic collapse below needs those heads to consume only the GLOBAL
    # spatial mean (holds for embed_dim=128 with this pyramid).
    assert nb2 == 1 and nb3 == 1, "p2/p3 collapse requires global-mean smooth heads"

    # Bilinear upsample operators: only the small pieces we actually need.
    #   p4 = U54 @ p5 + l4 is kept (tiny).  p3/p2 are never materialized: mean() commutes
    #   through the linear chain, so U32/U43 collapse to column-mean weight vectors.
    U54 = _upsample_kron(H4, W4, H5, W5)                  # (S4, S5)
    U43 = _upsample_kron(H3, W3, H4, W4)                  # (S3, S4)
    U32 = _upsample_kron(H2, W2, H3, W3)                  # (S2, S3)
    v23 = U32.mean(axis=0).astype(np.float32)             # mean_rows(U32 @ .) weights, (S3,)
    v34 = U43.mean(axis=0).astype(np.float32)             # mean_rows(U43 @ .) weights, (S4,)
    v24 = (v23 @ U43).astype(np.float32)                  # mean_rows(U32 @ U43 @ .), (S4,)

    # Conv weights in transposed form; in-kernel features live as (E, S).
    wtT = jnp.asarray(params["toplayer_w"], f32).T                      # (E, 512)
    btc = jnp.asarray(params["toplayer_b"], f32).reshape(E, 1)
    wl1T = jnp.asarray(params["lat1_w"], f32).T                         # (E, 256)
    bl1c = jnp.asarray(params["lat1_b"], f32).reshape(E, 1)
    U54T = jnp.asarray(U54.T, f32)                                      # (S5, S4)

    # Lane-weight rows + channel weights for everything derived from p5 / p4.
    LW5 = jnp.asarray(_band_rows(S5, nb5, br5))                         # (nb5, S5)
    WS5 = w5r                                                           # (nb5, E, E)
    LW4 = jnp.asarray(np.concatenate(
        [_band_rows(S4, nb4, br4), v34[None, :], v24[None, :]], axis=0))  # (nb4+2, S4)
    WS4 = jnp.concatenate([w4r, w3r[0:1], w2r[0:1]], axis=0)            # (nb4+2, E, E)

    # x2 / x3 contributions to the collapsed p2/p3 heads (lateral convs folded host-side).
    v23row = jnp.asarray(v23).reshape(1, S3)
    W3x = jnp.asarray(params["lat2_w"], f32) @ w3r[0]                   # (C3, E)
    W2x3 = jnp.asarray(params["lat2_w"], f32) @ w2r[0]                  # (C3, E)
    W2x2 = jnp.asarray(params["lat3_w"], f32) @ w2r[0]                  # (C2, E)
    c3const = jnp.asarray(params["lat2_b"], f32).reshape(1, E) @ w3r[0] + b3r
    c2const = (jnp.asarray(params["lat2_b"] + params["lat3_b"], f32).reshape(1, E)
               @ w2r[0] + b2r)

    nb4s, nb5s = int(nb4), int(nb5)

    def kernel(x2_ref, x3_ref, x4_ref, x5_ref,
               wtT_ref, btc_ref, wl1T_ref, bl1c_ref, u54T_ref,
               lw5_ref, ws5_ref, b5_ref,
               lw4_ref, ws4_ref, b4_ref,
               v23_ref, w3x_ref, c3_ref,
               w2x3_ref, w2x2_ref, c2_ref,
               out_ref):
        X2b = x2_ref[0]                          # (C2, S2)  NCHW-flat, lane-dense
        X3b = x3_ref[0]                          # (C3, S3)
        X4b = x4_ref[0]                          # (C4, S4)
        X5b = x5_ref[0]                          # (C5, S5)

        # 1x1 convs + the single surviving bilinear upsample, in transposed (E, S) layout.
        p5t = jnp.dot(wtT_ref[...], X5b, preferred_element_type=jnp.float32) + btc_ref[...]
        l4t = jnp.dot(wl1T_ref[...], X4b, preferred_element_type=jnp.float32) + bl1c_ref[...]
        p4t = jnp.dot(p5t, u54T_ref[...], preferred_element_type=jnp.float32) + l4t

        def contrib(feat_t, lane_w, chan_w):
            # (sum_x feat_t[:, x] * lane_w[x]) @ chan_w  as VPU multiply + XLU reductions.
            col = jnp.sum(feat_t * lane_w, axis=1, keepdims=True)       # (C, 1)
            return jnp.sum(col * chan_w, axis=0, keepdims=True)         # (1, E)

        # smooth4(p5): row-band means folded into lane-weight rows (static unroll).
        LW5v = lw5_ref[...]
        out5 = b5_ref[...]
        for s in range(nb5s):
            out5 = out5 + contrib(p5t, LW5v[s:s + 1, :], ws5_ref[s])

        # smooth3(p4): same pattern.
        LW4v = lw4_ref[...]
        out4 = b4_ref[...]
        for s in range(nb4s):
            out4 = out4 + contrib(p4t, LW4v[s:s + 1, :], ws4_ref[s])

        # smooth2(p3): global mean of p3 == v34-weighted mean of p4 + uniform mean of x3
        # hit with the folded (lat2 @ smooth2) weight.  p3 is never materialized.
        x3m = jnp.mean(X3b, axis=1, keepdims=True)                      # (C3, 1)
        out3 = (c3_ref[...]
                + contrib(p4t, LW4v[nb4s:nb4s + 1, :], ws4_ref[nb4s])
                + jnp.sum(x3m * w3x_ref[...], axis=0, keepdims=True))

        # smooth1(p2): global mean of p2 == v24-weighted mean of p4 + v23-weighted mean of
        # x3 + uniform mean of x2, each hit with folded weights.  p2 never materialized.
        x2m = jnp.mean(X2b, axis=1, keepdims=True)                      # (C2, 1)
        x3w = jnp.sum(X3b * v23_ref[...], axis=1, keepdims=True)        # (C3, 1)
        out2 = (c2_ref[...]
                + contrib(p4t, LW4v[nb4s + 1:nb4s + 2, :], ws4_ref[nb4s + 1])
                + jnp.sum(x3w * w2x3_ref[...], axis=0, keepdims=True)
                + jnp.sum(x2m * w2x2_ref[...], axis=0, keepdims=True))

        # Consolidated (1, 4, E) output block: one writeback DMA per batch element.
        out_ref[0, 0:1, :] = out2.astype(out_ref.dtype)
        out_ref[0, 1:2, :] = out3.astype(out_ref.dtype)
        out_ref[0, 2:3, :] = out4.astype(out_ref.dtype)
        out_ref[0, 3:4, :] = out5.astype(out_ref.dtype)

    inputs = [X2, X3, X4, X5,
              wtT, btc, wl1T, bl1c, U54T,
              LW5, WS5, b5r,
              LW4, WS4, b4r,
              v23row, W3x, c3const,
              W2x3, W2x2, c2const]

    def batched_spec(a):
        n = a.ndim
        return pl.BlockSpec((1,) + a.shape[1:], lambda b, _n=n: (b,) + (0,) * (_n - 1))

    def shared_spec(a):
        n = a.ndim
        return pl.BlockSpec(a.shape, lambda b, _n=n: (0,) * _n)

    in_specs = [batched_spec(a) for a in inputs[:4]] + [shared_spec(a) for a in inputs[4:]]

    out = pl.pallas_call(
        kernel,
        out_shape=jax.ShapeDtypeStruct((B, 4, E), f32),
        grid=(B,),
        in_specs=in_specs,
        out_specs=pl.BlockSpec((1, 4, E), lambda b: (b, 0, 0)),
        compiler_params=pltpu.CompilerParams(
            dimension_semantics=("parallel",)),          # one batch element per TC on v7x
    )(*inputs)

    return [out[:, 0, :], out[:, 1, :], out[:, 2, :], out[:, 3, :]]


# ----------------------------------- reference ---------------------------------

def reference_forward(params, c2, c3, c4, c5):
    def conv(x, w, b):
        return jnp.einsum("bchw,ce->behw", x, w) + b[None, :, None, None]

    def up_add(x, y):
        _, _, Hs, Ws = x.shape
        _, _, Ht, Wt = y.shape
        Uh = jnp.asarray(_upsample_matrix(Ht, Hs))
        Uw = jnp.asarray(_upsample_matrix(Wt, Ws))
        return jnp.einsum("th,behw,sw->bets", Uh, x, Uw) + y

    def mean_lin(p, C, w, b):
        m = p.reshape(p.shape[0], C, -1).mean(-1)
        return m @ w + b

    p5 = conv(c5, params["toplayer_w"], params["toplayer_b"])
    p4 = up_add(p5, conv(c4, params["lat1_w"], params["lat1_b"]))
    p3 = up_add(p4, conv(c3, params["lat2_w"], params["lat2_b"]))
    p2 = up_add(p3, conv(c2, params["lat3_w"], params["lat3_b"]))
    return [mean_lin(p2, 64, params["smooth1_w"], params["smooth1_b"]),
            mean_lin(p3, 128, params["smooth2_w"], params["smooth2_b"]),
            mean_lin(p4, 256, params["smooth3_w"], params["smooth3_b"]),
            mean_lin(p5, 512, params["smooth4_w"], params["smooth4_b"])]


# ------------------------------------ params ------------------------------------

def init_params(key, embed_dim):
    ks = jax.random.split(key, 16)

    def dense(kw, kb, cin, cout):
        s = 1.0 / np.sqrt(cin)
        w = jax.random.uniform(kw, (cin, cout), jnp.float32, -s, s)
        b = jax.random.uniform(kb, (cout,), jnp.float32, -s, s)
        return w, b

    p = {}
    p["toplayer_w"], p["toplayer_b"] = dense(ks[0], ks[1], 512, embed_dim)
    p["lat1_w"], p["lat1_b"] = dense(ks[2], ks[3], 256, embed_dim)
    p["lat2_w"], p["lat2_b"] = dense(ks[4], ks[5], 128, embed_dim)
    p["lat3_w"], p["lat3_b"] = dense(ks[6], ks[7], 64, embed_dim)
    p["smooth1_w"], p["smooth1_b"] = dense(ks[8], ks[9], 64, embed_dim)
    p["smooth2_w"], p["smooth2_b"] = dense(ks[10], ks[11], 128, embed_dim)
    p["smooth3_w"], p["smooth3_b"] = dense(ks[12], ks[13], 256, embed_dim)
    p["smooth4_w"], p["smooth4_b"] = dense(ks[14], ks[15], 512, embed_dim)
    return p


if __name__ == "__main__":
    EMBED_DIM = 128   # opt['embed']['embed_dim']; chosen so the torch .view(B,C,-1)
                      # regroupings divide evenly (as the original module assumes).
    B = 2
    key = jax.random.PRNGKey(0)
    pkey, dkey = jax.random.split(key)
    params = init_params(pkey, EMBED_DIM)

    k2, k3, k4, k5 = jax.random.split(dkey, 4)
    c2 = jax.random.normal(k2, (B, 64, 32, 32), jnp.float32)
    c3 = jax.random.normal(k3, (B, 128, 16, 16), jnp.float32)
    c4 = jax.random.normal(k4, (B, 256, 8, 8), jnp.float32)
    c5 = jax.random.normal(k5, (B, 512, 4, 4), jnp.float32)

    fwd = jax.jit(fpn_forward)
    outs = jax.block_until_ready(fwd(params, c2, c3, c4, c5))

    refs = reference_forward(params, c2, c3, c4, c5)
    for o, r in zip(outs, refs):
        assert o.shape == (B, EMBED_DIM)
        np.testing.assert_allclose(np.asarray(o), np.asarray(r), rtol=2e-3, atol=2e-3)

    print("KERNEL_OK")
</pallas_src>

<mosaic_0001>
module attributes {stable_mosaic.version = 11 : i64} {
  func.func @kernel(%arg0: i32, %arg1: memref<1x64x1024xf32, #tpu.memory_space<vmem>>, %arg2: memref<1x128x256xf32, #tpu.memory_space<vmem>>, %arg3: memref<1x256x64xf32, #tpu.memory_space<vmem>>, %arg4: memref<1x512x16xf32, #tpu.memory_space<vmem>>, %arg5: memref<128x512xf32, #tpu.memory_space<vmem>>, %arg6: memref<128x1xf32, #tpu.memory_space<vmem>>, %arg7: memref<128x256xf32, #tpu.memory_space<vmem>>, %arg8: memref<128x1xf32, #tpu.memory_space<vmem>>, %arg9: memref<16x64xf32, #tpu.memory_space<vmem>>, %arg10: memref<4x16xf32, #tpu.memory_space<vmem>>, %arg11: memref<4x128x128xf32, #tpu.memory_space<vmem>>, %arg12: memref<1x128xf32, #tpu.memory_space<vmem>>, %arg13: memref<4x64xf32, #tpu.memory_space<vmem>>, %arg14: memref<4x128x128xf32, #tpu.memory_space<vmem>>, %arg15: memref<1x128xf32, #tpu.memory_space<vmem>>, %arg16: memref<1x256xf32, #tpu.memory_space<vmem>>, %arg17: memref<128x128xf32, #tpu.memory_space<vmem>>, %arg18: memref<1x128xf32, #tpu.memory_space<vmem>>, %arg19: memref<128x128xf32, #tpu.memory_space<vmem>>, %arg20: memref<64x128xf32, #tpu.memory_space<vmem>>, %arg21: memref<1x128xf32, #tpu.memory_space<vmem>>, %arg22: memref<1x4x128xf32, #tpu.memory_space<vmem>>) attributes {dimension_semantics = [#tpu.dimension_semantics<parallel>], iteration_bounds = array<i64: 2>, scalar_prefetch = 0 : i64, scratch_operands = 0 : i64, tpu.core_type = #tpu.core_type<tc>, window_params = [{transform_indices = @transform_0, window_bounds = array<i64: 1, 64, 1024>}, {transform_indices = @transform_1, window_bounds = array<i64: 1, 128, 256>}, {transform_indices = @transform_2, window_bounds = array<i64: 1, 256, 64>}, {transform_indices = @transform_3, window_bounds = array<i64: 1, 512, 16>}, {pipeline_mode = #tpu.pipeline_mode<synchronous>, transform_indices = @transform_4, window_bounds = array<i64: 128, 512>}, {pipeline_mode = #tpu.pipeline_mode<synchronous>, transform_indices = @transform_5, window_bounds = array<i64: 128, 1>}, {pipeline_mode = #tpu.pipeline_mode<synchronous>, transform_indices = @transform_6, window_bounds = array<i64: 128, 256>}, {pipeline_mode = #tpu.pipeline_mode<synchronous>, transform_indices = @transform_7, window_bounds = array<i64: 128, 1>}, {pipeline_mode = #tpu.pipeline_mode<synchronous>, transform_indices = @transform_8, window_bounds = array<i64: 16, 64>}, {pipeline_mode = #tpu.pipeline_mode<synchronous>, transform_indices = @transform_9, window_bounds = array<i64: 4, 16>}, {pipeline_mode = #tpu.pipeline_mode<synchronous>, transform_indices = @transform_10, window_bounds = array<i64: 4, 128, 128>}, {pipeline_mode = #tpu.pipeline_mode<synchronous>, transform_indices = @transform_11, window_bounds = array<i64: 1, 128>}, {pipeline_mode = #tpu.pipeline_mode<synchronous>, transform_indices = @transform_12, window_bounds = array<i64: 4, 64>}, {pipeline_mode = #tpu.pipeline_mode<synchronous>, transform_indices = @transform_13, window_bounds = array<i64: 4, 128, 128>}, {pipeline_mode = #tpu.pipeline_mode<synchronous>, transform_indices = @transform_14, window_bounds = array<i64: 1, 128>}, {pipeline_mode = #tpu.pipeline_mode<synchronous>, transform_indices = @transform_15, window_bounds = array<i64: 1, 256>}, {pipeline_mode = #tpu.pipeline_mode<synchronous>, transform_indices = @transform_16, window_bounds = array<i64: 128, 128>}, {pipeline_mode = #tpu.pipeline_mode<synchronous>, transform_indices = @transform_17, window_bounds = array<i64: 1, 128>}, {pipeline_mode = #tpu.pipeline_mode<synchronous>, transform_indices = @transform_18, window_bounds = array<i64: 128, 128>}, {pipeline_mode = #tpu.pipeline_mode<synchronous>, transform_indices = @transform_19, window_bounds = array<i64: 64, 128>}, {pipeline_mode = #tpu.pipeline_mode<synchronous>, transform_indices = @transform_20, window_bounds = array<i64: 1, 128>}, {transform_indices = @transform_21, window_bounds = array<i64: 1, 4, 128>}]} {
    %c0 = arith.constant 0 : index
    %c0_0 = arith.constant 0 : index
    %c0_1 = arith.constant 0 : index
    %0 = vector.load %arg1[%c0, %c0_0, %c0_1] : memref<1x64x1024xf32, #tpu.memory_space<vmem>>, vector<1x64x1024xf32>
    %1 = vector.shape_cast %0 : vector<1x64x1024xf32> to vector<64x1024xf32>
    %c0_2 = arith.constant 0 : index
    %c0_3 = arith.constant 0 : index
    %c0_4 = arith.constant 0 : index
    %2 = vector.load %arg2[%c0_2, %c0_3, %c0_4] : memref<1x128x256xf32, #tpu.memory_space<vmem>>, vector<1x128x256xf32>
    %3 = vector.shape_cast %2 : vector<1x128x256xf32> to vector<128x256xf32>
    %c0_5 = arith.constant 0 : index
    %c0_6 = arith.constant 0 : index
    %c0_7 = arith.constant 0 : index
    %4 = vector.load %arg3[%c0_5, %c0_6, %c0_7] : memref<1x256x64xf32, #tpu.memory_space<vmem>>, vector<1x256x64xf32>
    %5 = vector.shape_cast %4 : vector<1x256x64xf32> to vector<256x64xf32>
    %c0_8 = arith.constant 0 : index
    %c0_9 = arith.constant 0 : index
    %c0_10 = arith.constant 0 : index
    %6 = vector.load %arg4[%c0_8, %c0_9, %c0_10] : memref<1x512x16xf32, #tpu.memory_space<vmem>>, vector<1x512x16xf32>
    %7 = vector.shape_cast %6 : vector<1x512x16xf32> to vector<512x16xf32>
    %c0_11 = arith.constant 0 : index
    %c0_12 = arith.constant 0 : index
    %8 = vector.load %arg5[%c0_11, %c0_12] : memref<128x512xf32, #tpu.memory_space<vmem>>, vector<128x512xf32>
    %cst = arith.constant dense<0.000000e+00> : vector<128x16xf32>
    %9 = tpu.matmul %8, %7, %cst {dimension_numbers = #tpu.dot_dimension_numbers<[1], [0], [0], [1], [0, 0, 1, 1], [], []>} : vector<128x512xf32>, vector<512x16xf32>, vector<128x16xf32> -> vector<128x16xf32>
    %c0_13 = arith.constant 0 : index
    %c0_14 = arith.constant 0 : index
    %10 = vector.load %arg6[%c0_13, %c0_14] : memref<128x1xf32, #tpu.memory_space<vmem>>, vector<128x1xf32>
    %11 = vector.broadcast %10 : vector<128x1xf32> to vector<128x16xf32>
    %12 = arith.addf %9, %11 : vector<128x16xf32>
    %c0_15 = arith.constant 0 : index
    %c0_16 = arith.constant 0 : index
    %13 = vector.load %arg7[%c0_15, %c0_16] : memref<128x256xf32, #tpu.memory_space<vmem>>, vector<128x256xf32>
    %cst_17 = arith.constant dense<0.000000e+00> : vector<128x64xf32>
    %14 = tpu.matmul %13, %5, %cst_17 {dimension_numbers = #tpu.dot_dimension_numbers<[1], [0], [0], [1], [0, 0, 1, 1], [], []>} : vector<128x256xf32>, vector<256x64xf32>, vector<128x64xf32> -> vector<128x64xf32>
    %c0_18 = arith.constant 0 : index
    %c0_19 = arith.constant 0 : index
    %15 = vector.load %arg8[%c0_18, %c0_19] : memref<128x1xf32, #tpu.memory_space<vmem>>, vector<128x1xf32>
    %16 = vector.broadcast %15 : vector<128x1xf32> to vector<128x64xf32>
    %17 = arith.addf %14, %16 : vector<128x64xf32>
    %c0_20 = arith.constant 0 : index
    %c0_21 = arith.constant 0 : index
    %18 = vector.load %arg9[%c0_20, %c0_21] : memref<16x64xf32, #tpu.memory_space<vmem>>, vector<16x64xf32>
    %cst_22 = arith.constant dense<0.000000e+00> : vector<128x64xf32>
    %19 = tpu.matmul %12, %18, %cst_22 {dimension_numbers = #tpu.dot_dimension_numbers<[1], [0], [0], [1], [0, 0, 1, 1], [], []>} : vector<128x16xf32>, vector<16x64xf32>, vector<128x64xf32> -> vector<128x64xf32>
    %20 = arith.addf %19, %17 : vector<128x64xf32>
    %c0_23 = arith.constant 0 : index
    %c0_24 = arith.constant 0 : index
    %21 = vector.load %arg10[%c0_23, %c0_24] : memref<4x16xf32, #tpu.memory_space<vmem>>, vector<4x16xf32>
    %c0_25 = arith.constant 0 : index
    %c0_26 = arith.constant 0 : index
    %22 = vector.load %arg12[%c0_25, %c0_26] : memref<1x128xf32, #tpu.memory_space<vmem>>, vector<1x128xf32>
    %23 = vector.extract_strided_slice %21 {offsets = [0, 0], sizes = [1, 16], strides = [1, 1]} : vector<4x16xf32> to vector<1x16xf32>
    %c0_27 = arith.constant 0 : index
    %c0_28 = arith.constant 0 : index
    %c0_29 = arith.constant 0 : index
    %24 = vector.load %arg11[%c0_27, %c0_28, %c0_29] : memref<4x128x128xf32, #tpu.memory_space<vmem>>, vector<1x128x128xf32>
    %25 = vector.shape_cast %24 : vector<1x128x128xf32> to vector<128x128xf32>
    %26 = vector.broadcast %23 : vector<1x16xf32> to vector<128x16xf32>
    %27 = arith.mulf %12, %26 : vector<128x16xf32>
    %cst_30 = arith.constant dense<0.000000e+00> : vector<128xf32>
    %28 = vector.multi_reduction <add>, %27, %cst_30 [1] : vector<128x16xf32> to vector<128xf32>
    %29 = vector.shape_cast %28 : vector<128xf32> to vector<128x1xf32>
    %30 = vector.broadcast %29 : vector<128x1xf32> to vector<128x128xf32>
    %31 = arith.mulf %30, %25 : vector<128x128xf32>
    %cst_31 = arith.constant dense<0.000000e+00> : vector<128xf32>
    %32 = vector.multi_reduction <add>, %31, %cst_31 [0] : vector<128x128xf32> to vector<128xf32>
    %33 = vector.shape_cast %32 : vector<128xf32> to vector<1x128xf32>
    %34 = arith.addf %22, %33 : vector<1x128xf32>
    %35 = vector.extract_strided_slice %21 {offsets = [1, 0], sizes = [1, 16], strides = [1, 1]} : vector<4x16xf32> to vector<1x16xf32>
    %c1 = arith.constant 1 : index
    %c0_32 = arith.constant 0 : index
    %c0_33 = arith.constant 0 : index
    %36 = vector.load %arg11[%c1, %c0_32, %c0_33] : memref<4x128x128xf32, #tpu.memory_space<vmem>>, vector<1x128x128xf32>
    %37 = vector.shape_cast %36 : vector<1x128x128xf32> to vector<128x128xf32>
    %38 = vector.broadcast %35 : vector<1x16xf32> to vector<128x16xf32>
    %39 = arith.mulf %12, %38 : vector<128x16xf32>
    %cst_34 = arith.constant dense<0.000000e+00> : vector<128xf32>
    %40 = vector.multi_reduction <add>, %39, %cst_34 [1] : vector<128x16xf32> to vector<128xf32>
    %41 = vector.shape_cast %40 : vector<128xf32> to vector<128x1xf32>
    %42 = vector.broadcast %41 : vector<128x1xf32> to vector<128x128xf32>
    %43 = arith.mulf %42, %37 : vector<128x128xf32>
    %cst_35 = arith.constant dense<0.000000e+00> : vector<128xf32>
    %44 = vector.multi_reduction <add>, %43, %cst_35 [0] : vector<128x128xf32> to vector<128xf32>
    %45 = vector.shape_cast %44 : vector<128xf32> to vector<1x128xf32>
    %46 = arith.addf %34, %45 : vector<1x128xf32>
    %47 = vector.extract_strided_slice %21 {offsets = [2, 0], sizes = [1, 16], strides = [1, 1]} : vector<4x16xf32> to vector<1x16xf32>
    %c2 = arith.constant 2 : index
    %c0_36 = arith.constant 0 : index
    %c0_37 = arith.constant 0 : index
    %48 = vector.load %arg11[%c2, %c0_36, %c0_37] : memref<4x128x128xf32, #tpu.memory_space<vmem>>, vector<1x128x128xf32>
    %49 = vector.shape_cast %48 : vector<1x128x128xf32> to vector<128x128xf32>
    %50 = vector.broadcast %47 : vector<1x16xf32> to vector<128x16xf32>
    %51 = arith.mulf %12, %50 : vector<128x16xf32>
    %cst_38 = arith.constant dense<0.000000e+00> : vector<128xf32>
    %52 = vector.multi_reduction <add>, %51, %cst_38 [1] : vector<128x16xf32> to vector<128xf32>
    %53 = vector.shape_cast %52 : vector<128xf32> to vector<128x1xf32>
    %54 = vector.broadcast %53 : vector<128x1xf32> to vector<128x128xf32>
    %55 = arith.mulf %54, %49 : vector<128x128xf32>
    %cst_39 = arith.constant dense<0.000000e+00> : vector<128xf32>
    %56 = vector.multi_reduction <add>, %55, %cst_39 [0] : vector<128x128xf32> to vector<128xf32>
    %57 = vector.shape_cast %56 : vector<128xf32> to vector<1x128xf32>
    %58 = arith.addf %46, %57 : vector<1x128xf32>
    %59 = vector.extract_strided_slice %21 {offsets = [3, 0], sizes = [1, 16], strides = [1, 1]} : vector<4x16xf32> to vector<1x16xf32>
    %c3 = arith.constant 3 : index
    %c0_40 = arith.constant 0 : index
    %c0_41 = arith.constant 0 : index
    %60 = vector.load %arg11[%c3, %c0_40, %c0_41] : memref<4x128x128xf32, #tpu.memory_space<vmem>>, vector<1x128x128xf32>
    %61 = vector.shape_cast %60 : vector<1x128x128xf32> to vector<128x128xf32>
    %62 = vector.broadcast %59 : vector<1x16xf32> to vector<128x16xf32>
    %63 = arith.mulf %12, %62 : vector<128x16xf32>
    %cst_42 = arith.constant dense<0.000000e+00> : vector<128xf32>
    %64 = vector.multi_reduction <add>, %63, %cst_42 [1] : vector<128x16xf32> to vector<128xf32>
    %65 = vector.shape_cast %64 : vector<128xf32> to vector<128x1xf32>
    %66 = vector.broadcast %65 : vector<128x1xf32> to vector<128x128xf32>
    %67 = arith.mulf %66, %61 : vector<128x128xf32>
    %cst_43 = arith.constant dense<0.000000e+00> : vector<128xf32>
    %68 = vector.multi_reduction <add>, %67, %cst_43 [0] : vector<128x128xf32> to vector<128xf32>
    %69 = vector.shape_cast %68 : vector<128xf32> to vector<1x128xf32>
    %70 = arith.addf %58, %69 : vector<1x128xf32>
    %c0_44 = arith.constant 0 : index
    %c0_45 = arith.constant 0 : index
    %71 = vector.load %arg13[%c0_44, %c0_45] : memref<4x64xf32, #tpu.memory_space<vmem>>, vector<4x64xf32>
    %c0_46 = arith.constant 0 : index
    %c0_47 = arith.constant 0 : index
    %72 = vector.load %arg15[%c0_46, %c0_47] : memref<1x128xf32, #tpu.memory_space<vmem>>, vector<1x128xf32>
    %73 = vector.extract_strided_slice %71 {offsets = [0, 0], sizes = [1, 64], strides = [1, 1]} : vector<4x64xf32> to vector<1x64xf32>
    %c0_48 = arith.constant 0 : index
    %c0_49 = arith.constant 0 : index
    %c0_50 = arith.constant 0 : index
    %74 = vector.load %arg14[%c0_48, %c0_49, %c0_50] : memref<4x128x128xf32, #tpu.memory_space<vmem>>, vector<1x128x128xf32>
    %75 = vector.shape_cast %74 : vector<1x128x128xf32> to vector<128x128xf32>
    %76 = vector.broadcast %73 : vector<1x64xf32> to vector<128x64xf32>
    %77 = arith.mulf %20, %76 : vector<128x64xf32>
    %cst_51 = arith.constant dense<0.000000e+00> : vector<128xf32>
    %78 = vector.multi_reduction <add>, %77, %cst_51 [1] : vector<128x64xf32> to vector<128xf32>
    %79 = vector.shape_cast %78 : vector<128xf32> to vector<128x1xf32>
    %80 = vector.broadcast %79 : vector<128x1xf32> to vector<128x128xf32>
    %81 = arith.mulf %80, %75 : vector<128x128xf32>
    %cst_52 = arith.constant dense<0.000000e+00> : vector<128xf32>
    %82 = vector.multi_reduction <add>, %81, %cst_52 [0] : vector<128x128xf32> to vector<128xf32>
    %83 = vector.shape_cast %82 : vector<128xf32> to vector<1x128xf32>
    %84 = arith.addf %72, %83 : vector<1x128xf32>
    %85 = vector.extract_strided_slice %71 {offsets = [1, 0], sizes = [1, 64], strides = [1, 1]} : vector<4x64xf32> to vector<1x64xf32>
    %c1_53 = arith.constant 1 : index
    %c0_54 = arith.constant 0 : index
    %c0_55 = arith.constant 0 : index
    %86 = vector.load %arg14[%c1_53, %c0_54, %c0_55] : memref<4x128x128xf32, #tpu.memory_space<vmem>>, vector<1x128x128xf32>
    %87 = vector.shape_cast %86 : vector<1x128x128xf32> to vector<128x128xf32>
    %88 = vector.broadcast %85 : vector<1x64xf32> to vector<128x64xf32>
    %89 = arith.mulf %20, %88 : vector<128x64xf32>
    %cst_56 = arith.constant dense<0.000000e+00> : vector<128xf32>
    %90 = vector.multi_reduction <add>, %89, %cst_56 [1] : vector<128x64xf32> to vector<128xf32>
    %91 = vector.shape_cast %90 : vector<128xf32> to vector<128x1xf32>
    %92 = vector.broadcast %91 : vector<128x1xf32> to vector<128x128xf32>
    %93 = arith.mulf %92, %87 : vector<128x128xf32>
    %cst_57 = arith.constant dense<0.000000e+00> : vector<128xf32>
    %94 = vector.multi_reduction <add>, %93, %cst_57 [0] : vector<128x128xf32> to vector<128xf32>
    %95 = vector.shape_cast %94 : vector<128xf32> to vector<1x128xf32>
    %96 = arith.addf %84, %95 : vector<1x128xf32>
    %cst_58 = arith.constant dense<0.000000e+00> : vector<128xf32>
    %97 = vector.multi_reduction <add>, %3, %cst_58 [1] : vector<128x256xf32> to vector<128xf32>
    %98 = vector.shape_cast %97 : vector<128xf32> to vector<128x1xf32>
    %cst_59 = arith.constant 2.560000e+02 : f32
    %99 = vector.broadcast %cst_59 : f32 to vector<128x1xf32>
    %100 = arith.divf %98, %99 : vector<128x1xf32>
    %c0_60 = arith.constant 0 : index
    %c0_61 = arith.constant 0 : index
    %101 = vector.load %arg18[%c0_60, %c0_61] : memref<1x128xf32, #tpu.memory_space<vmem>>, vector<1x128xf32>
    %102 = vector.extract_strided_slice %71 {offsets = [2, 0], sizes = [1, 64], strides = [1, 1]} : vector<4x64xf32> to vector<1x64xf32>
    %c2_62 = arith.constant 2 : index
    %c0_63 = arith.constant 0 : index
    %c0_64 = arith.constant 0 : index
    %103 = vector.load %arg14[%c2_62, %c0_63, %c0_64] : memref<4x128x128xf32, #tpu.memory_space<vmem>>, vector<1x128x128xf32>
    %104 = vector.shape_cast %103 : vector<1x128x128xf32> to vector<128x128xf32>
    %105 = vector.broadcast %102 : vector<1x64xf32> to vector<128x64xf32>
    %106 = arith.mulf %20, %105 : vector<128x64xf32>
    %cst_65 = arith.constant dense<0.000000e+00> : vector<128xf32>
    %107 = vector.multi_reduction <add>, %106, %cst_65 [1] : vector<128x64xf32> to vector<128xf32>
    %108 = vector.shape_cast %107 : vector<128xf32> to vector<128x1xf32>
    %109 = vector.broadcast %108 : vector<128x1xf32> to vector<128x128xf32>
    %110 = arith.mulf %109, %104 : vector<128x128xf32>
    %cst_66 = arith.constant dense<0.000000e+00> : vector<128xf32>
    %111 = vector.multi_reduction <add>, %110, %cst_66 [0] : vector<128x128xf32> to vector<128xf32>
    %112 = vector.shape_cast %111 : vector<128xf32> to vector<1x128xf32>
    %113 = arith.addf %101, %112 : vector<1x128xf32>
    %c0_67 = arith.constant 0 : index
    %c0_68 = arith.constant 0 : index
    %114 = vector.load %arg17[%c0_67, %c0_68] : memref<128x128xf32, #tpu.memory_space<vmem>>, vector<128x128xf32>
    %115 = vector.broadcast %100 : vector<128x1xf32> to vector<128x128xf32>
    %116 = arith.mulf %115, %114 : vector<128x128xf32>
    %cst_69 = arith.constant dense<0.000000e+00> : vector<128xf32>
    %117 = vector.multi_reduction <add>, %116, %cst_69 [0] : vector<128x128xf32> to vector<128xf32>
    %118 = vector.shape_cast %117 : vector<128xf32> to vector<1x128xf32>
    %119 = arith.addf %113, %118 : vector<1x128xf32>
    %cst_70 = arith.constant dense<0.000000e+00> : vector<64xf32>
    %120 = vector.multi_reduction <add>, %1, %cst_70 [1] : vector<64x1024xf32> to vector<64xf32>
    %121 = vector.shape_cast %120 : vector<64xf32> to vector<64x1xf32>
    %cst_71 = arith.constant 1.024000e+03 : f32
    %122 = vector.broadcast %cst_71 : f32 to vector<64x1xf32>
    %123 = arith.divf %121, %122 : vector<64x1xf32>
    %c0_72 = arith.constant 0 : index
    %c0_73 = arith.constant 0 : index
    %124 = vector.load %arg16[%c0_72, %c0_73] : memref<1x256xf32, #tpu.memory_space<vmem>>, vector<1x256xf32>
    %125 = vector.broadcast %124 : vector<1x256xf32> to vector<128x256xf32>
    %126 = arith.mulf %3, %125 : vector<128x256xf32>
    %cst_74 = arith.constant dense<0.000000e+00> : vector<128xf32>
    %127 = vector.multi_reduction <add>, %126, %cst_74 [1] : vector<128x256xf32> to vector<128xf32>
    %128 = vector.shape_cast %127 : vector<128xf32> to vector<128x1xf32>
    %c0_75 = arith.constant 0 : index
    %c0_76 = arith.constant 0 : index
    %129 = vector.load %arg21[%c0_75, %c0_76] : memref<1x128xf32, #tpu.memory_space<vmem>>, vector<1x128xf32>
    %130 = vector.extract_strided_slice %71 {offsets = [3, 0], sizes = [1, 64], strides = [1, 1]} : vector<4x64xf32> to vector<1x64xf32>
    %c3_77 = arith.constant 3 : index
    %c0_78 = arith.constant 0 : index
    %c0_79 = arith.constant 0 : index
    %131 = vector.load %arg14[%c3_77, %c0_78, %c0_79] : memref<4x128x128xf32, #tpu.memory_space<vmem>>, vector<1x128x128xf32>
    %132 = vector.shape_cast %131 : vector<1x128x128xf32> to vector<128x128xf32>
    %133 = vector.broadcast %130 : vector<1x64xf32> to vector<128x64xf32>
    %134 = arith.mulf %20, %133 : vector<128x64xf32>
    %cst_80 = arith.constant dense<0.000000e+00> : vector<128xf32>
    %135 = vector.multi_reduction <add>, %134, %cst_80 [1] : vector<128x64xf32> to vector<128xf32>
    %136 = vector.shape_cast %135 : vector<128xf32> to vector<128x1xf32>
    %137 = vector.broadcast %136 : vector<128x1xf32> to vector<128x128xf32>
    %138 = arith.mulf %137, %132 : vector<128x128xf32>
    %cst_81 = arith.constant dense<0.000000e+00> : vector<128xf32>
    %139 = vector.multi_reduction <add>, %138, %cst_81 [0] : vector<128x128xf32> to vector<128xf32>
    %140 = vector.shape_cast %139 : vector<128xf32> to vector<1x128xf32>
    %141 = arith.addf %129, %140 : vector<1x128xf32>
    %c0_82 = arith.constant 0 : index
    %c0_83 = arith.constant 0 : index
    %142 = vector.load %arg19[%c0_82, %c0_83] : memref<128x128xf32, #tpu.memory_space<vmem>>, vector<128x128xf32>
    %143 = vector.broadcast %128 : vector<128x1xf32> to vector<128x128xf32>
    %144 = arith.mulf %143, %142 : vector<128x128xf32>
    %cst_84 = arith.constant dense<0.000000e+00> : vector<128xf32>
    %145 = vector.multi_reduction <add>, %144, %cst_84 [0] : vector<128x128xf32> to vector<128xf32>
    %146 = vector.shape_cast %145 : vector<128xf32> to vector<1x128xf32>
    %147 = arith.addf %141, %146 : vector<1x128xf32>
    %c0_85 = arith.constant 0 : index
    %c0_86 = arith.constant 0 : index
    %148 = vector.load %arg20[%c0_85, %c0_86] : memref<64x128xf32, #tpu.memory_space<vmem>>, vector<64x128xf32>
    %149 = vector.broadcast %123 : vector<64x1xf32> to vector<64x128xf32>
    %150 = arith.mulf %149, %148 : vector<64x128xf32>
    %cst_87 = arith.constant dense<0.000000e+00> : vector<128xf32>
    %151 = vector.multi_reduction <add>, %150, %cst_87 [0] : vector<64x128xf32> to vector<128xf32>
    %152 = vector.shape_cast %151 : vector<128xf32> to vector<1x128xf32>
    %153 = arith.addf %147, %152 : vector<1x128xf32>
    %c0_88 = arith.constant 0 : index
    %c0_89 = arith.constant 0 : index
    %c0_90 = arith.constant 0 : index
    %154 = vector.load %arg22[%c0_88, %c0_89, %c0_90] : memref<1x4x128xf32, #tpu.memory_space<vmem>>, vector<1x1x128xf32>
    %155 = vector.shape_cast %154 : vector<1x1x128xf32> to vector<1x128xf32>
    %156 = vector.shape_cast %153 : vector<1x128xf32> to vector<1x1x128xf32>
    tpu.vector_store %arg22[%c0_88, %c0_89, %c0_90], %156 {strides = array<i32>} : memref<1x4x128xf32, #tpu.memory_space<vmem>>, vector<1x1x128xf32>,
    %c0_91 = arith.constant 0 : index
    %c1_92 = arith.constant 1 : index
    %c0_93 = arith.constant 0 : index
    %157 = vector.load %arg22[%c0_91, %c1_92, %c0_93] : memref<1x4x128xf32, #tpu.memory_space<vmem>>, vector<1x1x128xf32>
    %158 = vector.shape_cast %157 : vector<1x1x128xf32> to vector<1x128xf32>
    %159 = vector.shape_cast %119 : vector<1x128xf32> to vector<1x1x128xf32>
    tpu.vector_store %arg22[%c0_91, %c1_92, %c0_93], %159 {strides = array<i32>} : memref<1x4x128xf32, #tpu.memory_space<vmem>>, vector<1x1x128xf32>,
    %c0_94 = arith.constant 0 : index
    %c2_95 = arith.constant 2 : index
    %c0_96 = arith.constant 0 : index
    %160 = vector.load %arg22[%c0_94, %c2_95, %c0_96] : memref<1x4x128xf32, #tpu.memory_space<vmem>>, vector<1x1x128xf32>
    %161 = vector.shape_cast %160 : vector<1x1x128xf32> to vector<1x128xf32>
    %162 = vector.shape_cast %96 : vector<1x128xf32> to vector<1x1x128xf32>
    tpu.vector_store %arg22[%c0_94, %c2_95, %c0_96], %162 {strides = array<i32>} : memref<1x4x128xf32, #tpu.memory_space<vmem>>, vector<1x1x128xf32>,
    %c0_97 = arith.constant 0 : index
    %c3_98 = arith.constant 3 : index
    %c0_99 = arith.constant 0 : index
    %163 = vector.load %arg22[%c0_97, %c3_98, %c0_99] : memref<1x4x128xf32, #tpu.memory_space<vmem>>, vector<1x1x128xf32>
    %164 = vector.shape_cast %163 : vector<1x1x128xf32> to vector<1x128xf32>
    %165 = vector.shape_cast %70 : vector<1x128xf32> to vector<1x1x128xf32>
    tpu.vector_store %arg22[%c0_97, %c3_98, %c0_99], %165 {strides = array<i32>} : memref<1x4x128xf32, #tpu.memory_space<vmem>>, vector<1x1x128xf32>,
    return
  }
  func.func @transform_0(%arg0: i32) -> (i32, i32, i32) {
    %c0_i32 = arith.constant 0 : i32
    %c0_i32_0 = arith.constant 0 : i32
    %c0_i32_1 = arith.constant 0 : i32
    return %arg0, %c0_i32, %c0_i32_0 : i32, i32, i32
  }
  func.func @transform_1(%arg0: i32) -> (i32, i32, i32) {
    %c0_i32 = arith.constant 0 : i32
    %c0_i32_0 = arith.constant 0 : i32
    %c0_i32_1 = arith.constant 0 : i32
    return %arg0, %c0_i32, %c0_i32_0 : i32, i32, i32
  }
  func.func @transform_2(%arg0: i32) -> (i32, i32, i32) {
    %c0_i32 = arith.constant 0 : i32
    %c0_i32_0 = arith.constant 0 : i32
    %c0_i32_1 = arith.constant 0 : i32
    return %arg0, %c0_i32, %c0_i32_0 : i32, i32, i32
  }
  func.func @transform_3(%arg0: i32) -> (i32, i32, i32) {
    %c0_i32 = arith.constant 0 : i32
    %c0_i32_0 = arith.constant 0 : i32
    %c0_i32_1 = arith.constant 0 : i32
    return %arg0, %c0_i32, %c0_i32_0 : i32, i32, i32
  }
  func.func @transform_4(%arg0: i32) -> (i32, i32) {
    %c0_i32 = arith.constant 0 : i32
    %c0_i32_0 = arith.constant 0 : i32
    %c0_i32_1 = arith.constant 0 : i32
    return %c0_i32, %c0_i32_0 : i32, i32
  }
  func.func @transform_5(%arg0: i32) -> (i32, i32) {
    %c0_i32 = arith.constant 0 : i32
    %c0_i32_0 = arith.constant 0 : i32
    %c0_i32_1 = arith.constant 0 : i32
    return %c0_i32, %c0_i32_0 : i32, i32
  }
  func.func @transform_6(%arg0: i32) -> (i32, i32) {
    %c0_i32 = arith.constant 0 : i32
    %c0_i32_0 = arith.constant 0 : i32
    %c0_i32_1 = arith.constant 0 : i32
    return %c0_i32, %c0_i32_0 : i32, i32
  }
  func.func @transform_7(%arg0: i32) -> (i32, i32) {
    %c0_i32 = arith.constant 0 : i32
    %c0_i32_0 = arith.constant 0 : i32
    %c0_i32_1 = arith.constant 0 : i32
    return %c0_i32, %c0_i32_0 : i32, i32
  }
  func.func @transform_8(%arg0: i32) -> (i32, i32) {
    %c0_i32 = arith.constant 0 : i32
    %c0_i32_0 = arith.constant 0 : i32
    %c0_i32_1 = arith.constant 0 : i32
    return %c0_i32, %c0_i32_0 : i32, i32
  }
  func.func @transform_9(%arg0: i32) -> (i32, i32) {
    %c0_i32 = arith.constant 0 : i32
    %c0_i32_0 = arith.constant 0 : i32
    %c0_i32_1 = arith.constant 0 : i32
    return %c0_i32, %c0_i32_0 : i32, i32
  }
  func.func @transform_10(%arg0: i32) -> (i32, i32, i32) {
    %c0_i32 = arith.constant 0 : i32
    %c0_i32_0 = arith.constant 0 : i32
    %c0_i32_1 = arith.constant 0 : i32
    %c0_i32_2 = arith.constant 0 : i32
    return %c0_i32, %c0_i32_0, %c0_i32_1 : i32, i32, i32
  }
  func.func @transform_11(%arg0: i32) -> (i32, i32) {
    %c0_i32 = arith.constant 0 : i32
    %c0_i32_0 = arith.constant 0 : i32
    %c0_i32_1 = arith.constant 0 : i32
    return %c0_i32, %c0_i32_0 : i32, i32
  }
  func.func @transform_12(%arg0: i32) -> (i32, i32) {
    %c0_i32 = arith.constant 0 : i32
    %c0_i32_0 = arith.constant 0 : i32
    %c0_i32_1 = arith.constant 0 : i32
    return %c0_i32, %c0_i32_0 : i32, i32
  }
  func.func @transform_13(%arg0: i32) -> (i32, i32, i32) {
    %c0_i32 = arith.constant 0 : i32
    %c0_i32_0 = arith.constant 0 : i32
    %c0_i32_1 = arith.constant 0 : i32
    %c0_i32_2 = arith.constant 0 : i32
    return %c0_i32, %c0_i32_0, %c0_i32_1 : i32, i32, i32
  }
  func.func @transform_14(%arg0: i32) -> (i32, i32) {
    %c0_i32 = arith.constant 0 : i32
    %c0_i32_0 = arith.constant 0 : i32
    %c0_i32_1 = arith.constant 0 : i32
    return %c0_i32, %c0_i32_0 : i32, i32
  }
  func.func @transform_15(%arg0: i32) -> (i32, i32) {
    %c0_i32 = arith.constant 0 : i32
    %c0_i32_0 = arith.constant 0 : i32
    %c0_i32_1 = arith.constant 0 : i32
    return %c0_i32, %c0_i32_0 : i32, i32
  }
  func.func @transform_16(%arg0: i32) -> (i32, i32) {
    %c0_i32 = arith.constant 0 : i32
    %c0_i32_0 = arith.constant 0 : i32
    %c0_i32_1 = arith.constant 0 : i32
    return %c0_i32, %c0_i32_0 : i32, i32
  }
  func.func @transform_17(%arg0: i32) -> (i32, i32) {
    %c0_i32 = arith.constant 0 : i32
    %c0_i32_0 = arith.constant 0 : i32
    %c0_i32_1 = arith.constant 0 : i32
    return %c0_i32, %c0_i32_0 : i32, i32
  }
  func.func @transform_18(%arg0: i32) -> (i32, i32) {
    %c0_i32 = arith.constant 0 : i32
    %c0_i32_0 = arith.constant 0 : i32
    %c0_i32_1 = arith.constant 0 : i32
    return %c0_i32, %c0_i32_0 : i32, i32
  }
  func.func @transform_19(%arg0: i32) -> (i32, i32) {
    %c0_i32 = arith.constant 0 : i32
    %c0_i32_0 = arith.constant 0 : i32
    %c0_i32_1 = arith.constant 0 : i32
    return %c0_i32, %c0_i32_0 : i32, i32
  }
  func.func @transform_20(%arg0: i32) -> (i32, i32) {
    %c0_i32 = arith.constant 0 : i32
    %c0_i32_0 = arith.constant 0 : i32
    %c0_i32_1 = arith.constant 0 : i32
    return %c0_i32, %c0_i32_0 : i32, i32
  }
  func.func @transform_21(%arg0: i32) -> (i32, i32, i32) {
    %c0_i32 = arith.constant 0 : i32
    %c0_i32_0 = arith.constant 0 : i32
    %c0_i32_1 = arith.constant 0 : i32
    return %arg0, %c0_i32, %c0_i32_0 : i32, i32, i32
  }
}

</mosaic_0001>

<llo_original>
// kernel: fpn_forward.1
$region0: #{fpn_forward.1}
  #allocation0 [shape = 'u32[]', space=smem, size = 0x4, offset = 0x4, fixed_abs, tag = 'smem constant byte address 0x4 - core index']
  #allocation1 [shape = 'u32[144,128]{1,0:T(1,128)}', space=vmem, size = 0x12000, scoped, tag = 'internal scratch']
  %s0 = inlined_call_operand.vmem [shape: f32[2,64,1024], index: 0, kind: input, shape index: {}]
  %s1 = inlined_call_operand.vmem [shape: f32[2,128,256], index: 1, kind: input, shape index: {}]
  %s2 = inlined_call_operand.vmem [shape: f32[2,256,64], index: 2, kind: input, shape index: {}]
  %s3 = inlined_call_operand.vmem [shape: f32[2,512,16], index: 3, kind: input, shape index: {}]
  %s4 = inlined_call_operand.vmem [shape: f32[128,512], index: 4, kind: input, shape index: {}]
  %s5 = inlined_call_operand.vmem [shape: f32[128,1], index: 5, kind: input, shape index: {}]
  %s6 = inlined_call_operand.vmem [shape: f32[128,256], index: 6, kind: input, shape index: {}]
  %s7 = inlined_call_operand.vmem [shape: f32[128,1], index: 7, kind: input, shape index: {}]
  %s8 = inlined_call_operand.vmem [shape: f32[16,64], index: 8, kind: input, shape index: {}]
  %s9 = inlined_call_operand.vmem [shape: f32[4,16], index: 9, kind: input, shape index: {}]
  %s10 = inlined_call_operand.vmem [shape: f32[4,128,128], index: 10, kind: input, shape index: {}]
  %s11 = inlined_call_operand.vmem [shape: f32[1,128], index: 11, kind: input, shape index: {}]
  %s12 = inlined_call_operand.vmem [shape: f32[4,64], index: 12, kind: input, shape index: {}]
  %s13 = inlined_call_operand.vmem [shape: f32[4,128,128], index: 13, kind: input, shape index: {}]
  %s14 = inlined_call_operand.vmem [shape: f32[1,128], index: 14, kind: input, shape index: {}]
  %s15 = inlined_call_operand.vmem [shape: f32[1,256], index: 15, kind: input, shape index: {}]
  %s16 = inlined_call_operand.vmem [shape: f32[128,128], index: 16, kind: input, shape index: {}]
  %s17 = inlined_call_operand.vmem [shape: f32[1,128], index: 17, kind: input, shape index: {}]
  %s18 = inlined_call_operand.vmem [shape: f32[128,128], index: 18, kind: input, shape index: {}]
  %s19 = inlined_call_operand.vmem [shape: f32[64,128], index: 19, kind: input, shape index: {}]
  %s20 = inlined_call_operand.vmem [shape: f32[1,128], index: 20, kind: input, shape index: {}]
  %s21 = inlined_call_operand.vmem [shape: f32[2,4,128], index: 21, kind: output, shape index: {}]
  %s22 = sld [smem:[#allocation0]]
  $region117: #{fpn_forward.1} parent=0
    _
  %s24 = ssub.s32 1, %s22
  %s25 = scalar_select 0, %s24, %s22
  loop: start=0, step=1, limit=4
  $region2: #{fpn_forward.1} parent=0 // loop_pre_header
    _
  $region3: #{fpn_forward.1} parent=0 // loop_header
    %s27 = sphi 0, %s31
    %p28 = scmp.ge.s32.totalorder %s27, 4
    %s37 = sphi 0, %s39
    %s40 = sphi 0, %s37
    %s41 = sphi 0, %s40
    %s57 = sphi 0, %s41
    %s63 = sphi 0, %s65
    %s66 = sphi 0, %s63
    %s67 = sphi 0, %s66
    %s83 = sphi 0, %s67
    %s89 = sphi 0, %s91
    %s92 = sphi 0, %s89
    %s93 = sphi 0, %s92
    %s109 = sphi 0, %s93
    %s115 = sphi 0, %s117
    %s118 = sphi 0, %s115
    %s119 = sphi 0, %s118
    %s135 = sphi 0, %s119
    %s139 = sphi 0, %s139
    %s141 = sphi 0, %s139
    %s142 = sphi 0, %s141
    %s156 = sphi 0, %s142
    %s160 = sphi 0, %s160
    %s162 = sphi 0, %s160
    %s163 = sphi 0, %s162
    %s177 = sphi 0, %s163
    %s181 = sphi 0, %s181
    %s183 = sphi 0, %s181
    %s184 = sphi 0, %s183
    %s198 = sphi 0, %s184
    %s202 = sphi 0, %s202
    %s204 = sphi 0, %s202
    %s205 = sphi 0, %s204
    %s219 = sphi 0, %s205
    %s223 = sphi 0, %s223
    %s225 = sphi 0, %s223
    %s226 = sphi 0, %s225
    %s240 = sphi 0, %s226
    %s244 = sphi 0, %s244
    %s246 = sphi 0, %s244
    %s247 = sphi 0, %s246
    %s261 = sphi 0, %s247
    %s265 = sphi 0, %s265
    %s267 = sphi 0, %s265
    %s268 = sphi 0, %s267
    %s282 = sphi 0, %s268
    %s286 = sphi 0, %s286
    %s288 = sphi 0, %s286
    %s289 = sphi 0, %s288
    %s303 = sphi 0, %s289
    %s307 = sphi 0, %s307
    %s309 = sphi 0, %s307
    %s310 = sphi 0, %s309
    %s324 = sphi 0, %s310
    %s328 = sphi 0, %s328
    %s330 = sphi 0, %s328
    %s331 = sphi 0, %s330
    %s345 = sphi 0, %s331
    %s349 = sphi 0, %s349
    %s351 = sphi 0, %s349
    %s352 = sphi 0, %s351
    %s366 = sphi 0, %s352
    %s370 = sphi 0, %s370
    %s372 = sphi 0, %s370
    %s373 = sphi 0, %s372
    %s387 = sphi 0, %s373
    %s391 = sphi 0, %s391
    %s393 = sphi 0, %s391
    %s394 = sphi 0, %s393
    %s408 = sphi 0, %s394
    %s412 = sphi 0, %s412
    %s414 = sphi 0, %s412
    %s415 = sphi 0, %s414
    %s429 = sphi 0, %s415
    %s433 = sphi 0, %s433
    %s435 = sphi 0, %s433
    %s436 = sphi 0, %s435
    %s450 = sphi 0, %s436
    %s454 = sphi 0, %s454
    %s456 = sphi 0, %s454
    %s457 = sphi 0, %s456
    %s471 = sphi 0, %s457
    %s475 = sphi 0, %s475
    %s477 = sphi 0, %s475
    %s478 = sphi 0, %s477
    %s492 = sphi 0, %s478
    %s498 = sphi 0, %s500
    %s501 = sphi 0, %s498
    %s502 = sphi 0, %s501
    %s518 = sphi 0, %s502
  $region4: #{fpn_forward.1} parent=0 // loop_header_branch
    %30 = sbr.rel (%p28) target = $region8
  $region5: #{fpn_forward.1} parent=0 // loop_body
    %s32 = ssub.s32 %s27, 1
    %s33 = ssub.s32 %s27, 2
    %s34 = sadd.s32 %s27, 1
    %s35 = ssub.s32 %s27, %s34
    %p36 = scmp.eq.s32.totalorder %s35, 0
    %s38 = sadd.s32 %s37, 1
    %s39 = scalar_select %p36, %s37, %s38
    %p42 = pneg %p36
    %p43 = scmp.eq.s32.totalorder %s27, 1
    %p44 = por %p42, %p43
    %p45 = scmp.ne.s32.totalorder %s37, %s40
    %p46 = scmp.eq.s32.totalorder %s27, 0
    %p47 = por %p45, %p46
    %p48 = scmp.ne.s32.totalorder %s37, %s40
    %p49 = scmp.eq.s32.totalorder %s32, 1
    %p50 = por %p48, %p49
    %p51 = scmp.ne.s32.totalorder %s40, %s41
    %p52 = scmp.eq.s32.totalorder %s32, 0
    %p53 = por %p51, %p52
    %p54 = scmp.ne.s32.totalorder %s40, %s41
    %p55 = scmp.eq.s32.totalorder %s33, 1
    %p56 = por %p54, %p55
    %p58 = scmp.ne.s32.totalorder %s41, %s57
    %p59 = scmp.eq.s32.totalorder %s33, 0
    %p60 = por %p58, %p59
    %s61 = ssub.s32 %s27, %s34
    %p62 = scmp.eq.s32.totalorder %s61, 0
    %s64 = sadd.s32 %s63, 1
    %s65 = scalar_select %p62, %s63, %s64
    %p68 = pneg %p62
    %p69 = scmp.eq.s32.totalorder %s27, 1
    %p70 = por %p68, %p69
    %p71 = scmp.ne.s32.totalorder %s63, %s66
    %p72 = scmp.eq.s32.totalorder %s27, 0
    %p73 = por %p71, %p72
    %p74 = scmp.ne.s32.totalorder %s63, %s66
    %p75 = scmp.eq.s32.totalorder %s32, 1
    %p76 = por %p74, %p75
    %p77 = scmp.ne.s32.totalorder %s66, %s67
    %p78 = scmp.eq.s32.totalorder %s32, 0
    %p79 = por %p77, %p78
    %p80 = scmp.ne.s32.totalorder %s66, %s67
    %p81 = scmp.eq.s32.totalorder %s33, 1
    %p82 = por %p80, %p81
    %p84 = scmp.ne.s32.totalorder %s67, %s83
    %p85 = scmp.eq.s32.totalorder %s33, 0
    %p86 = por %p84, %p85
    %s87 = ssub.s32 %s27, %s34
    %p88 = scmp.eq.s32.totalorder %s87, 0
    %s90 = sadd.s32 %s89, 1
    %s91 = scalar_select %p88, %s89, %s90
    %p94 = pneg %p88
    %p95 = scmp.eq.s32.totalorder %s27, 1
    %p96 = por %p94, %p95
    %p97 = scmp.ne.s32.totalorder %s89, %s92
    %p98 = scmp.eq.s32.totalorder %s27, 0
    %p99 = por %p97, %p98
    %p100 = scmp.ne.s32.totalorder %s89, %s92
    %p101 = scmp.eq.s32.totalorder %s32, 1
    %p102 = por %p100, %p101
    %p103 = scmp.ne.s32.totalorder %s92, %s93
    %p104 = scmp.eq.s32.totalorder %s32, 0
    %p105 = por %p103, %p104
    %p106 = scmp.ne.s32.totalorder %s92, %s93
    %p107 = scmp.eq.s32.totalorder %s33, 1
    %p108 = por %p106, %p107
    %p110 = scmp.ne.s32.totalorder %s93, %s109
    %p111 = scmp.eq.s32.totalorder %s33, 0
    %p112 = por %p110, %p111
    %s113 = ssub.s32 %s27, %s34
    %p114 = scmp.eq.s32.totalorder %s113, 0
    %s116 = sadd.s32 %s115, 1
    %s117 = scalar_select %p114, %s115, %s116
    %p120 = pneg %p114
    %p121 = scmp.eq.s32.totalorder %s27, 1
    %p122 = por %p120, %p121
    %p123 = scmp.ne.s32.totalorder %s115, %s118
    %p124 = scmp.eq.s32.totalorder %s27, 0
    %p125 = por %p123, %p124
    %p126 = scmp.ne.s32.totalorder %s115, %s118
    %p127 = scmp.eq.s32.totalorder %s32, 1
    %p128 = por %p126, %p127
    %p129 = scmp.ne.s32.totalorder %s118, %s119
    %p130 = scmp.eq.s32.totalorder %s32, 0
    %p131 = por %p129, %p130
    %p132 = scmp.ne.s32.totalorder %s118, %s119
    %p133 = scmp.eq.s32.totalorder %s33, 1
    %p134 = por %p132, %p133
    %p136 = scmp.ne.s32.totalorder %s119, %s135
    %p137 = scmp.eq.s32.totalorder %s33, 0
    %p138 = por %p136, %p137
    %s140 = sadd.s32 %s139, 1
    %p143 = scmp.eq.s32.totalorder %s27, 1
    %p144 = scmp.ne.s32.totalorder %s139, %s141
    %p145 = scmp.eq.s32.totalorder %s27, 0
    %p146 = por %p144, %p145
    %p147 = scmp.ne.s32.totalorder %s139, %s141
    %p148 = scmp.eq.s32.totalorder %s32, 1
    %p149 = por %p147, %p148
    %p150 = scmp.ne.s32.totalorder %s141, %s142
    %p151 = scmp.eq.s32.totalorder %s32, 0
    %p152 = por %p150, %p151
    %p153 = scmp.ne.s32.totalorder %s141, %s142
    %p154 = scmp.eq.s32.totalorder %s33, 1
    %p155 = por %p153, %p154
    %p157 = scmp.ne.s32.totalorder %s142, %s156
    %p158 = scmp.eq.s32.totalorder %s33, 0
    %p159 = por %p157, %p158
    %s161 = sadd.s32 %s160, 1
    %p164 = scmp.eq.s32.totalorder %s27, 1
    %p165 = scmp.ne.s32.totalorder %s160, %s162
    %p166 = scmp.eq.s32.totalorder %s27, 0
    %p167 = por %p165, %p166
    %p168 = scmp.ne.s32.totalorder %s160, %s162
    %p169 = scmp.eq.s32.totalorder %s32, 1
    %p170 = por %p168, %p169
    %p171 = scmp.ne.s32.totalorder %s162, %s163
    %p172 = scmp.eq.s32.totalorder %s32, 0
    %p173 = por %p171, %p172
    %p174 = scmp.ne.s32.totalorder %s162, %s163
    %p175 = scmp.eq.s32.totalorder %s33, 1
    %p176 = por %p174, %p175
    %p178 = scmp.ne.s32.totalorder %s163, %s177
    %p179 = scmp.eq.s32.totalorder %s33, 0
    %p180 = por %p178, %p179
    %s182 = sadd.s32 %s181, 1
    %p185 = scmp.eq.s32.totalorder %s27, 1
    %p186 = scmp.ne.s32.totalorder %s181, %s183
    %p187 = scmp.eq.s32.totalorder %s27, 0
    %p188 = por %p186, %p187
    %p189 = scmp.ne.s32.totalorder %s181, %s183
    %p190 = scmp.eq.s32.totalorder %s32, 1
    %p191 = por %p189, %p190
    %p192 = scmp.ne.s32.totalorder %s183, %s184
    %p193 = scmp.eq.s32.totalorder %s32, 0
    %p194 = por %p192, %p193
    %p195 = scmp.ne.s32.totalorder %s183, %s184
    %p196 = scmp.eq.s32.totalorder %s33, 1
    %p197 = por %p195, %p196
    %p199 = scmp.ne.s32.totalorder %s184, %s198
    %p200 = scmp.eq.s32.totalorder %s33, 0
    %p201 = por %p199, %p200
    %s203 = sadd.s32 %s202, 1
    %p206 = scmp.eq.s32.totalorder %s27, 1
    %p207 = scmp.ne.s32.totalorder %s202, %s204
    %p208 = scmp.eq.s32.totalorder %s27, 0
    %p209 = por %p207, %p208
    %p210 = scmp.ne.s32.totalorder %s202, %s204
    %p211 = scmp.eq.s32.totalorder %s32, 1
    %p212 = por %p210, %p211
    %p213 = scmp.ne.s32.totalorder %s204, %s205
    %p214 = scmp.eq.s32.totalorder %s32, 0
    %p215 = por %p213, %p214
    %p216 = scmp.ne.s32.totalorder %s204, %s205
    %p217 = scmp.eq.s32.totalorder %s33, 1
    %p218 = por %p216, %p217
    %p220 = scmp.ne.s32.totalorder %s205, %s219
    %p221 = scmp.eq.s32.totalorder %s33, 0
    %p222 = por %p220, %p221
    %s224 = sadd.s32 %s223, 1
    %p227 = scmp.eq.s32.totalorder %s27, 1
    %p228 = scmp.ne.s32.totalorder %s223, %s225
    %p229 = scmp.eq.s32.totalorder %s27, 0
    %p230 = por %p228, %p229
    %p231 = scmp.ne.s32.totalorder %s223, %s225
    %p232 = scmp.eq.s32.totalorder %s32, 1
    %p233 = por %p231, %p232
    %p234 = scmp.ne.s32.totalorder %s225, %s226
    %p235 = scmp.eq.s32.totalorder %s32, 0
    %p236 = por %p234, %p235
    %p237 = scmp.ne.s32.totalorder %s225, %s226
    %p238 = scmp.eq.s32.totalorder %s33, 1
    %p239 = por %p237, %p238
    %p241 = scmp.ne.s32.totalorder %s226, %s240
    %p242 = scmp.eq.s32.totalorder %s33, 0
    %p243 = por %p241, %p242
    %s245 = sadd.s32 %s244, 1
    %p248 = scmp.eq.s32.totalorder %s27, 1
    %p249 = scmp.ne.s32.totalorder %s244, %s246
    %p250 = scmp.eq.s32.totalorder %s27, 0
    %p251 = por %p249, %p250
    %p252 = scmp.ne.s32.totalorder %s244, %s246
    %p253 = scmp.eq.s32.totalorder %s32, 1
    %p254 = por %p252, %p253
    %p255 = scmp.ne.s32.totalorder %s246, %s247
    %p256 = scmp.eq.s32.totalorder %s32, 0
    %p257 = por %p255, %p256
    %p258 = scmp.ne.s32.totalorder %s246, %s247
    %p259 = scmp.eq.s32.totalorder %s33, 1
    %p260 = por %p258, %p259
    %p262 = scmp.ne.s32.totalorder %s247, %s261
    %p263 = scmp.eq.s32.totalorder %s33, 0
    %p264 = por %p262, %p263
    %s266 = sadd.s32 %s265, 1
    %p269 = scmp.eq.s32.totalorder %s27, 1
    %p270 = scmp.ne.s32.totalorder %s265, %s267
    %p271 = scmp.eq.s32.totalorder %s27, 0
    %p272 = por %p270, %p271
    %p273 = scmp.ne.s32.totalorder %s265, %s267
    %p274 = scmp.eq.s32.totalorder %s32, 1
    %p275 = por %p273, %p274
    %p276 = scmp.ne.s32.totalorder %s267, %s268
    %p277 = scmp.eq.s32.totalorder %s32, 0
    %p278 = por %p276, %p277
    %p279 = scmp.ne.s32.totalorder %s267, %s268
    %p280 = scmp.eq.s32.totalorder %s33, 1
    %p281 = por %p279, %p280
    %p283 = scmp.ne.s32.totalorder %s268, %s282
    %p284 = scmp.eq.s32.totalorder %s33, 0
    %p285 = por %p283, %p284
    %s287 = sadd.s32 %s286, 1
    %p290 = scmp.eq.s32.totalorder %s27, 1
    %p291 = scmp.ne.s32.totalorder %s286, %s288
    %p292 = scmp.eq.s32.totalorder %s27, 0
    %p293 = por %p291, %p292
    %p294 = scmp.ne.s32.totalorder %s286, %s288
    %p295 = scmp.eq.s32.totalorder %s32, 1
    %p296 = por %p294, %p295
    %p297 = scmp.ne.s32.totalorder %s288, %s289
    %p298 = scmp.eq.s32.totalorder %s32, 0
    %p299 = por %p297, %p298
    %p300 = scmp.ne.s32.totalorder %s288, %s289
    %p301 = scmp.eq.s32.totalorder %s33, 1
    %p302 = por %p300, %p301
    %p304 = scmp.ne.s32.totalorder %s289, %s303
    %p305 = scmp.eq.s32.totalorder %s33, 0
    %p306 = por %p304, %p305
    %s308 = sadd.s32 %s307, 1
    %p311 = scmp.eq.s32.totalorder %s27, 1
    %p312 = scmp.ne.s32.totalorder %s307, %s309
    %p313 = scmp.eq.s32.totalorder %s27, 0
    %p314 = por %p312, %p313
    %p315 = scmp.ne.s32.totalorder %s307, %s309
    %p316 = scmp.eq.s32.totalorder %s32, 1
    %p317 = por %p315, %p316
    %p318 = scmp.ne.s32.totalorder %s309, %s310
    %p319 = scmp.eq.s32.totalorder %s32, 0
    %p320 = por %p318, %p319
    %p321 = scmp.ne.s32.totalorder %s309, %s310
    %p322 = scmp.eq.s32.totalorder %s33, 1
    %p323 = por %p321, %p322
    %p325 = scmp.ne.s32.totalorder %s310, %s324
    %p326 = scmp.eq.s32.totalorder %s33, 0
    %p327 = por %p325, %p326
    %s329 = sadd.s32 %s328, 1
    %p332 = scmp.eq.s32.totalorder %s27, 1
    %p333 = scmp.ne.s32.totalorder %s328, %s330
    %p334 = scmp.eq.s32.totalorder %s27, 0
    %p335 = por %p333, %p334
    %p336 = scmp.ne.s32.totalorder %s328, %s330
    %p337 = scmp.eq.s32.totalorder %s32, 1
    %p338 = por %p336, %p337
    %p339 = scmp.ne.s32.totalorder %s330, %s331
    %p340 = scmp.eq.s32.totalorder %s32, 0
    %p341 = por %p339, %p340
    %p342 = scmp.ne.s32.totalorder %s330, %s331
    %p343 = scmp.eq.s32.totalorder %s33, 1
    %p344 = por %p342, %p343
    %p346 = scmp.ne.s32.totalorder %s331, %s345
    %p347 = scmp.eq.s32.totalorder %s33, 0
    %p348 = por %p346, %p347
    %s350 = sadd.s32 %s349, 1
    %p353 = scmp.eq.s32.totalorder %s27, 1
    %p354 = scmp.ne.s32.totalorder %s349, %s351
    %p355 = scmp.eq.s32.totalorder %s27, 0
    %p356 = por %p354, %p355
    %p357 = scmp.ne.s32.totalorder %s349, %s351
    %p358 = scmp.eq.s32.totalorder %s32, 1
    %p359 = por %p357, %p358
    %p360 = scmp.ne.s32.totalorder %s351, %s352
    %p361 = scmp.eq.s32.totalorder %s32, 0
    %p362 = por %p360, %p361
    %p363 = scmp.ne.s32.totalorder %s351, %s352
    %p364 = scmp.eq.s32.totalorder %s33, 1
    %p365 = por %p363, %p364
    %p367 = scmp.ne.s32.totalorder %s352, %s366
    %p368 = scmp.eq.s32.totalorder %s33, 0
    %p369 = por %p367, %p368
    %s371 = sadd.s32 %s370, 1
    %p374 = scmp.eq.s32.totalorder %s27, 1
    %p375 = scmp.ne.s32.totalorder %s370, %s372
    %p376 = scmp.eq.s32.totalorder %s27, 0
    %p377 = por %p375, %p376
    %p378 = scmp.ne.s32.totalorder %s370, %s372
    %p379 = scmp.eq.s32.totalorder %s32, 1
    %p380 = por %p378, %p379
    %p381 = scmp.ne.s32.totalorder %s372, %s373
    %p382 = scmp.eq.s32.totalorder %s32, 0
    %p383 = por %p381, %p382
    %p384 = scmp.ne.s32.totalorder %s372, %s373
    %p385 = scmp.eq.s32.totalorder %s33, 1
    %p386 = por %p384, %p385
    %p388 = scmp.ne.s32.totalorder %s373, %s387
    %p389 = scmp.eq.s32.totalorder %s33, 0
    %p390 = por %p388, %p389
    %s392 = sadd.s32 %s391, 1
    %p395 = scmp.eq.s32.totalorder %s27, 1
    %p396 = scmp.ne.s32.totalorder %s391, %s393
    %p397 = scmp.eq.s32.totalorder %s27, 0
    %p398 = por %p396, %p397
    %p399 = scmp.ne.s32.totalorder %s391, %s393
    %p400 = scmp.eq.s32.totalorder %s32, 1
    %p401 = por %p399, %p400
    %p402 = scmp.ne.s32.totalorder %s393, %s394
    %p403 = scmp.eq.s32.totalorder %s32, 0
    %p404 = por %p402, %p403
    %p405 = scmp.ne.s32.totalorder %s393, %s394
    %p406 = scmp.eq.s32.totalorder %s33, 1
    %p407 = por %p405, %p406
    %p409 = scmp.ne.s32.totalorder %s394, %s408
    %p410 = scmp.eq.s32.totalorder %s33, 0
    %p411 = por %p409, %p410
    %s413 = sadd.s32 %s412, 1
    %p416 = scmp.eq.s32.totalorder %s27, 1
    %p417 = scmp.ne.s32.totalorder %s412, %s414
    %p418 = scmp.eq.s32.totalorder %s27, 0
    %p419 = por %p417, %p418
    %p420 = scmp.ne.s32.totalorder %s412, %s414
    %p421 = scmp.eq.s32.totalorder %s32, 1
    %p422 = por %p420, %p421
    %p423 = scmp.ne.s32.totalorder %s414, %s415
    %p424 = scmp.eq.s32.totalorder %s32, 0
    %p425 = por %p423, %p424
    %p426 = scmp.ne.s32.totalorder %s414, %s415
    %p427 = scmp.eq.s32.totalorder %s33, 1
    %p428 = por %p426, %p427
    %p430 = scmp.ne.s32.totalorder %s415, %s429
    %p431 = scmp.eq.s32.totalorder %s33, 0
    %p432 = por %p430, %p431
    %s434 = sadd.s32 %s433, 1
    %p437 = scmp.eq.s32.totalorder %s27, 1
    %p438 = scmp.ne.s32.totalorder %s433, %s435
    %p439 = scmp.eq.s32.totalorder %s27, 0
    %p440 = por %p438, %p439
    %p441 = scmp.ne.s32.totalorder %s433, %s435
    %p442 = scmp.eq.s32.totalorder %s32, 1
    %p443 = por %p441, %p442
    %p444 = scmp.ne.s32.totalorder %s435, %s436
    %p445 = scmp.eq.s32.totalorder %s32, 0
    %p446 = por %p444, %p445
    %p447 = scmp.ne.s32.totalorder %s435, %s436
    %p448 = scmp.eq.s32.totalorder %s33, 1
    %p449 = por %p447, %p448
    %p451 = scmp.ne.s32.totalorder %s436, %s450
    %p452 = scmp.eq.s32.totalorder %s33, 0
    %p453 = por %p451, %p452
    %s455 = sadd.s32 %s454, 1
    %p458 = scmp.eq.s32.totalorder %s27, 1
    %p459 = scmp.ne.s32.totalorder %s454, %s456
    %p460 = scmp.eq.s32.totalorder %s27, 0
    %p461 = por %p459, %p460
    %p462 = scmp.ne.s32.totalorder %s454, %s456
    %p463 = scmp.eq.s32.totalorder %s32, 1
    %p464 = por %p462, %p463
    %p465 = scmp.ne.s32.totalorder %s456, %s457
    %p466 = scmp.eq.s32.totalorder %s32, 0
    %p467 = por %p465, %p466
    %p468 = scmp.ne.s32.totalorder %s456, %s457
    %p469 = scmp.eq.s32.totalorder %s33, 1
    %p470 = por %p468, %p469
    %p472 = scmp.ne.s32.totalorder %s457, %s471
    %p473 = scmp.eq.s32.totalorder %s33, 0
    %p474 = por %p472, %p473
    %s476 = sadd.s32 %s475, 1
    %p479 = scmp.eq.s32.totalorder %s27, 1
    %p480 = scmp.ne.s32.totalorder %s475, %s477
    %p481 = scmp.eq.s32.totalorder %s27, 0
    %p482 = por %p480, %p481
    %p483 = scmp.ne.s32.totalorder %s475, %s477
    %p484 = scmp.eq.s32.totalorder %s32, 1
    %p485 = por %p483, %p484
    %p486 = scmp.ne.s32.totalorder %s477, %s478
    %p487 = scmp.eq.s32.totalorder %s32, 0
    %p488 = por %p486, %p487
    %p489 = scmp.ne.s32.totalorder %s477, %s478
    %p490 = scmp.eq.s32.totalorder %s33, 1
    %p491 = por %p489, %p490
    %p493 = scmp.ne.s32.totalorder %s478, %s492
    %p494 = scmp.eq.s32.totalorder %s33, 0
    %p495 = por %p493, %p494
    %s496 = ssub.s32 %s27, %s34
    %p497 = scmp.eq.s32.totalorder %s496, 0
    %s499 = sadd.s32 %s498, 1
    %s500 = scalar_select %p497, %s498, %s499
    %p503 = pneg %p497
    %p504 = scmp.eq.s32.totalorder %s27, 1
    %p505 = por %p503, %p504
    %p506 = scmp.ne.s32.totalorder %s498, %s501
    %p507 = scmp.eq.s32.totalorder %s27, 0
    %p508 = por %p506, %p507
    %p509 = scmp.ne.s32.totalorder %s498, %s501
    %p510 = scmp.eq.s32.totalorder %s32, 1
    %p511 = por %p509, %p510
    %p512 = scmp.ne.s32.totalorder %s501, %s502
    %p513 = scmp.eq.s32.totalorder %s32, 0
    %p514 = por %p512, %p513
    %p515 = scmp.ne.s32.totalorder %s501, %s502
    %p516 = scmp.eq.s32.totalorder %s33, 1
    %p517 = por %p515, %p516
    %p519 = scmp.ne.s32.totalorder %s502, %s518
    %p520 = scmp.eq.s32.totalorder %s33, 0
    %p521 = por %p519, %p520
    %p522 = scmp.le.s32.totalorder 1, %s27
    %p523 = scmp.lt.s32.totalorder %s27, 3
    %p524 = pnand %p522, %p523
    %p525 = pneg %p524
    // Predicated region
    $region9: #{fpn_forward.1} parent=5 // pred_check
      _
    $region10: #{fpn_forward.1} parent=5 // pred_check_branch
      %527 = sbr.rel (%p524) target = $region12
    $region11: #{fpn_forward.1} parent=5 // pred_region
      %s528 = ssub.s32 %s27, 1
      // Predicated region
      $region13: #{fpn_forward.1} parent=11 // pred_check
        %p529 = pneg %p152
      $region14: #{fpn_forward.1} parent=11 // pred_check_branch
        %531 = sbr.rel (%p529) target = $region16
      $region15: #{fpn_forward.1} parent=11 // pred_region
        _
      $region16: #{fpn_forward.1} parent=11 // pred_fallthru
        _
      // Predicated region
      $region17: #{fpn_forward.1} parent=11 // pred_check
        %p532 = pneg %p173
      $region18: #{fpn_forward.1} parent=11 // pred_check_branch
        %534 = sbr.rel (%p532) target = $region20
      $region19: #{fpn_forward.1} parent=11 // pred_region
        _
      $region20: #{fpn_forward.1} parent=11 // pred_fallthru
        _
      // Predicated region
      $region21: #{fpn_forward.1} parent=11 // pred_check
        %p535 = pneg %p194
      $region22: #{fpn_forward.1} parent=11 // pred_check_branch
        %537 = sbr.rel (%p535) target = $region24
      $region23: #{fpn_forward.1} parent=11 // pred_region
        _
      $region24: #{fpn_forward.1} parent=11 // pred_fallthru
        _
      // Predicated region
      $region25: #{fpn_forward.1} parent=11 // pred_check
        %p538 = pneg %p215
      $region26: #{fpn_forward.1} parent=11 // pred_check_branch
        %540 = sbr.rel (%p538) target = $region28
      $region27: #{fpn_forward.1} parent=11 // pred_region
        _
      $region28: #{fpn_forward.1} parent=11 // pred_fallthru
        _
      // Predicated region
      $region29: #{fpn_forward.1} parent=11 // pred_check
        %p541 = pneg %p236
      $region30: #{fpn_forward.1} parent=11 // pred_check_branch
        %543 = sbr.rel (%p541) target = $region32
      $region31: #{fpn_forward.1} parent=11 // pred_region
        _
      $region32: #{fpn_forward.1} parent=11 // pred_fallthru
        _
      // Predicated region
      $region33: #{fpn_forward.1} parent=11 // pred_check
        %p544 = pneg %p257
      $region34: #{fpn_forward.1} parent=11 // pred_check_branch
        %546 = sbr.rel (%p544) target = $region36
      $region35: #{fpn_forward.1} parent=11 // pred_region
        _
      $region36: #{fpn_forward.1} parent=11 // pred_fallthru
        _
      // Predicated region
      $region37: #{fpn_forward.1} parent=11 // pred_check
        %p547 = pneg %p278
      $region38: #{fpn_forward.1} parent=11 // pred_check_branch
        %549 = sbr.rel (%p547) target = $region40
      $region39: #{fpn_forward.1} parent=11 // pred_region
        _
      $region40: #{fpn_forward.1} parent=11 // pred_fallthru
        _
      // Predicated region
      $region41: #{fpn_forward.1} parent=11 // pred_check
        %p550 = pneg %p299
      $region42: #{fpn_forward.1} parent=11 // pred_check_branch
        %552 = sbr.rel (%p550) target = $region44
      $region43: #{fpn_forward.1} parent=11 // pred_region
        _
      $region44: #{fpn_forward.1} parent=11 // pred_fallthru
        _
      // Predicated region
      $region45: #{fpn_forward.1} parent=11 // pred_check
        %p553 = pneg %p320
      $region46: #{fpn_forward.1} parent=11 // pred_check_branch
        %555 = sbr.rel (%p553) target = $region48
      $region47: #{fpn_forward.1} parent=11 // pred_region
        _
      $region48: #{fpn_forward.1} parent=11 // pred_fallthru
        _
      // Predicated region
      $region49: #{fpn_forward.1} parent=11 // pred_check
        %p556 = pneg %p341
      $region50: #{fpn_forward.1} parent=11 // pred_check_branch
        %558 = sbr.rel (%p556) target = $region52
      $region51: #{fpn_forward.1} parent=11 // pred_region
        _
      $region52: #{fpn_forward.1} parent=11 // pred_fallthru
        _
      // Predicated region
      $region53: #{fpn_forward.1} parent=11 // pred_check
        %p559 = pneg %p362
      $region54: #{fpn_forward.1} parent=11 // pred_check_branch
        %561 = sbr.rel (%p559) target = $region56
      $region55: #{fpn_forward.1} parent=11 // pred_region
        _
      $region56: #{fpn_forward.1} parent=11 // pred_fallthru
        _
      // Predicated region
      $region57: #{fpn_forward.1} parent=11 // pred_check
        %p562 = pneg %p383
      $region58: #{fpn_forward.1} parent=11 // pred_check_branch
        %564 = sbr.rel (%p562) target = $region60
      $region59: #{fpn_forward.1} parent=11 // pred_region
        _
      $region60: #{fpn_forward.1} parent=11 // pred_fallthru
        _
      // Predicated region
      $region61: #{fpn_forward.1} parent=11 // pred_check
        %p565 = pneg %p404
      $region62: #{fpn_forward.1} parent=11 // pred_check_branch
        %567 = sbr.rel (%p565) target = $region64
      $region63: #{fpn_forward.1} parent=11 // pred_region
        _
      $region64: #{fpn_forward.1} parent=11 // pred_fallthru
        _
      // Predicated region
      $region65: #{fpn_forward.1} parent=11 // pred_check
        %p568 = pneg %p425
      $region66: #{fpn_forward.1} parent=11 // pred_check_branch
        %570 = sbr.rel (%p568) target = $region68
      $region67: #{fpn_forward.1} parent=11 // pred_region
        _
      $region68: #{fpn_forward.1} parent=11 // pred_fallthru
        _
      // Predicated region
      $region69: #{fpn_forward.1} parent=11 // pred_check
        %p571 = pneg %p446
      $region70: #{fpn_forward.1} parent=11 // pred_check_branch
        %573 = sbr.rel (%p571) target = $region72
      $region71: #{fpn_forward.1} parent=11 // pred_region
        _
      $region72: #{fpn_forward.1} parent=11 // pred_fallthru
        _
      // Predicated region
      $region73: #{fpn_forward.1} parent=11 // pred_check
        %p574 = pneg %p467
      $region74: #{fpn_forward.1} parent=11 // pred_check_branch
        %576 = sbr.rel (%p574) target = $region76
      $region75: #{fpn_forward.1} parent=11 // pred_region
        _
      $region76: #{fpn_forward.1} parent=11 // pred_fallthru
        _
      // Predicated region
      $region77: #{fpn_forward.1} parent=11 // pred_check
        %p577 = pneg %p488
      $region78: #{fpn_forward.1} parent=11 // pred_check_branch
        %579 = sbr.rel (%p577) target = $region80
      $region79: #{fpn_forward.1} parent=11 // pred_region
        _
      $region80: #{fpn_forward.1} parent=11 // pred_fallthru
        _
    $region12: #{fpn_forward.1} parent=5 // pred_fallthru
      _
    %p580 = scmp.lt.s32.totalorder %s27, 2
    // Predicated region
    $region81: #{fpn_forward.1} parent=5 // pred_check
      %p581 = pneg %p580
    $region82: #{fpn_forward.1} parent=5 // pred_check_branch
      %583 = sbr.rel (%p581) target = $region84
    $region83: #{fpn_forward.1} parent=5 // pred_region
      // Predicated region
      $region85: #{fpn_forward.1} parent=83 // pred_check
        %p584 = pneg %p47
      $region86: #{fpn_forward.1} parent=83 // pred_check_branch
        %586 = sbr.rel (%p584) target = $region88
      $region87: #{fpn_forward.1} parent=83 // pred_region
        %p587 = scmp.lt.s32.totalorder %s27, 1
        %s588 = scalar_select %p587, %s27, 1
        %s589 = smul.addr %s588, 64
        %s590 = smul.addr %s589, 8
        %s591 = scalar_lea.vmem %s0, %s590
      $region88: #{fpn_forward.1} parent=83 // pred_fallthru
        _
      // Predicated region
      $region89: #{fpn_forward.1} parent=83 // pred_check
        %p592 = pneg %p73
      $region90: #{fpn_forward.1} parent=83 // pred_check_branch
        %594 = sbr.rel (%p592) target = $region92
      $region91: #{fpn_forward.1} parent=83 // pred_region
        %p595 = scmp.lt.s32.totalorder %s27, 1
        %s596 = scalar_select %p595, %s27, 1
        %s597 = smul.addr %s596, 32
        %s598 = smul.addr %s597, 8
        %s599 = scalar_lea.vmem %s1, %s598
      $region92: #{fpn_forward.1} parent=83 // pred_fallthru
        _
      // Predicated region
      $region93: #{fpn_forward.1} parent=83 // pred_check
        %p600 = pneg %p99
      $region94: #{fpn_forward.1} parent=83 // pred_check_branch
        %602 = sbr.rel (%p600) target = $region96
      $region95: #{fpn_forward.1} parent=83 // pred_region
        %p603 = scmp.lt.s32.totalorder %s27, 1
        %s604 = scalar_select %p603, %s27, 1
        %s605 = smul.addr %s604, 32
        %s606 = smul.addr %s605, 8
        %s607 = scalar_lea.vmem %s2, %s606
      $region96: #{fpn_forward.1} parent=83 // pred_fallthru
        _
      // Predicated region
      $region97: #{fpn_forward.1} parent=83 // pred_check
        %p608 = pneg %p125
      $region98: #{fpn_forward.1} parent=83 // pred_check_branch
        %610 = sbr.rel (%p608) target = $region100
      $region99: #{fpn_forward.1} parent=83 // pred_region
        %p611 = scmp.lt.s32.totalorder %s27, 1
        %s612 = scalar_select %p611, %s27, 1
        %s613 = smul.addr %s612, 64
        %s614 = smul.addr %s613, 8
        %s615 = scalar_lea.vmem %s3, %s614
      $region100: #{fpn_forward.1} parent=83 // pred_fallthru
        _
    $region84: #{fpn_forward.1} parent=5 // pred_fallthru
      _
    %p616 = scmp.le.s32.totalorder 1, %s27
    %p617 = scmp.lt.s32.totalorder %s27, 3
    %p618 = pnand %p616, %p617
    %p619 = pneg %p618
    // Predicated region
    $region101: #{fpn_forward.1} parent=5 // pred_check
      _
    $region102: #{fpn_forward.1} parent=5 // pred_check_branch
      %621 = sbr.rel (%p618) target = $region104
    $region103: #{fpn_forward.1} parent=5 // pred_region
      %s622 = ssub.s32 %s27, 1
      %p623 = scmp.lt.s32.totalorder %s32, 1
      %s624 = scalar_select %p623, %s32, 1
      %s625 = smul.addr %s624, 64
      %s626 = smul.addr %s625, 8
      %s627 = scalar_lea.vmem %s0, %s626
      %p628 = pneg %p53
      %p629 = pneg %p50
      %p630 = scmp.lt.s32.totalorder %s32, 1
      %s631 = scalar_select %p630, %s32, 1
      %s632 = smul.addr %s631, 32
      %s633 = smul.addr %s632, 8
      %s634 = scalar_lea.vmem %s1, %s633
      %p635 = pneg %p79
      %p636 = pneg %p76
      %p637 = scmp.lt.s32.totalorder %s32, 1
      %s638 = scalar_select %p637, %s32, 1
      %s639 = smul.addr %s638, 32
      %s640 = smul.addr %s639, 8
      %s641 = scalar_lea.vmem %s2, %s640
      %p642 = pneg %p105
      %p643 = pneg %p102
      %p644 = scmp.lt.s32.totalorder %s32, 1
      %s645 = scalar_select %p644, %s32, 1
      %s646 = smul.addr %s645, 64
      %s647 = smul.addr %s646, 8
      %s648 = scalar_lea.vmem %s3, %s647
      %p649 = pneg %p131
      %p650 = pneg %p128
      %p651 = pneg %p152
      %p652 = pneg %p149
      %p653 = pneg %p173
      %p654 = pneg %p170
      %p655 = pneg %p194
      %p656 = pneg %p191
      %p657 = pneg %p215
      %p658 = pneg %p212
      %p659 = pneg %p236
      %p660 = pneg %p233
      %p661 = pneg %p257
      %p662 = pneg %p254
      %p663 = pneg %p278
      %p664 = pneg %p275
      %p665 = pneg %p299
      %p666 = pneg %p296
      %p667 = pneg %p320
      %p668 = pneg %p317
      %p669 = pneg %p341
      %p670 = pneg %p338
      %p671 = pneg %p362
      %p672 = pneg %p359
      %p673 = pneg %p383
      %p674 = pneg %p380
      %p675 = pneg %p404
      %p676 = pneg %p401
      %p677 = pneg %p425
      %p678 = pneg %p422
      %p679 = pneg %p446
      %p680 = pneg %p443
      %p681 = pneg %p467
      %p682 = pneg %p464
      %p683 = pneg %p488
      %p684 = pneg %p485
      %p685 = pneg %p514
      %p686 = pneg %p511
      %p687 = scmp.lt.s32.totalorder %s32, 1
      %s688 = scalar_select %p687, %s32, 1
      %s689 = smul.addr %s688, 4
      %s690 = scalar_lea.vmem %s21, %s689
      %p691 = scmp.lt.s32.totalorder %s32, 1
      %s692 = scalar_select %p691, %s32, 1
      %s693 = smul.addr %s692, 64
      %s694 = smul.addr %s693, 8
      %s695 = scalar_lea.vmem %s0, %s694
      %p696 = scmp.lt.s32.totalorder %s32, 1
      %s697 = scalar_select %p696, %s32, 1
      %s698 = smul.addr %s697, 32
      %s699 = smul.addr %s698, 8
      %s700 = scalar_lea.vmem %s1, %s699
      %p701 = scmp.lt.s32.totalorder %s32, 1
      %s702 = scalar_select %p701, %s32, 1
      %s703 = smul.addr %s702, 32
      %s704 = smul.addr %s703, 8
      %s705 = scalar_lea.vmem %s2, %s704
      %p706 = scmp.lt.s32.totalorder %s32, 1
      %s707 = scalar_select %p706, %s32, 1
      %s708 = smul.addr %s707, 64
      %s709 = smul.addr %s708, 8
      %s710 = scalar_lea.vmem %s3, %s709
      %p711 = scmp.lt.s32.totalorder %s32, 1
      %s712 = scalar_select %p711, %s32, 1
      %s713 = smul.addr %s712, 4
      %s714 = scalar_lea.vmem %s21, %s713
      %v715 = vld [vmem:[%s695] sm:$0xff]
      %v716 = vld [vmem:[%s695 + $0x8] sm:$0xff]
      %v717 = vld [vmem:[%s695 + $0x10] sm:$0xff]
      %v718 = vld [vmem:[%s695 + $0x18] sm:$0xff]
      %v719 = vld [vmem:[%s695 + $0x20] sm:$0xff]
      %v720 = vld [vmem:[%s695 + $0x28] sm:$0xff]
      %v721 = vld [vmem:[%s695 + $0x30] sm:$0xff]
      %v722 = vld [vmem:[%s695 + $0x38] sm:$0xff]
      %v723 = vld [vmem:[%s695 + $0x40] sm:$0xff]
      %v724 = vld [vmem:[%s695 + $0x48] sm:$0xff]
      %v725 = vld [vmem:[%s695 + $0x50] sm:$0xff]
      %v726 = vld [vmem:[%s695 + $0x58] sm:$0xff]
      %v727 = vld [vmem:[%s695 + $0x60] sm:$0xff]
      %v728 = vld [vmem:[%s695 + $0x68] sm:$0xff]
      %v729 = vld [vmem:[%s695 + $0x70] sm:$0xff]
      %v730 = vld [vmem:[%s695 + $0x78] sm:$0xff]
      %v731 = vld [vmem:[%s695 + $0x80] sm:$0xff]
      %v732 = vld [vmem:[%s695 + $0x88] sm:$0xff]
      %v733 = vld [vmem:[%s695 + $0x90] sm:$0xff]
      %v734 = vld [vmem:[%s695 + $0x98] sm:$0xff]
      %v735 = vld [vmem:[%s695 + $0xa0] sm:$0xff]
      %v736 = vld [vmem:[%s695 + $0xa8] sm:$0xff]
      %v737 = vld [vmem:[%s695 + $0xb0] sm:$0xff]
      %v738 = vld [vmem:[%s695 + $0xb8] sm:$0xff]
      %v739 = vld [vmem:[%s695 + $0xc0] sm:$0xff]
      %v740 = vld [vmem:[%s695 + $0xc8] sm:$0xff]
      %v741 = vld [vmem:[%s695 + $0xd0] sm:$0xff]
      %v742 = vld [vmem:[%s695 + $0xd8] sm:$0xff]
      %v743 = vld [vmem:[%s695 + $0xe0] sm:$0xff]
      %v744 = vld [vmem:[%s695 + $0xe8] sm:$0xff]
      %v745 = vld [vmem:[%s695 + $0xf0] sm:$0xff]
      %v746 = vld [vmem:[%s695 + $0xf8] sm:$0xff]
      %v747 = vld [vmem:[%s695 + $0x100] sm:$0xff]
      %v748 = vld [vmem:[%s695 + $0x108] sm:$0xff]
      %v749 = vld [vmem:[%s695 + $0x110] sm:$0xff]
      %v750 = vld [vmem:[%s695 + $0x118] sm:$0xff]
      %v751 = vld [vmem:[%s695 + $0x120] sm:$0xff]
      %v752 = vld [vmem:[%s695 + $0x128] sm:$0xff]
      %v753 = vld [vmem:[%s695 + $0x130] sm:$0xff]
      %v754 = vld [vmem:[%s695 + $0x138] sm:$0xff]
      %v755 = vld [vmem:[%s695 + $0x140] sm:$0xff]
      %v756 = vld [vmem:[%s695 + $0x148] sm:$0xff]
      %v757 = vld [vmem:[%s695 + $0x150] sm:$0xff]
      %v758 = vld [vmem:[%s695 + $0x158] sm:$0xff]
      %v759 = vld [vmem:[%s695 + $0x160] sm:$0xff]
      %v760 = vld [vmem:[%s695 + $0x168] sm:$0xff]
      %v761 = vld [vmem:[%s695 + $0x170] sm:$0xff]
      %v762 = vld [vmem:[%s695 + $0x178] sm:$0xff]
      %v763 = vld [vmem:[%s695 + $0x180] sm:$0xff]
      %v764 = vld [vmem:[%s695 + $0x188] sm:$0xff]
      %v765 = vld [vmem:[%s695 + $0x190] sm:$0xff]
      %v766 = vld [vmem:[%s695 + $0x198] sm:$0xff]
      %v767 = vld [vmem:[%s695 + $0x1a0] sm:$0xff]
      %v768 = vld [vmem:[%s695 + $0x1a8] sm:$0xff]
      %v769 = vld [vmem:[%s695 + $0x1b0] sm:$0xff]
      %v770 = vld [vmem:[%s695 + $0x1b8] sm:$0xff]
      %v771 = vld [vmem:[%s695 + $0x1c0] sm:$0xff]
      %v772 = vld [vmem:[%s695 + $0x1c8] sm:$0xff]
      %v773 = vld [vmem:[%s695 + $0x1d0] sm:$0xff]
      %v774 = vld [vmem:[%s695 + $0x1d8] sm:$0xff]
      %v775 = vld [vmem:[%s695 + $0x1e0] sm:$0xff]
      %v776 = vld [vmem:[%s695 + $0x1e8] sm:$0xff]
      %v777 = vld [vmem:[%s695 + $0x1f0] sm:$0xff]
      %v778 = vld [vmem:[%s695 + $0x1f8] sm:$0xff]
      %v779 = vld [vmem:[%s700] sm:$0xff]
      %v780 = vld [vmem:[%s700 + $0x8] sm:$0xff]
      %v781 = vld [vmem:[%s700 + $0x10] sm:$0xff]
      %v782 = vld [vmem:[%s700 + $0x18] sm:$0xff]
      %v783 = vld [vmem:[%s700 + $0x20] sm:$0xff]
      %v784 = vld [vmem:[%s700 + $0x28] sm:$0xff]
      %v785 = vld [vmem:[%s700 + $0x30] sm:$0xff]
      %v786 = vld [vmem:[%s700 + $0x38] sm:$0xff]
      %v787 = vld [vmem:[%s700 + $0x40] sm:$0xff]
      %v788 = vld [vmem:[%s700 + $0x48] sm:$0xff]
      %v789 = vld [vmem:[%s700 + $0x50] sm:$0xff]
      %v790 = vld [vmem:[%s700 + $0x58] sm:$0xff]
      %v791 = vld [vmem:[%s700 + $0x60] sm:$0xff]
      %v792 = vld [vmem:[%s700 + $0x68] sm:$0xff]
      %v793 = vld [vmem:[%s700 + $0x70] sm:$0xff]
      %v794 = vld [vmem:[%s700 + $0x78] sm:$0xff]
      %v795 = vld [vmem:[%s700 + $0x80] sm:$0xff]
      %v796 = vld [vmem:[%s700 + $0x88] sm:$0xff]
      %v797 = vld [vmem:[%s700 + $0x90] sm:$0xff]
      %v798 = vld [vmem:[%s700 + $0x98] sm:$0xff]
      %v799 = vld [vmem:[%s700 + $0xa0] sm:$0xff]
      %v800 = vld [vmem:[%s700 + $0xa8] sm:$0xff]
      %v801 = vld [vmem:[%s700 + $0xb0] sm:$0xff]
      %v802 = vld [vmem:[%s700 + $0xb8] sm:$0xff]
      %v803 = vld [vmem:[%s700 + $0xc0] sm:$0xff]
      %v804 = vld [vmem:[%s700 + $0xc8] sm:$0xff]
      %v805 = vld [vmem:[%s700 + $0xd0] sm:$0xff]
      %v806 = vld [vmem:[%s700 + $0xd8] sm:$0xff]
      %v807 = vld [vmem:[%s700 + $0xe0] sm:$0xff]
      %v808 = vld [vmem:[%s700 + $0xe8] sm:$0xff]
      %v809 = vld [vmem:[%s700 + $0xf0] sm:$0xff]
      %v810 = vld [vmem:[%s700 + $0xf8] sm:$0xff]
      %v811 = vld [vmem:[%s705] sm:$0xff]
      %v812 = vld [vmem:[%s705 + $0x8] sm:$0xff]
      %v813 = vld [vmem:[%s705 + $0x10] sm:$0xff]
      %v814 = vld [vmem:[%s705 + $0x18] sm:$0xff]
      %v815 = vld [vmem:[%s705 + $0x20] sm:$0xff]
      %v816 = vld [vmem:[%s705 + $0x28] sm:$0xff]
      %v817 = vld [vmem:[%s705 + $0x30] sm:$0xff]
      %v818 = vld [vmem:[%s705 + $0x38] sm:$0xff]
      %v819 = vld [vmem:[%s705 + $0x40] sm:$0xff]
      %v820 = vld [vmem:[%s705 + $0x48] sm:$0xff]
      %v821 = vld [vmem:[%s705 + $0x50] sm:$0xff]
      %v822 = vld [vmem:[%s705 + $0x58] sm:$0xff]
      %v823 = vld [vmem:[%s705 + $0x60] sm:$0xff]
      %v824 = vld [vmem:[%s705 + $0x68] sm:$0xff]
      %v825 = vld [vmem:[%s705 + $0x70] sm:$0xff]
      %v826 = vld [vmem:[%s705 + $0x78] sm:$0xff]
      %v827 = vld [vmem:[%s705 + $0x80] sm:$0xff]
      %v828 = vld [vmem:[%s705 + $0x88] sm:$0xff]
      %v829 = vld [vmem:[%s705 + $0x90] sm:$0xff]
      %v830 = vld [vmem:[%s705 + $0x98] sm:$0xff]
      %v831 = vld [vmem:[%s705 + $0xa0] sm:$0xff]
      %v832 = vld [vmem:[%s705 + $0xa8] sm:$0xff]
      %v833 = vld [vmem:[%s705 + $0xb0] sm:$0xff]
      %v834 = vld [vmem:[%s705 + $0xb8] sm:$0xff]
      %v835 = vld [vmem:[%s705 + $0xc0] sm:$0xff]
      %v836 = vld [vmem:[%s705 + $0xc8] sm:$0xff]
      %v837 = vld [vmem:[%s705 + $0xd0] sm:$0xff]
      %v838 = vld [vmem:[%s705 + $0xd8] sm:$0xff]
      %v839 = vld [vmem:[%s705 + $0xe0] sm:$0xff]
      %v840 = vld [vmem:[%s705 + $0xe8] sm:$0xff]
      %v841 = vld [vmem:[%s705 + $0xf0] sm:$0xff]
      %v842 = vld [vmem:[%s705 + $0xf8] sm:$0xff]
      %v843 = vld [vmem:[%s710] sm:$0xff]
      %v844 = vld [vmem:[%s710 + $0x8] sm:$0xff]
      %v845 = vld [vmem:[%s710 + $0x10] sm:$0xff]
      %v846 = vld [vmem:[%s710 + $0x18] sm:$0xff]
      %v847 = vld [vmem:[%s710 + $0x20] sm:$0xff]
      %v848 = vld [vmem:[%s710 + $0x28] sm:$0xff]
      %v849 = vld [vmem:[%s710 + $0x30] sm:$0xff]
      %v850 = vld [vmem:[%s710 + $0x38] sm:$0xff]
      %v851 = vld [vmem:[%s710 + $0x40] sm:$0xff]
      %v852 = vld [vmem:[%s710 + $0x48] sm:$0xff]
      %v853 = vld [vmem:[%s710 + $0x50] sm:$0xff]
      %v854 = vld [vmem:[%s710 + $0x58] sm:$0xff]
      %v855 = vld [vmem:[%s710 + $0x60] sm:$0xff]
      %v856 = vld [vmem:[%s710 + $0x68] sm:$0xff]
      %v857 = vld [vmem:[%s710 + $0x70] sm:$0xff]
      %v858 = vld [vmem:[%s710 + $0x78] sm:$0xff]
      %v859 = vld [vmem:[%s710 + $0x80] sm:$0xff]
      %v860 = vld [vmem:[%s710 + $0x88] sm:$0xff]
      %v861 = vld [vmem:[%s710 + $0x90] sm:$0xff]
      %v862 = vld [vmem:[%s710 + $0x98] sm:$0xff]
      %v863 = vld [vmem:[%s710 + $0xa0] sm:$0xff]
      %v864 = vld [vmem:[%s710 + $0xa8] sm:$0xff]
      %v865 = vld [vmem:[%s710 + $0xb0] sm:$0xff]
      %v866 = vld [vmem:[%s710 + $0xb8] sm:$0xff]
      %v867 = vld [vmem:[%s710 + $0xc0] sm:$0xff]
      %v868 = vld [vmem:[%s710 + $0xc8] sm:$0xff]
      %v869 = vld [vmem:[%s710 + $0xd0] sm:$0xff]
      %v870 = vld [vmem:[%s710 + $0xd8] sm:$0xff]
      %v871 = vld [vmem:[%s710 + $0xe0] sm:$0xff]
      %v872 = vld [vmem:[%s710 + $0xe8] sm:$0xff]
      %v873 = vld [vmem:[%s710 + $0xf0] sm:$0xff]
      %v874 = vld [vmem:[%s710 + $0xf8] sm:$0xff]
      %v875 = vld [vmem:[%s710 + $0x100] sm:$0xff]
      %v876 = vld [vmem:[%s710 + $0x108] sm:$0xff]
      %v877 = vld [vmem:[%s710 + $0x110] sm:$0xff]
      %v878 = vld [vmem:[%s710 + $0x118] sm:$0xff]
      %v879 = vld [vmem:[%s710 + $0x120] sm:$0xff]
      %v880 = vld [vmem:[%s710 + $0x128] sm:$0xff]
      %v881 = vld [vmem:[%s710 + $0x130] sm:$0xff]
      %v882 = vld [vmem:[%s710 + $0x138] sm:$0xff]
      %v883 = vld [vmem:[%s710 + $0x140] sm:$0xff]
      %v884 = vld [vmem:[%s710 + $0x148] sm:$0xff]
      %v885 = vld [vmem:[%s710 + $0x150] sm:$0xff]
      %v886 = vld [vmem:[%s710 + $0x158] sm:$0xff]
      %v887 = vld [vmem:[%s710 + $0x160] sm:$0xff]
      %v888 = vld [vmem:[%s710 + $0x168] sm:$0xff]
      %v889 = vld [vmem:[%s710 + $0x170] sm:$0xff]
      %v890 = vld [vmem:[%s710 + $0x178] sm:$0xff]
      %v891 = vld [vmem:[%s710 + $0x180] sm:$0xff]
      %v892 = vld [vmem:[%s710 + $0x188] sm:$0xff]
      %v893 = vld [vmem:[%s710 + $0x190] sm:$0xff]
      %v894 = vld [vmem:[%s710 + $0x198] sm:$0xff]
      %v895 = vld [vmem:[%s710 + $0x1a0] sm:$0xff]
      %v896 = vld [vmem:[%s710 + $0x1a8] sm:$0xff]
      %v897 = vld [vmem:[%s710 + $0x1b0] sm:$0xff]
      %v898 = vld [vmem:[%s710 + $0x1b8] sm:$0xff]
      %v899 = vld [vmem:[%s710 + $0x1c0] sm:$0xff]
      %v900 = vld [vmem:[%s710 + $0x1c8] sm:$0xff]
      %v901 = vld [vmem:[%s710 + $0x1d0] sm:$0xff]
      %v902 = vld [vmem:[%s710 + $0x1d8] sm:$0xff]
      %v903 = vld [vmem:[%s710 + $0x1e0] sm:$0xff]
      %v904 = vld [vmem:[%s710 + $0x1e8] sm:$0xff]
      %v905 = vld [vmem:[%s710 + $0x1f0] sm:$0xff]
      %v906 = vld [vmem:[%s710 + $0x1f8] sm:$0xff]
      %v907 = vld [vmem:[%s4] sm:$0xff]
      %v908 = vld [vmem:[%s4 + $0x8] sm:$0xff]
      %v909 = vld [vmem:[%s4 + $0x10] sm:$0xff]
      %v910 = vld [vmem:[%s4 + $0x18] sm:$0xff]
      %v911 = vld [vmem:[%s4 + $0x20] sm:$0xff]
      %v912 = vld [vmem:[%s4 + $0x28] sm:$0xff]
      %v913 = vld [vmem:[%s4 + $0x30] sm:$0xff]
      %v914 = vld [vmem:[%s4 + $0x38] sm:$0xff]
      %v915 = vld [vmem:[%s4 + $0x40] sm:$0xff]
      %v916 = vld [vmem:[%s4 + $0x48] sm:$0xff]
      %v917 = vld [vmem:[%s4 + $0x50] sm:$0xff]
      %v918 = vld [vmem:[%s4 + $0x58] sm:$0xff]
      %v919 = vld [vmem:[%s4 + $0x60] sm:$0xff]
      %v920 = vld [vmem:[%s4 + $0x68] sm:$0xff]
      %v921 = vld [vmem:[%s4 + $0x70] sm:$0xff]
      %v922 = vld [vmem:[%s4 + $0x78] sm:$0xff]
      %v923 = vld [vmem:[%s4 + $0x80] sm:$0xff]
      %v924 = vld [vmem:[%s4 + $0x88] sm:$0xff]
      %v925 = vld [vmem:[%s4 + $0x90] sm:$0xff]
      %v926 = vld [vmem:[%s4 + $0x98] sm:$0xff]
      %v927 = vld [vmem:[%s4 + $0xa0] sm:$0xff]
      %v928 = vld [vmem:[%s4 + $0xa8] sm:$0xff]
      %v929 = vld [vmem:[%s4 + $0xb0] sm:$0xff]
      %v930 = vld [vmem:[%s4 + $0xb8] sm:$0xff]
      %v931 = vld [vmem:[%s4 + $0xc0] sm:$0xff]
      %v932 = vld [vmem:[%s4 + $0xc8] sm:$0xff]
      %v933 = vld [vmem:[%s4 + $0xd0] sm:$0xff]
      %v934 = vld [vmem:[%s4 + $0xd8] sm:$0xff]
      %v935 = vld [vmem:[%s4 + $0xe0] sm:$0xff]
      %v936 = vld [vmem:[%s4 + $0xe8] sm:$0xff]
      %v937 = vld [vmem:[%s4 + $0xf0] sm:$0xff]
      %v938 = vld [vmem:[%s4 + $0xf8] sm:$0xff]
      %v939 = vld [vmem:[%s4 + $0x100] sm:$0xff]
      %v940 = vld [vmem:[%s4 + $0x108] sm:$0xff]
      %v941 = vld [vmem:[%s4 + $0x110] sm:$0xff]
      %v942 = vld [vmem:[%s4 + $0x118] sm:$0xff]
      %v943 = vld [vmem:[%s4 + $0x120] sm:$0xff]
      %v944 = vld [vmem:[%s4 + $0x128] sm:$0xff]
      %v945 = vld [vmem:[%s4 + $0x130] sm:$0xff]
      %v946 = vld [vmem:[%s4 + $0x138] sm:$0xff]
      %v947 = vld [vmem:[%s4 + $0x140] sm:$0xff]
      %v948 = vld [vmem:[%s4 + $0x148] sm:$0xff]
      %v949 = vld [vmem:[%s4 + $0x150] sm:$0xff]
      %v950 = vld [vmem:[%s4 + $0x158] sm:$0xff]
      %v951 = vld [vmem:[%s4 + $0x160] sm:$0xff]
      %v952 = vld [vmem:[%s4 + $0x168] sm:$0xff]
      %v953 = vld [vmem:[%s4 + $0x170] sm:$0xff]
      %v954 = vld [vmem:[%s4 + $0x178] sm:$0xff]
      %v955 = vld [vmem:[%s4 + $0x180] sm:$0xff]
      %v956 = vld [vmem:[%s4 + $0x188] sm:$0xff]
      %v957 = vld [vmem:[%s4 + $0x190] sm:$0xff]
      %v958 = vld [vmem:[%s4 + $0x198] sm:$0xff]
      %v959 = vld [vmem:[%s4 + $0x1a0] sm:$0xff]
      %v960 = vld [vmem:[%s4 + $0x1a8] sm:$0xff]
      %v961 = vld [vmem:[%s4 + $0x1b0] sm:$0xff]
      %v962 = vld [vmem:[%s4 + $0x1b8] sm:$0xff]
      %v963 = vld [vmem:[%s4 + $0x1c0] sm:$0xff]
      %v964 = vld [vmem:[%s4 + $0x1c8] sm:$0xff]
      %v965 = vld [vmem:[%s4 + $0x1d0] sm:$0xff]
      %v966 = vld [vmem:[%s4 + $0x1d8] sm:$0xff]
      %v967 = vld [vmem:[%s4 + $0x1e0] sm:$0xff]
      %v968 = vld [vmem:[%s4 + $0x1e8] sm:$0xff]
      %v969 = vld [vmem:[%s4 + $0x1f0] sm:$0xff]
      %v970 = vld [vmem:[%s4 + $0x1f8] sm:$0xff]
      %v971 = vld [vmem:[%s5] sm:$0xff]
      %v972 = vld [vmem:[%s5 + $0x8] sm:$0xff]
      %v973 = vld [vmem:[%s5 + $0x10] sm:$0xff]
      %v974 = vld [vmem:[%s5 + $0x18] sm:$0xff]
      %v975 = vld [vmem:[%s5 + $0x20] sm:$0xff]
      %v976 = vld [vmem:[%s5 + $0x28] sm:$0xff]
      %v977 = vld [vmem:[%s5 + $0x30] sm:$0xff]
      %v978 = vld [vmem:[%s5 + $0x38] sm:$0xff]
      %v979 = vld [vmem:[%s5 + $0x40] sm:$0xff]
      %v980 = vld [vmem:[%s5 + $0x48] sm:$0xff]
      %v981 = vld [vmem:[%s5 + $0x50] sm:$0xff]
      %v982 = vld [vmem:[%s5 + $0x58] sm:$0xff]
      %v983 = vld [vmem:[%s5 + $0x60] sm:$0xff]
      %v984 = vld [vmem:[%s5 + $0x68] sm:$0xff]
      %v985 = vld [vmem:[%s5 + $0x70] sm:$0xff]
      %v986 = vld [vmem:[%s5 + $0x78] sm:$0xff]
      %988 = vset.pattern.permute.xlu0 0
      %989 = vperm.xlu0 %988, %v971
      %v990 = vpop.permute.xlu0 %989
      %993 = vset.pattern.permute.xlu0 0
      %994 = vperm.xlu0 %993, %v972
      %v995 = vpop.permute.xlu0 %994
      %998 = vset.pattern.permute.xlu0 0
      %999 = vperm.xlu0 %998, %v973
      %v1000 = vpop.permute.xlu0 %999
      %1003 = vset.pattern.permute.xlu0 0
      %1004 = vperm.xlu0 %1003, %v974
      %v1005 = vpop.permute.xlu0 %1004
      %1008 = vset.pattern.permute.xlu0 0
      %1009 = vperm.xlu0 %1008, %v975
      %v1010 = vpop.permute.xlu0 %1009
      %1013 = vset.pattern.permute.xlu0 0
      %1014 = vperm.xlu0 %1013, %v976
      %v1015 = vpop.permute.xlu0 %1014
      %1018 = vset.pattern.permute.xlu0 0
      %1019 = vperm.xlu0 %1018, %v977
      %v1020 = vpop.permute.xlu0 %1019
      %1023 = vset.pattern.permute.xlu0 0
      %1024 = vperm.xlu0 %1023, %v978
      %v1025 = vpop.permute.xlu0 %1024
      %1028 = vset.pattern.permute.xlu0 0
      %1029 = vperm.xlu0 %1028, %v979
      %v1030 = vpop.permute.xlu0 %1029
      %1033 = vset.pattern.permute.xlu0 0
      %1034 = vperm.xlu0 %1033, %v980
      %v1035 = vpop.permute.xlu0 %1034
      %1038 = vset.pattern.permute.xlu0 0
      %1039 = vperm.xlu0 %1038, %v981
      %v1040 = vpop.permute.xlu0 %1039
      %1043 = vset.pattern.permute.xlu0 0
      %1044 = vperm.xlu0 %1043, %v982
      %v1045 = vpop.permute.xlu0 %1044
      %1048 = vset.pattern.permute.xlu0 0
      %1049 = vperm.xlu0 %1048, %v983
      %v1050 = vpop.permute.xlu0 %1049
      %1053 = vset.pattern.permute.xlu0 0
      %1054 = vperm.xlu0 %1053, %v984
      %v1055 = vpop.permute.xlu0 %1054
      %1058 = vset.pattern.permute.xlu0 0
      %1059 = vperm.xlu0 %1058, %v985
      %v1060 = vpop.permute.xlu0 %1059
      %1063 = vset.pattern.permute.xlu0 0
      %1064 = vperm.xlu0 %1063, %v986
      %v1065 = vpop.permute.xlu0 %1064
      %1067 = vmatprep.subr.mxu0 0.0
      %1068 = vmatpush1.msra.mxu0 %v843
      %1069 = vmatprep.subr.mxu0 0.0
      %1070 = vmatpush1.msra.mxu0 %v844
      %1071 = vmatprep.subr.mxu0 0.0
      %1072 = vmatpush1.msra.mxu0 %v845
      %1073 = vmatprep.subr.mxu0 0.0
      %1074 = vmatpush1.msra.mxu0 %v846
      %1075 = vmatprep.subr.mxu0 0.0
      %1076 = vmatpush1.msra.mxu0 %v847
      %1077 = vmatprep.subr.mxu0 0.0
      %1078 = vmatpush1.msra.mxu0 %v848
      %1079 = vmatprep.subr.mxu0 0.0
      %1080 = vmatpush1.msra.mxu0 %v849
      %1081 = vmatprep.subr.mxu0 0.0
      %1082 = vmatpush1.msra.mxu0 %v850
      %1083 = vmatprep.subr.mxu0 0.0
      %1084 = vmatpush1.msra.mxu0 %v851
      %1085 = vmatprep.subr.mxu0 0.0
      %1086 = vmatpush1.msra.mxu0 %v852
      %1087 = vmatprep.subr.mxu0 0.0
      %1088 = vmatpush1.msra.mxu0 %v853
      %1089 = vmatprep.subr.mxu0 0.0
      %1090 = vmatpush1.msra.mxu0 %v854
      %1091 = vmatprep.subr.mxu0 0.0
      %1092 = vmatpush1.msra.mxu0 %v855
      %1093 = vmatprep.subr.mxu0 0.0
      %1094 = vmatpush1.msra.mxu0 %v856
      %1095 = vmatprep.subr.mxu0 0.0
      %1096 = vmatpush1.msra.mxu0 %v857
      %1097 = vmatprep.subr.mxu0 0.0
      %1098 = vmatpush1.msra.mxu0 %v858
      %1099 = vmatprep.subr.mxu0 0.0
      %1100 = vmatpush1.msra.mxu0 %v859
      %1101 = vmatprep.subr.mxu0 0.0
      %1102 = vmatpush1.msra.mxu0 %v860
      %1103 = vmatprep.subr.mxu0 0.0
      %1104 = vmatpush1.msra.mxu0 %v861
      %1105 = vmatprep.subr.mxu0 0.0
      %1106 = vmatpush1.msra.mxu0 %v862
      %1107 = vmatprep.subr.mxu0 0.0
      %1108 = vmatpush1.msra.mxu0 %v863
      %1109 = vmatprep.subr.mxu0 0.0
      %1110 = vmatpush1.msra.mxu0 %v864
      %1111 = vmatprep.subr.mxu0 0.0
      %1112 = vmatpush1.msra.mxu0 %v865
      %1113 = vmatprep.subr.mxu0 0.0
      %1114 = vmatpush1.msra.mxu0 %v866
      %1115 = vmatprep.subr.mxu0 0.0
      %1116 = vmatpush1.msra.mxu0 %v867
      %1117 = vmatprep.subr.mxu0 0.0
      %1118 = vmatpush1.msra.mxu0 %v868
      %1119 = vmatprep.subr.mxu0 0.0
      %1120 = vmatpush1.msra.mxu0 %v869
      %1121 = vmatprep.subr.mxu0 0.0
      %1122 = vmatpush1.msra.mxu0 %v870
      %1123 = vmatprep.subr.mxu0 0.0
      %1124 = vmatpush1.msra.mxu0 %v871
      %1125 = vmatprep.subr.mxu0 0.0
      %1126 = vmatpush1.msra.mxu0 %v872
      %1127 = vmatprep.subr.mxu0 0.0
      %1128 = vmatpush1.msra.mxu0 %v873
      %1129 = vmatprep.subr.mxu0 0.0
      %1130 = vmatpush1.msra.mxu0 %v874
      %1131 = vmatprep.mubr.f32.mxu0 %v908
      %1132 = vmatmul.mubr.f32.gmra.mrb[0].mxu0 %v907
      %v1133 = vpop.f32.mrb[0].mxu0
      %v1134 = vadd.f32 %v990, %v1133
      %v1135 = vpop.f32.mrb[0].mxu0
      %1136 = vmatprep.mubr.f32.mxu0 %v912
      %1137 = vmatmul.mubr.f32.gmra.mrb[0].mxu0 %v911
      %v1138 = vpop.f32.mrb[0].mxu0
      %v1139 = vadd.f32 %v995, %v1138
      %v1140 = vpop.f32.mrb[0].mxu0
      %1141 = vmatprep.mubr.f32.mxu0 %v916
      %1142 = vmatmul.mubr.f32.gmra.mrb[0].mxu0 %v915
      %v1143 = vpop.f32.mrb[0].mxu0
      %v1144 = vadd.f32 %v1000, %v1143
      %v1145 = vpop.f32.mrb[0].mxu0
      %1146 = vmatprep.mubr.f32.mxu0 %v920
      %1147 = vmatmul.mubr.f32.gmra.mrb[0].mxu0 %v919
      %v1148 = vpop.f32.mrb[0].mxu0
      %v1149 = vadd.f32 %v1005, %v1148
      %v1150 = vpop.f32.mrb[0].mxu0
      %1151 = vmatprep.mubr.f32.mxu0 %v924
      %1152 = vmatmul.mubr.f32.gmra.mrb[0].mxu0 %v923
      %v1153 = vpop.f32.mrb[0].mxu0
      %v1154 = vadd.f32 %v1010, %v1153
      %v1155 = vpop.f32.mrb[0].mxu0
      %1156 = vmatprep.mubr.f32.mxu0 %v928
      %1157 = vmatmul.mubr.f32.gmra.mrb[0].mxu0 %v927
      %v1158 = vpop.f32.mrb[0].mxu0
      %v1159 = vadd.f32 %v1015, %v1158
      %v1160 = vpop.f32.mrb[0].mxu0
      %1161 = vmatprep.mubr.f32.mxu0 %v932
      %1162 = vmatmul.mubr.f32.gmra.mrb[0].mxu0 %v931
      %v1163 = vpop.f32.mrb[0].mxu0
      %v1164 = vadd.f32 %v1020, %v1163
      %v1165 = vpop.f32.mrb[0].mxu0
      %1166 = vmatprep.mubr.f32.mxu0 %v936
      %1167 = vmatmul.mubr.f32.gmra.mrb[0].mxu0 %v935
      %v1168 = vpop.f32.mrb[0].mxu0
      %v1169 = vadd.f32 %v1025, %v1168
      %v1170 = vpop.f32.mrb[0].mxu0
      %1171 = vmatprep.mubr.f32.mxu0 %v940
      %1172 = vmatmul.mubr.f32.gmra.mrb[0].mxu0 %v939
      %v1173 = vpop.f32.mrb[0].mxu0
      %v1174 = vadd.f32 %v1030, %v1173
      %v1175 = vpop.f32.mrb[0].mxu0
      %1176 = vmatprep.mubr.f32.mxu0 %v944
      %1177 = vmatmul.mubr.f32.gmra.mrb[0].mxu0 %v943
      %v1178 = vpop.f32.mrb[0].mxu0
      %v1179 = vadd.f32 %v1035, %v1178
      %v1180 = vpop.f32.mrb[0].mxu0
      %1181 = vmatprep.mubr.f32.mxu0 %v948
      %1182 = vmatmul.mubr.f32.gmra.mrb[0].mxu0 %v947
      %v1183 = vpop.f32.mrb[0].mxu0
      %v1184 = vadd.f32 %v1040, %v1183
      %v1185 = vpop.f32.mrb[0].mxu0
      %1186 = vmatprep.mubr.f32.mxu0 %v952
      %1187 = vmatmul.mubr.f32.gmra.mrb[0].mxu0 %v951
      %v1188 = vpop.f32.mrb[0].mxu0
      %v1189 = vadd.f32 %v1045, %v1188
      %v1190 = vpop.f32.mrb[0].mxu0
      %1191 = vmatprep.mubr.f32.mxu0 %v956
      %1192 = vmatmul.mubr.f32.gmra.mrb[0].mxu0 %v955
      %v1193 = vpop.f32.mrb[0].mxu0
      %v1194 = vadd.f32 %v1050, %v1193
      %v1195 = vpop.f32.mrb[0].mxu0
      %1196 = vmatprep.mubr.f32.mxu0 %v960
      %1197 = vmatmul.mubr.f32.gmra.mrb[0].mxu0 %v959
      %v1198 = vpop.f32.mrb[0].mxu0
      %v1199 = vadd.f32 %v1055, %v1198
      %v1200 = vpop.f32.mrb[0].mxu0
      %1201 = vmatprep.mubr.f32.mxu0 %v964
      %1202 = vmatmul.mubr.f32.gmra.mrb[0].mxu0 %v963
      %v1203 = vpop.f32.mrb[0].mxu0
      %v1204 = vadd.f32 %v1060, %v1203
      %v1205 = vpop.f32.mrb[0].mxu0
      %1206 = vmatprep.mubr.f32.mxu0 %v968
      %1207 = vmatmul.mubr.f32.gmra.mrb[0].mxu0 %v967
      %v1208 = vpop.f32.mrb[0].mxu0
      %v1209 = vadd.f32 %v1065, %v1208
      %v1210 = vpop.f32.mrb[0].mxu0
      %1211 = vdwg.mxu0
      %1212 = vmatprep.subr.mxu0 0.0
      %1213 = vmatpush1.msra.mxu0 %v875
      %1214 = vmatprep.subr.mxu0 0.0
      %1215 = vmatpush1.msra.mxu0 %v876
      %1216 = vmatprep.subr.mxu0 0.0
      %1217 = vmatpush1.msra.mxu0 %v877
      %1218 = vmatprep.subr.mxu0 0.0
      %1219 = vmatpush1.msra.mxu0 %v878
      %1220 = vmatprep.subr.mxu0 0.0
      %1221 = vmatpush1.msra.mxu0 %v879
      %1222 = vmatprep.subr.mxu0 0.0
      %1223 = vmatpush1.msra.mxu0 %v880
      %1224 = vmatprep.subr.mxu0 0.0
      %1225 = vmatpush1.msra.mxu0 %v881
      %1226 = vmatprep.subr.mxu0 0.0
      %1227 = vmatpush1.msra.mxu0 %v882
      %1228 = vmatprep.subr.mxu0 0.0
      %1229 = vmatpush1.msra.mxu0 %v883
      %1230 = vmatprep.subr.mxu0 0.0
      %1231 = vmatpush1.msra.mxu0 %v884
      %1232 = vmatprep.subr.mxu0 0.0
      %1233 = vmatpush1.msra.mxu0 %v885
      %1234 = vmatprep.subr.mxu0 0.0
      %1235 = vmatpush1.msra.mxu0 %v886
      %1236 = vmatprep.subr.mxu0 0.0
      %1237 = vmatpush1.msra.mxu0 %v887
      %1238 = vmatprep.subr.mxu0 0.0
      %1239 = vmatpush1.msra.mxu0 %v888
      %1240 = vmatprep.subr.mxu0 0.0
      %1241 = vmatpush1.msra.mxu0 %v889
      %1242 = vmatprep.subr.mxu0 0.0
      %1243 = vmatpush1.msra.mxu0 %v890
      %1244 = vmatprep.subr.mxu0 0.0
      %1245 = vmatpush1.msra.mxu0 %v891
      %1246 = vmatprep.subr.mxu0 0.0
      %1247 = vmatpush1.msra.mxu0 %v892
      %1248 = vmatprep.subr.mxu0 0.0
      %1249 = vmatpush1.msra.mxu0 %v893
      %1250 = vmatprep.subr.mxu0 0.0
      %1251 = vmatpush1.msra.mxu0 %v894
      %1252 = vmatprep.subr.mxu0 0.0
      %1253 = vmatpush1.msra.mxu0 %v895
      %1254 = vmatprep.subr.mxu0 0.0
      %1255 = vmatpush1.msra.mxu0 %v896
      %1256 = vmatprep.subr.mxu0 0.0
      %1257 = vmatpush1.msra.mxu0 %v897
      %1258 = vmatprep.subr.mxu0 0.0
      %1259 = vmatpush1.msra.mxu0 %v898
      %1260 = vmatprep.subr.mxu0 0.0
      %1261 = vmatpush1.msra.mxu0 %v899
      %1262 = vmatprep.subr.mxu0 0.0
      %1263 = vmatpush1.msra.mxu0 %v900
      %1264 = vmatprep.subr.mxu0 0.0
      %1265 = vmatpush1.msra.mxu0 %v901
      %1266 = vmatprep.subr.mxu0 0.0
      %1267 = vmatpush1.msra.mxu0 %v902
      %1268 = vmatprep.subr.mxu0 0.0
      %1269 = vmatpush1.msra.mxu0 %v903
      %1270 = vmatprep.subr.mxu0 0.0
      %1271 = vmatpush1.msra.mxu0 %v904
      %1272 = vmatprep.subr.mxu0 0.0
      %1273 = vmatpush1.msra.mxu0 %v905
      %1274 = vmatprep.subr.mxu0 0.0
      %1275 = vmatpush1.msra.mxu0 %v906
      %1276 = vmatprep.mubr.f32.mxu0 %v910
      %1277 = vmatmul.mubr.f32.gmra.mrb[0].mxu0 %v909
      %v1278 = vpop.f32.mrb[0].mxu0
      %v1279 = vadd.f32 %v1134, %v1278
      %v1280 = vpop.f32.mrb[0].mxu0
      %1281 = vmatprep.mubr.f32.mxu0 %v914
      %1282 = vmatmul.mubr.f32.gmra.mrb[0].mxu0 %v913
      %v1283 = vpop.f32.mrb[0].mxu0
      %v1284 = vadd.f32 %v1139, %v1283
      %v1285 = vpop.f32.mrb[0].mxu0
      %1286 = vmatprep.mubr.f32.mxu0 %v918
      %1287 = vmatmul.mubr.f32.gmra.mrb[0].mxu0 %v917
      %v1288 = vpop.f32.mrb[0].mxu0
      %v1289 = vadd.f32 %v1144, %v1288
      %v1290 = vpop.f32.mrb[0].mxu0
      %1291 = vmatprep.mubr.f32.mxu0 %v922
      %1292 = vmatmul.mubr.f32.gmra.mrb[0].mxu0 %v921
      %v1293 = vpop.f32.mrb[0].mxu0
      %v1294 = vadd.f32 %v1149, %v1293
      %v1295 = vpop.f32.mrb[0].mxu0
      %1296 = vmatprep.mubr.f32.mxu0 %v926
      %1297 = vmatmul.mubr.f32.gmra.mrb[0].mxu0 %v925
      %v1298 = vpop.f32.mrb[0].mxu0
      %v1299 = vadd.f32 %v1154, %v1298
      %v1300 = vpop.f32.mrb[0].mxu0
      %1301 = vmatprep.mubr.f32.mxu0 %v930
      %1302 = vmatmul.mubr.f32.gmra.mrb[0].mxu0 %v929
      %v1303 = vpop.f32.mrb[0].mxu0
      %v1304 = vadd.f32 %v1159, %v1303
      %v1305 = vpop.f32.mrb[0].mxu0
      %1306 = vmatprep.mubr.f32.mxu0 %v934
      %1307 = vmatmul.mubr.f32.gmra.mrb[0].mxu0 %v933
      %v1308 = vpop.f32.mrb[0].mxu0
      %v1309 = vadd.f32 %v1164, %v1308
      %v1310 = vpop.f32.mrb[0].mxu0
      %1311 = vmatprep.mubr.f32.mxu0 %v938
      %1312 = vmatmul.mubr.f32.gmra.mrb[0].mxu0 %v937
      %v1313 = vpop.f32.mrb[0].mxu0
      %v1314 = vadd.f32 %v1169, %v1313
      %v1315 = vpop.f32.mrb[0].mxu0
      %1316 = vmatprep.mubr.f32.mxu0 %v942
      %1317 = vmatmul.mubr.f32.gmra.mrb[0].mxu0 %v941
      %v1318 = vpop.f32.mrb[0].mxu0
      %v1319 = vadd.f32 %v1174, %v1318
      %v1320 = vpop.f32.mrb[0].mxu0
      %1321 = vmatprep.mubr.f32.mxu0 %v946
      %1322 = vmatmul.mubr.f32.gmra.mrb[0].mxu0 %v945
      %v1323 = vpop.f32.mrb[0].mxu0
      %v1324 = vadd.f32 %v1179, %v1323
      %v1325 = vpop.f32.mrb[0].mxu0
      %1326 = vmatprep.mubr.f32.mxu0 %v950
      %1327 = vmatmul.mubr.f32.gmra.mrb[0].mxu0 %v949
      %v1328 = vpop.f32.mrb[0].mxu0
      %v1329 = vadd.f32 %v1184, %v1328
      %v1330 = vpop.f32.mrb[0].mxu0
      %1331 = vmatprep.mubr.f32.mxu0 %v954
      %1332 = vmatmul.mubr.f32.gmra.mrb[0].mxu0 %v953
      %v1333 = vpop.f32.mrb[0].mxu0
      %v1334 = vadd.f32 %v1189, %v1333
      %v1335 = vpop.f32.mrb[0].mxu0
      %1336 = vmatprep.mubr.f32.mxu0 %v958
      %1337 = vmatmul.mubr.f32.gmra.mrb[0].mxu0 %v957
      %v1338 = vpop.f32.mrb[0].mxu0
      %v1339 = vadd.f32 %v1194, %v1338
      %v1340 = vpop.f32.mrb[0].mxu0
      %1341 = vmatprep.mubr.f32.mxu0 %v962
      %1342 = vmatmul.mubr.f32.gmra.mrb[0].mxu0 %v961
      %v1343 = vpop.f32.mrb[0].mxu0
      %v1344 = vadd.f32 %v1199, %v1343
      %v1345 = vpop.f32.mrb[0].mxu0
      %1346 = vmatprep.mubr.f32.mxu0 %v966
      %1347 = vmatmul.mubr.f32.gmra.mrb[0].mxu0 %v965
      %v1348 = vpop.f32.mrb[0].mxu0
      %v1349 = vadd.f32 %v1204, %v1348
      %v1350 = vpop.f32.mrb[0].mxu0
      %1351 = vmatprep.mubr.f32.mxu0 %v970
      %1352 = vmatmul.mubr.f32.gmra.mrb[0].mxu0 %v969
      %v1353 = vpop.f32.mrb[0].mxu0
      %v1354 = vadd.f32 %v1209, %v1353
      %v1355 = vpop.f32.mrb[0].mxu0
      %1356 = vdwg.mxu0
      %v1357 = vld [vmem:[%s6] sm:$0xff]
      %v1358 = vld [vmem:[%s6 + $0x8] sm:$0xff]
      %v1359 = vld [vmem:[%s6 + $0x10] sm:$0xff]
      %v1360 = vld [vmem:[%s6 + $0x18] sm:$0xff]
      %v1361 = vld [vmem:[%s6 + $0x20] sm:$0xff]
      %v1362 = vld [vmem:[%s6 + $0x28] sm:$0xff]
      %v1363 = vld [vmem:[%s6 + $0x30] sm:$0xff]
      %v1364 = vld [vmem:[%s6 + $0x38] sm:$0xff]
      %v1365 = vld [vmem:[%s6 + $0x40] sm:$0xff]
      %v1366 = vld [vmem:[%s6 + $0x48] sm:$0xff]
      %v1367 = vld [vmem:[%s6 + $0x50] sm:$0xff]
      %v1368 = vld [vmem:[%s6 + $0x58] sm:$0xff]
      %v1369 = vld [vmem:[%s6 + $0x60] sm:$0xff]
      %v1370 = vld [vmem:[%s6 + $0x68] sm:$0xff]
      %v1371 = vld [vmem:[%s6 + $0x70] sm:$0xff]
      %v1372 = vld [vmem:[%s6 + $0x78] sm:$0xff]
      %v1373 = vld [vmem:[%s6 + $0x80] sm:$0xff]
      %v1374 = vld [vmem:[%s6 + $0x88] sm:$0xff]
      %v1375 = vld [vmem:[%s6 + $0x90] sm:$0xff]
      %v1376 = vld [vmem:[%s6 + $0x98] sm:$0xff]
      %v1377 = vld [vmem:[%s6 + $0xa0] sm:$0xff]
      %v1378 = vld [vmem:[%s6 + $0xa8] sm:$0xff]
      %v1379 = vld [vmem:[%s6 + $0xb0] sm:$0xff]
      %v1380 = vld [vmem:[%s6 + $0xb8] sm:$0xff]
      %v1381 = vld [vmem:[%s6 + $0xc0] sm:$0xff]
      %v1382 = vld [vmem:[%s6 + $0xc8] sm:$0xff]
      %v1383 = vld [vmem:[%s6 + $0xd0] sm:$0xff]
      %v1384 = vld [vmem:[%s6 + $0xd8] sm:$0xff]
      %v1385 = vld [vmem:[%s6 + $0xe0] sm:$0xff]
      %v1386 = vld [vmem:[%s6 + $0xe8] sm:$0xff]
      %v1387 = vld [vmem:[%s6 + $0xf0] sm:$0xff]
      %v1388 = vld [vmem:[%s6 + $0xf8] sm:$0xff]
      %v1389 = vld [vmem:[%s7] sm:$0xff]
      %v1390 = vld [vmem:[%s7 + $0x8] sm:$0xff]
      %v1391 = vld [vmem:[%s7 + $0x10] sm:$0xff]
      %v1392 = vld [vmem:[%s7 + $0x18] sm:$0xff]
      %v1393 = vld [vmem:[%s7 + $0x20] sm:$0xff]
      %v1394 = vld [vmem:[%s7 + $0x28] sm:$0xff]
      %v1395 = vld [vmem:[%s7 + $0x30] sm:$0xff]
      %v1396 = vld [vmem:[%s7 + $0x38] sm:$0xff]
      %v1397 = vld [vmem:[%s7 + $0x40] sm:$0xff]
      %v1398 = vld [vmem:[%s7 + $0x48] sm:$0xff]
      %v1399 = vld [vmem:[%s7 + $0x50] sm:$0xff]
      %v1400 = vld [vmem:[%s7 + $0x58] sm:$0xff]
      %v1401 = vld [vmem:[%s7 + $0x60] sm:$0xff]
      %v1402 = vld [vmem:[%s7 + $0x68] sm:$0xff]
      %v1403 = vld [vmem:[%s7 + $0x70] sm:$0xff]
      %v1404 = vld [vmem:[%s7 + $0x78] sm:$0xff]
      %1406 = vset.pattern.permute.xlu0 0
      %1407 = vperm.xlu0 %1406, %v1389
      %v1408 = vpop.permute.xlu0 %1407
      %1411 = vset.pattern.permute.xlu0 0
      %1412 = vperm.xlu0 %1411, %v1390
      %v1413 = vpop.permute.xlu0 %1412
      %1416 = vset.pattern.permute.xlu0 0
      %1417 = vperm.xlu0 %1416, %v1391
      %v1418 = vpop.permute.xlu0 %1417
      %1421 = vset.pattern.permute.xlu0 0
      %1422 = vperm.xlu0 %1421, %v1392
      %v1423 = vpop.permute.xlu0 %1422
      %1426 = vset.pattern.permute.xlu0 0
      %1427 = vperm.xlu0 %1426, %v1393
      %v1428 = vpop.permute.xlu0 %1427
      %1431 = vset.pattern.permute.xlu0 0
      %1432 = vperm.xlu0 %1431, %v1394
      %v1433 = vpop.permute.xlu0 %1432
      %1436 = vset.pattern.permute.xlu0 0
      %1437 = vperm.xlu0 %1436, %v1395
      %v1438 = vpop.permute.xlu0 %1437
      %1441 = vset.pattern.permute.xlu0 0
      %1442 = vperm.xlu0 %1441, %v1396
      %v1443 = vpop.permute.xlu0 %1442
      %1446 = vset.pattern.permute.xlu0 0
      %1447 = vperm.xlu0 %1446, %v1397
      %v1448 = vpop.permute.xlu0 %1447
      %1451 = vset.pattern.permute.xlu0 0
      %1452 = vperm.xlu0 %1451, %v1398
      %v1453 = vpop.permute.xlu0 %1452
      %1456 = vset.pattern.permute.xlu0 0
      %1457 = vperm.xlu0 %1456, %v1399
      %v1458 = vpop.permute.xlu0 %1457
      %1461 = vset.pattern.permute.xlu0 0
      %1462 = vperm.xlu0 %1461, %v1400
      %v1463 = vpop.permute.xlu0 %1462
      %1466 = vset.pattern.permute.xlu0 0
      %1467 = vperm.xlu0 %1466, %v1401
      %v1468 = vpop.permute.xlu0 %1467
      %1471 = vset.pattern.permute.xlu0 0
      %1472 = vperm.xlu0 %1471, %v1402
      %v1473 = vpop.permute.xlu0 %1472
      %1476 = vset.pattern.permute.xlu0 0
      %1477 = vperm.xlu0 %1476, %v1403
      %v1478 = vpop.permute.xlu0 %1477
      %1481 = vset.pattern.permute.xlu0 0
      %1482 = vperm.xlu0 %1481, %v1404
      %v1483 = vpop.permute.xlu0 %1482
      %1485 = vmatprep.subr.mxu0 0.0
      %1486 = vmatpush1.msra.mxu0 %v811
      %1487 = vmatprep.subr.mxu0 0.0
      %1488 = vmatpush1.msra.mxu0 %v812
      %1489 = vmatprep.subr.mxu0 0.0
      %1490 = vmatpush1.msra.mxu0 %v813
      %1491 = vmatprep.subr.mxu0 0.0
      %1492 = vmatpush1.msra.mxu0 %v814
      %1493 = vmatprep.subr.mxu0 0.0
      %1494 = vmatpush1.msra.mxu0 %v815
      %1495 = vmatprep.subr.mxu0 0.0
      %1496 = vmatpush1.msra.mxu0 %v816
      %1497 = vmatprep.subr.mxu0 0.0
      %1498 = vmatpush1.msra.mxu0 %v817
      %1499 = vmatprep.subr.mxu0 0.0
      %1500 = vmatpush1.msra.mxu0 %v818
      %1501 = vmatprep.subr.mxu0 0.0
      %1502 = vmatpush1.msra.mxu0 %v819
      %1503 = vmatprep.subr.mxu0 0.0
      %1504 = vmatpush1.msra.mxu0 %v820
      %1505 = vmatprep.subr.mxu0 0.0
      %1506 = vmatpush1.msra.mxu0 %v821
      %1507 = vmatprep.subr.mxu0 0.0
      %1508 = vmatpush1.msra.mxu0 %v822
      %1509 = vmatprep.subr.mxu0 0.0
      %1510 = vmatpush1.msra.mxu0 %v823
      %1511 = vmatprep.subr.mxu0 0.0
      %1512 = vmatpush1.msra.mxu0 %v824
      %1513 = vmatprep.subr.mxu0 0.0
      %1514 = vmatpush1.msra.mxu0 %v825
      %1515 = vmatprep.subr.mxu0 0.0
      %1516 = vmatpush1.msra.mxu0 %v826
      %1517 = vmatprep.subr.mxu0 0.0
      %1518 = vmatpush1.msra.mxu0 %v827
      %1519 = vmatprep.subr.mxu0 0.0
      %1520 = vmatpush1.msra.mxu0 %v828
      %1521 = vmatprep.subr.mxu0 0.0
      %1522 = vmatpush1.msra.mxu0 %v829
      %1523 = vmatprep.subr.mxu0 0.0
      %1524 = vmatpush1.msra.mxu0 %v830
      %1525 = vmatprep.subr.mxu0 0.0
      %1526 = vmatpush1.msra.mxu0 %v831
      %1527 = vmatprep.subr.mxu0 0.0
      %1528 = vmatpush1.msra.mxu0 %v832
      %1529 = vmatprep.subr.mxu0 0.0
      %1530 = vmatpush1.msra.mxu0 %v833
      %1531 = vmatprep.subr.mxu0 0.0
      %1532 = vmatpush1.msra.mxu0 %v834
      %1533 = vmatprep.subr.mxu0 0.0
      %1534 = vmatpush1.msra.mxu0 %v835
      %1535 = vmatprep.subr.mxu0 0.0
      %1536 = vmatpush1.msra.mxu0 %v836
      %1537 = vmatprep.subr.mxu0 0.0
      %1538 = vmatpush1.msra.mxu0 %v837
      %1539 = vmatprep.subr.mxu0 0.0
      %1540 = vmatpush1.msra.mxu0 %v838
      %1541 = vmatprep.subr.mxu0 0.0
      %1542 = vmatpush1.msra.mxu0 %v839
      %1543 = vmatprep.subr.mxu0 0.0
      %1544 = vmatpush1.msra.mxu0 %v840
      %1545 = vmatprep.subr.mxu0 0.0
      %1546 = vmatpush1.msra.mxu0 %v841
      %1547 = vmatprep.subr.mxu0 0.0
      %1548 = vmatpush1.msra.mxu0 %v842
      %1549 = vmatprep.mubr.f32.mxu0 %v1358
      %1550 = vmatmul.mubr.f32.gmra.mrb[0].mxu0 %v1357
      %v1551 = vpop.f32.mrb[0].mxu0
      %v1552 = vadd.f32 %v1408, %v1551
      %v1553 = vpop.f32.mrb[0].mxu0
      %1554 = vmatprep.mubr.f32.mxu0 %v1360
      %1555 = vmatmul.mubr.f32.gmra.mrb[0].mxu0 %v1359
      %v1556 = vpop.f32.mrb[0].mxu0
      %v1557 = vadd.f32 %v1413, %v1556
      %v1558 = vpop.f32.mrb[0].mxu0
      %1559 = vmatprep.mubr.f32.mxu0 %v1362
      %1560 = vmatmul.mubr.f32.gmra.mrb[0].mxu0 %v1361
      %v1561 = vpop.f32.mrb[0].mxu0
      %v1562 = vadd.f32 %v1418, %v1561
      %v1563 = vpop.f32.mrb[0].mxu0
      %1564 = vmatprep.mubr.f32.mxu0 %v1364
      %1565 = vmatmul.mubr.f32.gmra.mrb[0].mxu0 %v1363
      %v1566 = vpop.f32.mrb[0].mxu0
      %v1567 = vadd.f32 %v1423, %v1566
      %v1568 = vpop.f32.mrb[0].mxu0
      %1569 = vmatprep.mubr.f32.mxu0 %v1366
      %1570 = vmatmul.mubr.f32.gmra.mrb[0].mxu0 %v1365
      %v1571 = vpop.f32.mrb[0].mxu0
      %v1572 = vadd.f32 %v1428, %v1571
      %v1573 = vpop.f32.mrb[0].mxu0
      %1574 = vmatprep.mubr.f32.mxu0 %v1368
      %1575 = vmatmul.mubr.f32.gmra.mrb[0].mxu0 %v1367
      %v1576 = vpop.f32.mrb[0].mxu0
      %v1577 = vadd.f32 %v1433, %v1576
      %v1578 = vpop.f32.mrb[0].mxu0
      %1579 = vmatprep.mubr.f32.mxu0 %v1370
      %1580 = vmatmul.mubr.f32.gmra.mrb[0].mxu0 %v1369
      %v1581 = vpop.f32.mrb[0].mxu0
      %v1582 = vadd.f32 %v1438, %v1581
      %v1583 = vpop.f32.mrb[0].mxu0
      %1584 = vmatprep.mubr.f32.mxu0 %v1372
      %1585 = vmatmul.mubr.f32.gmra.mrb[0].mxu0 %v1371
      %v1586 = vpop.f32.mrb[0].mxu0
      %v1587 = vadd.f32 %v1443, %v1586
      %v1588 = vpop.f32.mrb[0].mxu0
      %1589 = vmatprep.mubr.f32.mxu0 %v1374
      %1590 = vmatmul.mubr.f32.gmra.mrb[0].mxu0 %v1373
      %v1591 = vpop.f32.mrb[0].mxu0
      %v1592 = vadd.f32 %v1448, %v1591
      %v1593 = vpop.f32.mrb[0].mxu0
      %1594 = vmatprep.mubr.f32.mxu0 %v1376
      %1595 = vmatmul.mubr.f32.gmra.mrb[0].mxu0 %v1375
      %v1596 = vpop.f32.mrb[0].mxu0
      %v1597 = vadd.f32 %v1453, %v1596
      %v1598 = vpop.f32.mrb[0].mxu0
      %1599 = vmatprep.mubr.f32.mxu0 %v1378
      %1600 = vmatmul.mubr.f32.gmra.mrb[0].mxu0 %v1377
      %v1601 = vpop.f32.mrb[0].mxu0
      %v1602 = vadd.f32 %v1458, %v1601
      %v1603 = vpop.f32.mrb[0].mxu0
      %1604 = vmatprep.mubr.f32.mxu0 %v1380
      %1605 = vmatmul.mubr.f32.gmra.mrb[0].mxu0 %v1379
      %v1606 = vpop.f32.mrb[0].mxu0
      %v1607 = vadd.f32 %v1463, %v1606
      %v1608 = vpop.f32.mrb[0].mxu0
      %1609 = vmatprep.mubr.f32.mxu0 %v1382
      %1610 = vmatmul.mubr.f32.gmra.mrb[0].mxu0 %v1381
      %v1611 = vpop.f32.mrb[0].mxu0
      %v1612 = vadd.f32 %v1468, %v1611
      %v1613 = vpop.f32.mrb[0].mxu0
      %1614 = vmatprep.mubr.f32.mxu0 %v1384
      %1615 = vmatmul.mubr.f32.gmra.mrb[0].mxu0 %v1383
      %v1616 = vpop.f32.mrb[0].mxu0
      %v1617 = vadd.f32 %v1473, %v1616
      %v1618 = vpop.f32.mrb[0].mxu0
      %1619 = vmatprep.mubr.f32.mxu0 %v1386
      %1620 = vmatmul.mubr.f32.gmra.mrb[0].mxu0 %v1385
      %v1621 = vpop.f32.mrb[0].mxu0
      %v1622 = vadd.f32 %v1478, %v1621
      %v1623 = vpop.f32.mrb[0].mxu0
      %1624 = vmatprep.mubr.f32.mxu0 %v1388
      %1625 = vmatmul.mubr.f32.gmra.mrb[0].mxu0 %v1387
      %v1626 = vpop.f32.mrb[0].mxu0
      %v1627 = vadd.f32 %v1483, %v1626
      %v1628 = vpop.f32.mrb[0].mxu0
      %1629 = vdwg.mxu0
      %v1630 = vld [vmem:[%s8] sm:$0xff]
      %v1631 = vld [vmem:[%s8 + $0x8] sm:$0xff]
      %vm1632 = vcmask 130048
      %v1634 = vsel %vm1632, %v1279, 0
      %v1637 = vsel %vm1632, %v1284, 0
      %v1640 = vsel %vm1632, %v1289, 0
      %v1643 = vsel %vm1632, %v1294, 0
      %v1646 = vsel %vm1632, %v1299, 0
      %v1649 = vsel %vm1632, %v1304, 0
      %v1652 = vsel %vm1632, %v1309, 0
      %v1655 = vsel %vm1632, %v1314, 0
      %v1658 = vsel %vm1632, %v1319, 0
      %v1661 = vsel %vm1632, %v1324, 0
      %v1664 = vsel %vm1632, %v1329, 0
      %v1667 = vsel %vm1632, %v1334, 0
      %v1670 = vsel %vm1632, %v1339, 0
      %v1673 = vsel %vm1632, %v1344, 0
      %v1676 = vsel %vm1632, %v1349, 0
      %v1679 = vsel %vm1632, %v1354, 0
      %1681 = vmatprep.subr.mxu0 0.0
      %1682 = vmatpush1.msra.mxu0 %v1630
      %1683 = vmatprep.subr.mxu0 0.0
      %1684 = vmatpush1.msra.mxu0 %v1631
      %1685 = vmatprep.subr.mxu0 0.0
      %1686 = vmatpush1.msra.mxu0 0.0
      %1687 = vmatprep.subr.mxu0 0.0
      %1688 = vmatpush1.msra.mxu0 0.0
      %1689 = vmatprep.subr.mxu0 0.0
      %1690 = vmatpush1.msra.mxu0 0.0
      %1691 = vmatprep.subr.mxu0 0.0
      %1692 = vmatpush1.msra.mxu0 0.0
      %1693 = vmatprep.subr.mxu0 0.0
      %1694 = vmatpush1.msra.mxu0 0.0
      %1695 = vmatprep.subr.mxu0 0.0
      %1696 = vmatpush1.msra.mxu0 0.0
      %1697 = vmatprep.subr.mxu0 0.0
      %1698 = vmatpush1.msra.mxu0 0.0
      %1699 = vmatprep.subr.mxu0 0.0
      %1700 = vmatpush1.msra.mxu0 0.0
      %1701 = vmatprep.subr.mxu0 0.0
      %1702 = vmatpush1.msra.mxu0 0.0
      %1703 = vmatprep.subr.mxu0 0.0
      %1704 = vmatpush1.msra.mxu0 0.0
      %1705 = vmatprep.subr.mxu0 0.0
      %1706 = vmatpush1.msra.mxu0 0.0
      %1707 = vmatprep.subr.mxu0 0.0
      %1708 = vmatpush1.msra.mxu0 0.0
      %1709 = vmatprep.subr.mxu0 0.0
      %1710 = vmatpush1.msra.mxu0 0.0
      %1711 = vmatprep.subr.mxu0 0.0
      %1712 = vmatpush1.msra.mxu0 0.0
      %1713 = vmatprep.subr.mxu0 0.0
      %1714 = vmatpush1.msra.mxu0 0.0
      %1715 = vmatprep.subr.mxu0 0.0
      %1716 = vmatpush1.msra.mxu0 0.0
      %1717 = vmatprep.subr.mxu0 0.0
      %1718 = vmatpush1.msra.mxu0 0.0
      %1719 = vmatprep.subr.mxu0 0.0
      %1720 = vmatpush1.msra.mxu0 0.0
      %1721 = vmatprep.subr.mxu0 0.0
      %1722 = vmatpush1.msra.mxu0 0.0
      %1723 = vmatprep.subr.mxu0 0.0
      %1724 = vmatpush1.msra.mxu0 0.0
      %1725 = vmatprep.subr.mxu0 0.0
      %1726 = vmatpush1.msra.mxu0 0.0
      %1727 = vmatprep.subr.mxu0 0.0
      %1728 = vmatpush1.msra.mxu0 0.0
      %1729 = vmatprep.subr.mxu0 0.0
      %1730 = vmatpush1.msra.mxu0 0.0
      %1731 = vmatprep.subr.mxu0 0.0
      %1732 = vmatpush1.msra.mxu0 0.0
      %1733 = vmatprep.subr.mxu0 0.0
      %1734 = vmatpush1.msra.mxu0 0.0
      %1735 = vmatprep.subr.mxu0 0.0
      %1736 = vmatpush1.msra.mxu0 0.0
      %1737 = vmatprep.subr.mxu0 0.0
      %1738 = vmatpush1.msra.mxu0 0.0
      %1739 = vmatprep.subr.mxu0 0.0
      %1740 = vmatpush1.msra.mxu0 0.0
      %1741 = vmatprep.subr.mxu0 0.0
      %1742 = vmatpush1.msra.mxu0 0.0
      %1743 = vmatprep.subr.mxu0 0.0
      %1744 = vmatpush1.msra.mxu0 0.0
      %1745 = vmatprep.mubr.f32.mxu0 0.0
      %1746 = vmatmul.mubr.f32.gmra.mrb[0].mxu0 %v1634
      %v1747 = vpop.f32.mrb[0].mxu0
      %v1748 = vadd.f32 %v1552, %v1747
      %v1749 = vpop.f32.mrb[0].mxu0
      %1750 = vmatprep.mubr.f32.mxu0 0.0
      %1751 = vmatmul.mubr.f32.gmra.mrb[0].mxu0 %v1637
      %v1752 = vpop.f32.mrb[0].mxu0
      %v1753 = vadd.f32 %v1557, %v1752
      %v1754 = vpop.f32.mrb[0].mxu0
      %1755 = vmatprep.mubr.f32.mxu0 0.0
      %1756 = vmatmul.mubr.f32.gmra.mrb[0].mxu0 %v1640
      %v1757 = vpop.f32.mrb[0].mxu0
      %v1758 = vadd.f32 %v1562, %v1757
      %v1759 = vpop.f32.mrb[0].mxu0
      %1760 = vmatprep.mubr.f32.mxu0 0.0
      %1761 = vmatmul.mubr.f32.gmra.mrb[0].mxu0 %v1643
      %v1762 = vpop.f32.mrb[0].mxu0
      %v1763 = vadd.f32 %v1567, %v1762
      %v1764 = vpop.f32.mrb[0].mxu0
      %1765 = vmatprep.mubr.f32.mxu0 0.0
      %1766 = vmatmul.mubr.f32.gmra.mrb[0].mxu0 %v1646
      %v1767 = vpop.f32.mrb[0].mxu0
      %v1768 = vadd.f32 %v1572, %v1767
      %v1769 = vpop.f32.mrb[0].mxu0
      %1770 = vmatprep.mubr.f32.mxu0 0.0
      %1771 = vmatmul.mubr.f32.gmra.mrb[0].mxu0 %v1649
      %v1772 = vpop.f32.mrb[0].mxu0
      %v1773 = vadd.f32 %v1577, %v1772
      %v1774 = vpop.f32.mrb[0].mxu0
      %1775 = vmatprep.mubr.f32.mxu0 0.0
      %1776 = vmatmul.mubr.f32.gmra.mrb[0].mxu0 %v1652
      %v1777 = vpop.f32.mrb[0].mxu0
      %v1778 = vadd.f32 %v1582, %v1777
      %v1779 = vpop.f32.mrb[0].mxu0
      %1780 = vmatprep.mubr.f32.mxu0 0.0
      %1781 = vmatmul.mubr.f32.gmra.mrb[0].mxu0 %v1655
      %v1782 = vpop.f32.mrb[0].mxu0
      %v1783 = vadd.f32 %v1587, %v1782
      %v1784 = vpop.f32.mrb[0].mxu0
      %1785 = vmatprep.mubr.f32.mxu0 0.0
      %1786 = vmatmul.mubr.f32.gmra.mrb[0].mxu0 %v1658
      %v1787 = vpop.f32.mrb[0].mxu0
      %v1788 = vadd.f32 %v1592, %v1787
      %v1789 = vpop.f32.mrb[0].mxu0
      %1790 = vmatprep.mubr.f32.mxu0 0.0
      %1791 = vmatmul.mubr.f32.gmra.mrb[0].mxu0 %v1661
      %v1792 = vpop.f32.mrb[0].mxu0
      %v1793 = vadd.f32 %v1597, %v1792
      %v1794 = vpop.f32.mrb[0].mxu0
      %1795 = vmatprep.mubr.f32.mxu0 0.0
      %1796 = vmatmul.mubr.f32.gmra.mrb[0].mxu0 %v1664
      %v1797 = vpop.f32.mrb[0].mxu0
      %v1798 = vadd.f32 %v1602, %v1797
      %v1799 = vpop.f32.mrb[0].mxu0
      %1800 = vmatprep.mubr.f32.mxu0 0.0
      %1801 = vmatmul.mubr.f32.gmra.mrb[0].mxu0 %v1667
      %v1802 = vpop.f32.mrb[0].mxu0
      %v1803 = vadd.f32 %v1607, %v1802
      %v1804 = vpop.f32.mrb[0].mxu0
      %1805 = vmatprep.mubr.f32.mxu0 0.0
      %1806 = vmatmul.mubr.f32.gmra.mrb[0].mxu0 %v1670
      %v1807 = vpop.f32.mrb[0].mxu0
      %v1808 = vadd.f32 %v1612, %v1807
      %v1809 = vpop.f32.mrb[0].mxu0
      %1810 = vmatprep.mubr.f32.mxu0 0.0
      %1811 = vmatmul.mubr.f32.gmra.mrb[0].mxu0 %v1673
      %v1812 = vpop.f32.mrb[0].mxu0
      %v1813 = vadd.f32 %v1617, %v1812
      %v1814 = vpop.f32.mrb[0].mxu0
      %1815 = vmatprep.mubr.f32.mxu0 0.0
      %1816 = vmatmul.mubr.f32.gmra.mrb[0].mxu0 %v1676
      %v1817 = vpop.f32.mrb[0].mxu0
      %v1818 = vadd.f32 %v1622, %v1817
      %v1819 = vpop.f32.mrb[0].mxu0
      %1820 = vmatprep.mubr.f32.mxu0 0.0
      %1821 = vmatmul.mubr.f32.gmra.mrb[0].mxu0 %v1679
      %v1822 = vpop.f32.mrb[0].mxu0
      %v1823 = vadd.f32 %v1627, %v1822
      %v1824 = vpop.f32.mrb[0].mxu0
      %1825 = vdwg.mxu0
      %v1826 = vld [vmem:[%s9] sm:$0xf]
      %v1827 = vld [vmem:[%s11] sm:$0x1]
      %v1828 = vld [vmem:[%s10] sm:$0xff]
      %v1829 = vld [vmem:[%s10 + $0x8] sm:$0xff]
      %v1830 = vld [vmem:[%s10 + $0x10] sm:$0xff]
      %v1831 = vld [vmem:[%s10 + $0x18] sm:$0xff]
      %v1832 = vld [vmem:[%s10 + $0x20] sm:$0xff]
      %v1833 = vld [vmem:[%s10 + $0x28] sm:$0xff]
      %v1834 = vld [vmem:[%s10 + $0x30] sm:$0xff]
      %v1835 = vld [vmem:[%s10 + $0x38] sm:$0xff]
      %v1836 = vld [vmem:[%s10 + $0x40] sm:$0xff]
      %v1837 = vld [vmem:[%s10 + $0x48] sm:$0xff]
      %v1838 = vld [vmem:[%s10 + $0x50] sm:$0xff]
      %v1839 = vld [vmem:[%s10 + $0x58] sm:$0xff]
      %v1840 = vld [vmem:[%s10 + $0x60] sm:$0xff]
      %v1841 = vld [vmem:[%s10 + $0x68] sm:$0xff]
      %v1842 = vld [vmem:[%s10 + $0x70] sm:$0xff]
      %v1843 = vld [vmem:[%s10 + $0x78] sm:$0xff]
      %v1844 = vlaneseq
      %v1845 = vshrl.u32 %v1844, 7
      %v1846 = vsub.s32 0, %v1845
      %v1847 = vrot.slane %v1826, %v1846
      %v1848 = vmul.f32 %v1279, %v1847
      %v1849 = vmul.f32 %v1284, %v1847
      %v1850 = vmul.f32 %v1289, %v1847
      %v1851 = vmul.f32 %v1294, %v1847
      %v1852 = vmul.f32 %v1299, %v1847
      %v1853 = vmul.f32 %v1304, %v1847
      %v1854 = vmul.f32 %v1309, %v1847
      %v1855 = vmul.f32 %v1314, %v1847
      %v1856 = vmul.f32 %v1319, %v1847
      %v1857 = vmul.f32 %v1324, %v1847
      %v1858 = vmul.f32 %v1329, %v1847
      %v1859 = vmul.f32 %v1334, %v1847
      %v1860 = vmul.f32 %v1339, %v1847
      %v1861 = vmul.f32 %v1344, %v1847
      %v1862 = vmul.f32 %v1349, %v1847
      %v1863 = vmul.f32 %v1354, %v1847
      %v1864 = vsel %vm1632, %v1848, 0.0
      %1865 = vadd.xlane.f32.xlu0 %v1864
      %v1866 = vpop.xlane.xlu0 %1865
      %v1867 = vsel %vm1632, %v1849, 0.0
      %1868 = vadd.xlane.f32.xlu0 %v1867
      %v1869 = vpop.xlane.xlu0 %1868
      %v1870 = vsel %vm1632, %v1850, 0.0
      %1871 = vadd.xlane.f32.xlu0 %v1870
      %v1872 = vpop.xlane.xlu0 %1871
      %v1873 = vsel %vm1632, %v1851, 0.0
      %1874 = vadd.xlane.f32.xlu0 %v1873
      %v1875 = vpop.xlane.xlu0 %1874
      %v1876 = vsel %vm1632, %v1852, 0.0
      %1877 = vadd.xlane.f32.xlu0 %v1876
      %v1878 = vpop.xlane.xlu0 %1877
      %v1879 = vsel %vm1632, %v1853, 0.0
      %1880 = vadd.xlane.f32.xlu0 %v1879
      %v1881 = vpop.xlane.xlu0 %1880
      %v1882 = vsel %vm1632, %v1854, 0.0
      %1883 = vadd.xlane.f32.xlu0 %v1882
      %v1884 = vpop.xlane.xlu0 %1883
      %v1885 = vsel %vm1632, %v1855, 0.0
      %1886 = vadd.xlane.f32.xlu0 %v1885
      %v1887 = vpop.xlane.xlu0 %1886
      %v1888 = vsel %vm1632, %v1856, 0.0
      %1889 = vadd.xlane.f32.xlu0 %v1888
      %v1890 = vpop.xlane.xlu0 %1889
      %v1891 = vsel %vm1632, %v1857, 0.0
      %1892 = vadd.xlane.f32.xlu0 %v1891
      %v1893 = vpop.xlane.xlu0 %1892
      %v1894 = vsel %vm1632, %v1858, 0.0
      %1895 = vadd.xlane.f32.xlu0 %v1894
      %v1896 = vpop.xlane.xlu0 %1895
      %v1897 = vsel %vm1632, %v1859, 0.0
      %1898 = vadd.xlane.f32.xlu0 %v1897
      %v1899 = vpop.xlane.xlu0 %1898
      %v1900 = vsel %vm1632, %v1860, 0.0
      %1901 = vadd.xlane.f32.xlu0 %v1900
      %v1902 = vpop.xlane.xlu0 %1901
      %v1903 = vsel %vm1632, %v1861, 0.0
      %1904 = vadd.xlane.f32.xlu0 %v1903
      %v1905 = vpop.xlane.xlu0 %1904
      %v1906 = vsel %vm1632, %v1862, 0.0
      %1907 = vadd.xlane.f32.xlu0 %v1906
      %v1908 = vpop.xlane.xlu0 %1907
      %v1909 = vsel %vm1632, %v1863, 0.0
      %1910 = vadd.xlane.f32.xlu0 %v1909
      %v1911 = vpop.xlane.xlu0 %1910
      %v1912 = vmul.f32 %v1866, %v1828
      %v1913 = vmul.f32 %v1869, %v1829
      %v1914 = vmul.f32 %v1872, %v1830
      %v1915 = vmul.f32 %v1875, %v1831
      %v1916 = vmul.f32 %v1878, %v1832
      %v1917 = vmul.f32 %v1881, %v1833
      %v1918 = vmul.f32 %v1884, %v1834
      %v1919 = vmul.f32 %v1887, %v1835
      %v1920 = vmul.f32 %v1890, %v1836
      %v1921 = vmul.f32 %v1893, %v1837
      %v1922 = vmul.f32 %v1896, %v1838
      %v1923 = vmul.f32 %v1899, %v1839
      %v1924 = vmul.f32 %v1902, %v1840
      %v1925 = vmul.f32 %v1905, %v1841
      %v1926 = vmul.f32 %v1908, %v1842
      %v1927 = vmul.f32 %v1911, %v1843
      %v1928 = vadd.f32 %v1912, %v1913
      %v1929 = vadd.f32 %v1928, %v1914
      %v1930 = vadd.f32 %v1929, %v1915
      %v1931 = vadd.f32 %v1930, %v1916
      %v1932 = vadd.f32 %v1931, %v1917
      %v1933 = vadd.f32 %v1932, %v1918
      %v1934 = vadd.f32 %v1933, %v1919
      %v1935 = vadd.f32 %v1934, %v1920
      %v1936 = vadd.f32 %v1935, %v1921
      %v1937 = vadd.f32 %v1936, %v1922
      %v1938 = vadd.f32 %v1937, %v1923
      %v1939 = vadd.f32 %v1938, %v1924
      %v1940 = vadd.f32 %v1939, %v1925
      %v1941 = vadd.f32 %v1940, %v1926
      %v1942 = vadd.f32 %v1941, %v1927
      %v1943 = vrot.slane %v1942, 4
      %v1944 = vadd.f32 %v1942, %v1943
      %v1945 = vrot.slane %v1944, 2
      %v1946 = vadd.f32 %v1944, %v1945
      %v1947 = vrot.slane %v1946, 1
      %v1948 = vadd.f32 %v1946, %v1947
      %v1949 = vadd.f32 %v1827, %v1948
      %s1950 = scalar_lea.vmem %s10, 128
      %v1951 = vld [vmem:[%s1950] sm:$0xff]
      %v1952 = vld [vmem:[%s1950 + $0x8] sm:$0xff]
      %v1953 = vld [vmem:[%s1950 + $0x10] sm:$0xff]
      %v1954 = vld [vmem:[%s1950 + $0x18] sm:$0xff]
      %v1955 = vld [vmem:[%s1950 + $0x20] sm:$0xff]
      %v1956 = vld [vmem:[%s1950 + $0x28] sm:$0xff]
      %v1957 = vld [vmem:[%s1950 + $0x30] sm:$0xff]
      %v1958 = vld [vmem:[%s1950 + $0x38] sm:$0xff]
      %v1959 = vld [vmem:[%s1950 + $0x40] sm:$0xff]
      %v1960 = vld [vmem:[%s1950 + $0x48] sm:$0xff]
      %v1961 = vld [vmem:[%s1950 + $0x50] sm:$0xff]
      %v1962 = vld [vmem:[%s1950 + $0x58] sm:$0xff]
      %v1963 = vld [vmem:[%s1950 + $0x60] sm:$0xff]
      %v1964 = vld [vmem:[%s1950 + $0x68] sm:$0xff]
      %v1965 = vld [vmem:[%s1950 + $0x70] sm:$0xff]
      %v1966 = vld [vmem:[%s1950 + $0x78] sm:$0xff]
      %v1967 = vlaneseq
      %v1968 = vshrl.u32 %v1967, 7
      %v1969 = vsub.s32 1, %v1968
      %v1970 = vrot.slane %v1826, %v1969
      %v1971 = vmul.f32 %v1279, %v1970
      %v1972 = vmul.f32 %v1284, %v1970
      %v1973 = vmul.f32 %v1289, %v1970
      %v1974 = vmul.f32 %v1294, %v1970
      %v1975 = vmul.f32 %v1299, %v1970
      %v1976 = vmul.f32 %v1304, %v1970
      %v1977 = vmul.f32 %v1309, %v1970
      %v1978 = vmul.f32 %v1314, %v1970
      %v1979 = vmul.f32 %v1319, %v1970
      %v1980 = vmul.f32 %v1324, %v1970
      %v1981 = vmul.f32 %v1329, %v1970
      %v1982 = vmul.f32 %v1334, %v1970
      %v1983 = vmul.f32 %v1339, %v1970
      %v1984 = vmul.f32 %v1344, %v1970
      %v1985 = vmul.f32 %v1349, %v1970
      %v1986 = vmul.f32 %v1354, %v1970
      %v1987 = vsel %vm1632, %v1971, 0.0
      %1988 = vadd.xlane.f32.xlu0 %v1987
      %v1989 = vpop.xlane.xlu0 %1988
      %v1990 = vsel %vm1632, %v1972, 0.0
      %1991 = vadd.xlane.f32.xlu0 %v1990
      %v1992 = vpop.xlane.xlu0 %1991
      %v1993 = vsel %vm1632, %v1973, 0.0
      %1994 = vadd.xlane.f32.xlu0 %v1993
      %v1995 = vpop.xlane.xlu0 %1994
      %v1996 = vsel %vm1632, %v1974, 0.0
      %1997 = vadd.xlane.f32.xlu0 %v1996
      %v1998 = vpop.xlane.xlu0 %1997
      %v1999 = vsel %vm1632, %v1975, 0.0
      %2000 = vadd.xlane.f32.xlu0 %v1999
      %v2001 = vpop.xlane.xlu0 %2000
      %v2002 = vsel %vm1632, %v1976, 0.0
      %2003 = vadd.xlane.f32.xlu0 %v2002
      %v2004 = vpop.xlane.xlu0 %2003
      %v2005 = vsel %vm1632, %v1977, 0.0
      %2006 = vadd.xlane.f32.xlu0 %v2005
      %v2007 = vpop.xlane.xlu0 %2006
      %v2008 = vsel %vm1632, %v1978, 0.0
      %2009 = vadd.xlane.f32.xlu0 %v2008
      %v2010 = vpop.xlane.xlu0 %2009
      %v2011 = vsel %vm1632, %v1979, 0.0
      %2012 = vadd.xlane.f32.xlu0 %v2011
      %v2013 = vpop.xlane.xlu0 %2012
      %v2014 = vsel %vm1632, %v1980, 0.0
      %2015 = vadd.xlane.f32.xlu0 %v2014
      %v2016 = vpop.xlane.xlu0 %2015
      %v2017 = vsel %vm1632, %v1981, 0.0
      %2018 = vadd.xlane.f32.xlu0 %v2017
      %v2019 = vpop.xlane.xlu0 %2018
      %v2020 = vsel %vm1632, %v1982, 0.0
      %2021 = vadd.xlane.f32.xlu0 %v2020
      %v2022 = vpop.xlane.xlu0 %2021
      %v2023 = vsel %vm1632, %v1983, 0.0
      %2024 = vadd.xlane.f32.xlu0 %v2023
      %v2025 = vpop.xlane.xlu0 %2024
      %v2026 = vsel %vm1632, %v1984, 0.0
      %2027 = vadd.xlane.f32.xlu0 %v2026
      %v2028 = vpop.xlane.xlu0 %2027
      %v2029 = vsel %vm1632, %v1985, 0.0
      %2030 = vadd.xlane.f32.xlu0 %v2029
      %v2031 = vpop.xlane.xlu0 %2030
      %v2032 = vsel %vm1632, %v1986, 0.0
      %2033 = vadd.xlane.f32.xlu0 %v2032
      %v2034 = vpop.xlane.xlu0 %2033
      %v2035 = vmul.f32 %v1989, %v1951
      %v2036 = vmul.f32 %v1992, %v1952
      %v2037 = vmul.f32 %v1995, %v1953
      %v2038 = vmul.f32 %v1998, %v1954
      %v2039 = vmul.f32 %v2001, %v1955
      %v2040 = vmul.f32 %v2004, %v1956
      %v2041 = vmul.f32 %v2007, %v1957
      %v2042 = vmul.f32 %v2010, %v1958
      %v2043 = vmul.f32 %v2013, %v1959
      %v2044 = vmul.f32 %v2016, %v1960
      %v2045 = vmul.f32 %v2019, %v1961
      %v2046 = vmul.f32 %v2022, %v1962
      %v2047 = vmul.f32 %v2025, %v1963
      %v2048 = vmul.f32 %v2028, %v1964
      %v2049 = vmul.f32 %v2031, %v1965
      %v2050 = vmul.f32 %v2034, %v1966
      %v2051 = vadd.f32 %v2035, %v2036
      %v2052 = vadd.f32 %v2051, %v2037
      %v2053 = vadd.f32 %v2052, %v2038
      %v2054 = vadd.f32 %v2053, %v2039
      %v2055 = vadd.f32 %v2054, %v2040
      %v2056 = vadd.f32 %v2055, %v2041
      %v2057 = vadd.f32 %v2056, %v2042
      %v2058 = vadd.f32 %v2057, %v2043
      %v2059 = vadd.f32 %v2058, %v2044
      %v2060 = vadd.f32 %v2059, %v2045
      %v2061 = vadd.f32 %v2060, %v2046
      %v2062 = vadd.f32 %v2061, %v2047
      %v2063 = vadd.f32 %v2062, %v2048
      %v2064 = vadd.f32 %v2063, %v2049
      %v2065 = vadd.f32 %v2064, %v2050
      %v2066 = vrot.slane %v2065, 4
      %v2067 = vadd.f32 %v2065, %v2066
      %v2068 = vrot.slane %v2067, 2
      %v2069 = vadd.f32 %v2067, %v2068
      %v2070 = vrot.slane %v2069, 1
      %v2071 = vadd.f32 %v2069, %v2070
      %v2072 = vadd.f32 %v1949, %v2071
      %s2073 = scalar_lea.vmem %s10, 256
      %v2074 = vld [vmem:[%s2073] sm:$0xff]
      %v2075 = vld [vmem:[%s2073 + $0x8] sm:$0xff]
      %v2076 = vld [vmem:[%s2073 + $0x10] sm:$0xff]
      %v2077 = vld [vmem:[%s2073 + $0x18] sm:$0xff]
      %v2078 = vld [vmem:[%s2073 + $0x20] sm:$0xff]
      %v2079 = vld [vmem:[%s2073 + $0x28] sm:$0xff]
      %v2080 = vld [vmem:[%s2073 + $0x30] sm:$0xff]
      %v2081 = vld [vmem:[%s2073 + $0x38] sm:$0xff]
      %v2082 = vld [vmem:[%s2073 + $0x40] sm:$0xff]
      %v2083 = vld [vmem:[%s2073 + $0x48] sm:$0xff]
      %v2084 = vld [vmem:[%s2073 + $0x50] sm:$0xff]
      %v2085 = vld [vmem:[%s2073 + $0x58] sm:$0xff]
      %v2086 = vld [vmem:[%s2073 + $0x60] sm:$0xff]
      %v2087 = vld [vmem:[%s2073 + $0x68] sm:$0xff]
      %v2088 = vld [vmem:[%s2073 + $0x70] sm:$0xff]
      %v2089 = vld [vmem:[%s2073 + $0x78] sm:$0xff]
      %v2090 = vlaneseq
      %v2091 = vshrl.u32 %v2090, 7
      %v2092 = vsub.s32 2, %v2091
      %v2093 = vrot.slane %v1826, %v2092
      %v2094 = vmul.f32 %v1279, %v2093
      %v2095 = vmul.f32 %v1284, %v2093
      %v2096 = vmul.f32 %v1289, %v2093
      %v2097 = vmul.f32 %v1294, %v2093
      %v2098 = vmul.f32 %v1299, %v2093
      %v2099 = vmul.f32 %v1304, %v2093
      %v2100 = vmul.f32 %v1309, %v2093
      %v2101 = vmul.f32 %v1314, %v2093
      %v2102 = vmul.f32 %v1319, %v2093
      %v2103 = vmul.f32 %v1324, %v2093
      %v2104 = vmul.f32 %v1329, %v2093
      %v2105 = vmul.f32 %v1334, %v2093
      %v2106 = vmul.f32 %v1339, %v2093
      %v2107 = vmul.f32 %v1344, %v2093
      %v2108 = vmul.f32 %v1349, %v2093
      %v2109 = vmul.f32 %v1354, %v2093
      %v2110 = vsel %vm1632, %v2094, 0.0
      %2111 = vadd.xlane.f32.xlu0 %v2110
      %v2112 = vpop.xlane.xlu0 %2111
      %v2113 = vsel %vm1632, %v2095, 0.0
      %2114 = vadd.xlane.f32.xlu0 %v2113
      %v2115 = vpop.xlane.xlu0 %2114
      %v2116 = vsel %vm1632, %v2096, 0.0
      %2117 = vadd.xlane.f32.xlu0 %v2116
      %v2118 = vpop.xlane.xlu0 %2117
      %v2119 = vsel %vm1632, %v2097, 0.0
      %2120 = vadd.xlane.f32.xlu0 %v2119
      %v2121 = vpop.xlane.xlu0 %2120
      %v2122 = vsel %vm1632, %v2098, 0.0
      %2123 = vadd.xlane.f32.xlu0 %v2122
      %v2124 = vpop.xlane.xlu0 %2123
      %v2125 = vsel %vm1632, %v2099, 0.0
      %2126 = vadd.xlane.f32.xlu0 %v2125
      %v2127 = vpop.xlane.xlu0 %2126
      %v2128 = vsel %vm1632, %v2100, 0.0
      %2129 = vadd.xlane.f32.xlu0 %v2128
      %v2130 = vpop.xlane.xlu0 %2129
      %v2131 = vsel %vm1632, %v2101, 0.0
      %2132 = vadd.xlane.f32.xlu0 %v2131
      %v2133 = vpop.xlane.xlu0 %2132
      %v2134 = vsel %vm1632, %v2102, 0.0
      %2135 = vadd.xlane.f32.xlu0 %v2134
      %v2136 = vpop.xlane.xlu0 %2135
      %v2137 = vsel %vm1632, %v2103, 0.0
      %2138 = vadd.xlane.f32.xlu0 %v2137
      %v2139 = vpop.xlane.xlu0 %2138
      %v2140 = vsel %vm1632, %v2104, 0.0
      %2141 = vadd.xlane.f32.xlu0 %v2140
      %v2142 = vpop.xlane.xlu0 %2141
      %v2143 = vsel %vm1632, %v2105, 0.0
      %2144 = vadd.xlane.f32.xlu0 %v2143
      %v2145 = vpop.xlane.xlu0 %2144
      %v2146 = vsel %vm1632, %v2106, 0.0
      %2147 = vadd.xlane.f32.xlu0 %v2146
      %v2148 = vpop.xlane.xlu0 %2147
      %v2149 = vsel %vm1632, %v2107, 0.0
      %2150 = vadd.xlane.f32.xlu0 %v2149
      %v2151 = vpop.xlane.xlu0 %2150
      %v2152 = vsel %vm1632, %v2108, 0.0
      %2153 = vadd.xlane.f32.xlu0 %v2152
      %v2154 = vpop.xlane.xlu0 %2153
      %v2155 = vsel %vm1632, %v2109, 0.0
      %2156 = vadd.xlane.f32.xlu0 %v2155
      %v2157 = vpop.xlane.xlu0 %2156
      %v2158 = vmul.f32 %v2112, %v2074
      %v2159 = vmul.f32 %v2115, %v2075
      %v2160 = vmul.f32 %v2118, %v2076
      %v2161 = vmul.f32 %v2121, %v2077
      %v2162 = vmul.f32 %v2124, %v2078
      %v2163 = vmul.f32 %v2127, %v2079
      %v2164 = vmul.f32 %v2130, %v2080
      %v2165 = vmul.f32 %v2133, %v2081
      %v2166 = vmul.f32 %v2136, %v2082
      %v2167 = vmul.f32 %v2139, %v2083
      %v2168 = vmul.f32 %v2142, %v2084
      %v2169 = vmul.f32 %v2145, %v2085
      %v2170 = vmul.f32 %v2148, %v2086
      %v2171 = vmul.f32 %v2151, %v2087
      %v2172 = vmul.f32 %v2154, %v2088
      %v2173 = vmul.f32 %v2157, %v2089
      %v2174 = vadd.f32 %v2158, %v2159
      %v2175 = vadd.f32 %v2174, %v2160
      %v2176 = vadd.f32 %v2175, %v2161
      %v2177 = vadd.f32 %v2176, %v2162
      %v2178 = vadd.f32 %v2177, %v2163
      %v2179 = vadd.f32 %v2178, %v2164
      %v2180 = vadd.f32 %v2179, %v2165
      %v2181 = vadd.f32 %v2180, %v2166
      %v2182 = vadd.f32 %v2181, %v2167
      %v2183 = vadd.f32 %v2182, %v2168
      %v2184 = vadd.f32 %v2183, %v2169
      %v2185 = vadd.f32 %v2184, %v2170
      %v2186 = vadd.f32 %v2185, %v2171
      %v2187 = vadd.f32 %v2186, %v2172
      %v2188 = vadd.f32 %v2187, %v2173
      %v2189 = vrot.slane %v2188, 4
      %v2190 = vadd.f32 %v2188, %v2189
      %v2191 = vrot.slane %v2190, 2
      %v2192 = vadd.f32 %v2190, %v2191
      %v2193 = vrot.slane %v2192, 1
      %v2194 = vadd.f32 %v2192, %v2193
      %v2195 = vadd.f32 %v2072, %v2194
      %s2196 = scalar_lea.vmem %s10, 384
      %v2197 = vld [vmem:[%s2196] sm:$0xff]
      %v2198 = vld [vmem:[%s2196 + $0x8] sm:$0xff]
      %v2199 = vld [vmem:[%s2196 + $0x10] sm:$0xff]
      %v2200 = vld [vmem:[%s2196 + $0x18] sm:$0xff]
      %v2201 = vld [vmem:[%s2196 + $0x20] sm:$0xff]
      %v2202 = vld [vmem:[%s2196 + $0x28] sm:$0xff]
      %v2203 = vld [vmem:[%s2196 + $0x30] sm:$0xff]
      %v2204 = vld [vmem:[%s2196 + $0x38] sm:$0xff]
      %v2205 = vld [vmem:[%s2196 + $0x40] sm:$0xff]
      %v2206 = vld [vmem:[%s2196 + $0x48] sm:$0xff]
      %v2207 = vld [vmem:[%s2196 + $0x50] sm:$0xff]
      %v2208 = vld [vmem:[%s2196 + $0x58] sm:$0xff]
      %v2209 = vld [vmem:[%s2196 + $0x60] sm:$0xff]
      %v2210 = vld [vmem:[%s2196 + $0x68] sm:$0xff]
      %v2211 = vld [vmem:[%s2196 + $0x70] sm:$0xff]
      %v2212 = vld [vmem:[%s2196 + $0x78] sm:$0xff]
      %v2213 = vlaneseq
      %v2214 = vshrl.u32 %v2213, 7
      %v2215 = vsub.s32 3, %v2214
      %v2216 = vrot.slane %v1826, %v2215
      %v2217 = vmul.f32 %v1279, %v2216
      %v2218 = vmul.f32 %v1284, %v2216
      %v2219 = vmul.f32 %v1289, %v2216
      %v2220 = vmul.f32 %v1294, %v2216
      %v2221 = vmul.f32 %v1299, %v2216
      %v2222 = vmul.f32 %v1304, %v2216
      %v2223 = vmul.f32 %v1309, %v2216
      %v2224 = vmul.f32 %v1314, %v2216
      %v2225 = vmul.f32 %v1319, %v2216
      %v2226 = vmul.f32 %v1324, %v2216
      %v2227 = vmul.f32 %v1329, %v2216
      %v2228 = vmul.f32 %v1334, %v2216
      %v2229 = vmul.f32 %v1339, %v2216
      %v2230 = vmul.f32 %v1344, %v2216
      %v2231 = vmul.f32 %v1349, %v2216
      %v2232 = vmul.f32 %v1354, %v2216
      %v2233 = vsel %vm1632, %v2217, 0.0
      %2234 = vadd.xlane.f32.xlu0 %v2233
      %v2235 = vpop.xlane.xlu0 %2234
      %v2236 = vsel %vm1632, %v2218, 0.0
      %2237 = vadd.xlane.f32.xlu0 %v2236
      %v2238 = vpop.xlane.xlu0 %2237
      %v2239 = vsel %vm1632, %v2219, 0.0
      %2240 = vadd.xlane.f32.xlu0 %v2239
      %v2241 = vpop.xlane.xlu0 %2240
      %v2242 = vsel %vm1632, %v2220, 0.0
      %2243 = vadd.xlane.f32.xlu0 %v2242
      %v2244 = vpop.xlane.xlu0 %2243
      %v2245 = vsel %vm1632, %v2221, 0.0
      %2246 = vadd.xlane.f32.xlu0 %v2245
      %v2247 = vpop.xlane.xlu0 %2246
      %v2248 = vsel %vm1632, %v2222, 0.0
      %2249 = vadd.xlane.f32.xlu0 %v2248
      %v2250 = vpop.xlane.xlu0 %2249
      %v2251 = vsel %vm1632, %v2223, 0.0
      %2252 = vadd.xlane.f32.xlu0 %v2251
      %v2253 = vpop.xlane.xlu0 %2252
      %v2254 = vsel %vm1632, %v2224, 0.0
      %2255 = vadd.xlane.f32.xlu0 %v2254
      %v2256 = vpop.xlane.xlu0 %2255
      %v2257 = vsel %vm1632, %v2225, 0.0
      %2258 = vadd.xlane.f32.xlu0 %v2257
      %v2259 = vpop.xlane.xlu0 %2258
      %v2260 = vsel %vm1632, %v2226, 0.0
      %2261 = vadd.xlane.f32.xlu0 %v2260
      %v2262 = vpop.xlane.xlu0 %2261
      %v2263 = vsel %vm1632, %v2227, 0.0
      %2264 = vadd.xlane.f32.xlu0 %v2263
      %v2265 = vpop.xlane.xlu0 %2264
      %v2266 = vsel %vm1632, %v2228, 0.0
      %2267 = vadd.xlane.f32.xlu0 %v2266
      %v2268 = vpop.xlane.xlu0 %2267
      %v2269 = vsel %vm1632, %v2229, 0.0
      %2270 = vadd.xlane.f32.xlu0 %v2269
      %v2271 = vpop.xlane.xlu0 %2270
      %v2272 = vsel %vm1632, %v2230, 0.0
      %2273 = vadd.xlane.f32.xlu0 %v2272
      %v2274 = vpop.xlane.xlu0 %2273
      %v2275 = vsel %vm1632, %v2231, 0.0
      %2276 = vadd.xlane.f32.xlu0 %v2275
      %v2277 = vpop.xlane.xlu0 %2276
      %v2278 = vsel %vm1632, %v2232, 0.0
      %2279 = vadd.xlane.f32.xlu0 %v2278
      %v2280 = vpop.xlane.xlu0 %2279
      %v2281 = vmul.f32 %v2235, %v2197
      %v2282 = vmul.f32 %v2238, %v2198
      %v2283 = vmul.f32 %v2241, %v2199
      %v2284 = vmul.f32 %v2244, %v2200
      %v2285 = vmul.f32 %v2247, %v2201
      %v2286 = vmul.f32 %v2250, %v2202
      %v2287 = vmul.f32 %v2253, %v2203
      %v2288 = vmul.f32 %v2256, %v2204
      %v2289 = vmul.f32 %v2259, %v2205
      %v2290 = vmul.f32 %v2262, %v2206
      %v2291 = vmul.f32 %v2265, %v2207
      %v2292 = vmul.f32 %v2268, %v2208
      %v2293 = vmul.f32 %v2271, %v2209
      %v2294 = vmul.f32 %v2274, %v2210
      %v2295 = vmul.f32 %v2277, %v2211
      %v2296 = vmul.f32 %v2280, %v2212
      %v2297 = vadd.f32 %v2281, %v2282
      %v2298 = vadd.f32 %v2297, %v2283
      %v2299 = vadd.f32 %v2298, %v2284
      %v2300 = vadd.f32 %v2299, %v2285
      %v2301 = vadd.f32 %v2300, %v2286
      %v2302 = vadd.f32 %v2301, %v2287
      %v2303 = vadd.f32 %v2302, %v2288
      %v2304 = vadd.f32 %v2303, %v2289
      %v2305 = vadd.f32 %v2304, %v2290
      %v2306 = vadd.f32 %v2305, %v2291
      %v2307 = vadd.f32 %v2306, %v2292
      %v2308 = vadd.f32 %v2307, %v2293
      %v2309 = vadd.f32 %v2308, %v2294
      %v2310 = vadd.f32 %v2309, %v2295
      %v2311 = vadd.f32 %v2310, %v2296
      %v2312 = vrot.slane %v2311, 4
      %v2313 = vadd.f32 %v2311, %v2312
      %v2314 = vrot.slane %v2313, 2
      %v2315 = vadd.f32 %v2313, %v2314
      %v2316 = vrot.slane %v2315, 1
      %v2317 = vadd.f32 %v2315, %v2316
      %v2318 = vadd.f32 %v2195, %v2317
      %v2319 = vld [vmem:[%s12] sm:$0xf]
      %v2320 = vld [vmem:[%s14] sm:$0x1]
      %v2321 = vld [vmem:[%s13] sm:$0xff]
      %v2322 = vld [vmem:[%s13 + $0x8] sm:$0xff]
      %v2323 = vld [vmem:[%s13 + $0x10] sm:$0xff]
      %v2324 = vld [vmem:[%s13 + $0x18] sm:$0xff]
      %v2325 = vld [vmem:[%s13 + $0x20] sm:$0xff]
      %v2326 = vld [vmem:[%s13 + $0x28] sm:$0xff]
      %v2327 = vld [vmem:[%s13 + $0x30] sm:$0xff]
      %v2328 = vld [vmem:[%s13 + $0x38] sm:$0xff]
      %v2329 = vld [vmem:[%s13 + $0x40] sm:$0xff]
      %v2330 = vld [vmem:[%s13 + $0x48] sm:$0xff]
      %v2331 = vld [vmem:[%s13 + $0x50] sm:$0xff]
      %v2332 = vld [vmem:[%s13 + $0x58] sm:$0xff]
      %v2333 = vld [vmem:[%s13 + $0x60] sm:$0xff]
      %v2334 = vld [vmem:[%s13 + $0x68] sm:$0xff]
      %v2335 = vld [vmem:[%s13 + $0x70] sm:$0xff]
      %v2336 = vld [vmem:[%s13 + $0x78] sm:$0xff]
      %v2337 = vlaneseq
      %v2338 = vshrl.u32 %v2337, 7
      %v2339 = vsub.s32 0, %v2338
      %v2340 = vrot.slane %v2319, %v2339
      %v2341 = vmul.f32 %v1748, %v2340
      %v2342 = vmul.f32 %v1753, %v2340
      %v2343 = vmul.f32 %v1758, %v2340
      %v2344 = vmul.f32 %v1763, %v2340
      %v2345 = vmul.f32 %v1768, %v2340
      %v2346 = vmul.f32 %v1773, %v2340
      %v2347 = vmul.f32 %v1778, %v2340
      %v2348 = vmul.f32 %v1783, %v2340
      %v2349 = vmul.f32 %v1788, %v2340
      %v2350 = vmul.f32 %v1793, %v2340
      %v2351 = vmul.f32 %v1798, %v2340
      %v2352 = vmul.f32 %v1803, %v2340
      %v2353 = vmul.f32 %v1808, %v2340
      %v2354 = vmul.f32 %v1813, %v2340
      %v2355 = vmul.f32 %v1818, %v2340
      %v2356 = vmul.f32 %v1823, %v2340
      %vm2357 = vcmask 523264
      %v2358 = vsel %vm2357, %v2341, 0.0
      %2359 = vadd.xlane.f32.xlu0 %v2358
      %v2360 = vpop.xlane.xlu0 %2359
      %v2361 = vsel %vm2357, %v2342, 0.0
      %2362 = vadd.xlane.f32.xlu0 %v2361
      %v2363 = vpop.xlane.xlu0 %2362
      %v2364 = vsel %vm2357, %v2343, 0.0
      %2365 = vadd.xlane.f32.xlu0 %v2364
      %v2366 = vpop.xlane.xlu0 %2365
      %v2367 = vsel %vm2357, %v2344, 0.0
      %2368 = vadd.xlane.f32.xlu0 %v2367
      %v2369 = vpop.xlane.xlu0 %2368
      %v2370 = vsel %vm2357, %v2345, 0.0
      %2371 = vadd.xlane.f32.xlu0 %v2370
      %v2372 = vpop.xlane.xlu0 %2371
      %v2373 = vsel %vm2357, %v2346, 0.0
      %2374 = vadd.xlane.f32.xlu0 %v2373
      %v2375 = vpop.xlane.xlu0 %2374
      %v2376 = vsel %vm2357, %v2347, 0.0
      %2377 = vadd.xlane.f32.xlu0 %v2376
      %v2378 = vpop.xlane.xlu0 %2377
      %v2379 = vsel %vm2357, %v2348, 0.0
      %2380 = vadd.xlane.f32.xlu0 %v2379
      %v2381 = vpop.xlane.xlu0 %2380
      %v2382 = vsel %vm2357, %v2349, 0.0
      %2383 = vadd.xlane.f32.xlu0 %v2382
      %v2384 = vpop.xlane.xlu0 %2383
      %v2385 = vsel %vm2357, %v2350, 0.0
      %2386 = vadd.xlane.f32.xlu0 %v2385
      %v2387 = vpop.xlane.xlu0 %2386
      %v2388 = vsel %vm2357, %v2351, 0.0
      %2389 = vadd.xlane.f32.xlu0 %v2388
      %v2390 = vpop.xlane.xlu0 %2389
      %v2391 = vsel %vm2357, %v2352, 0.0
      %2392 = vadd.xlane.f32.xlu0 %v2391
      %v2393 = vpop.xlane.xlu0 %2392
      %v2394 = vsel %vm2357, %v2353, 0.0
      %2395 = vadd.xlane.f32.xlu0 %v2394
      %v2396 = vpop.xlane.xlu0 %2395
      %v2397 = vsel %vm2357, %v2354, 0.0
      %2398 = vadd.xlane.f32.xlu0 %v2397
      %v2399 = vpop.xlane.xlu0 %2398
      %v2400 = vsel %vm2357, %v2355, 0.0
      %2401 = vadd.xlane.f32.xlu0 %v2400
      %v2402 = vpop.xlane.xlu0 %2401
      %v2403 = vsel %vm2357, %v2356, 0.0
      %2404 = vadd.xlane.f32.xlu0 %v2403
      %v2405 = vpop.xlane.xlu0 %2404
      %v2406 = vmul.f32 %v2360, %v2321
      %v2407 = vmul.f32 %v2363, %v2322
      %v2408 = vmul.f32 %v2366, %v2323
      %v2409 = vmul.f32 %v2369, %v2324
      %v2410 = vmul.f32 %v2372, %v2325
      %v2411 = vmul.f32 %v2375, %v2326
      %v2412 = vmul.f32 %v2378, %v2327
      %v2413 = vmul.f32 %v2381, %v2328
      %v2414 = vmul.f32 %v2384, %v2329
      %v2415 = vmul.f32 %v2387, %v2330
      %v2416 = vmul.f32 %v2390, %v2331
      %v2417 = vmul.f32 %v2393, %v2332
      %v2418 = vmul.f32 %v2396, %v2333
      %v2419 = vmul.f32 %v2399, %v2334
      %v2420 = vmul.f32 %v2402, %v2335
      %v2421 = vmul.f32 %v2405, %v2336
      %v2422 = vadd.f32 %v2406, %v2407
      %v2423 = vadd.f32 %v2422, %v2408
      %v2424 = vadd.f32 %v2423, %v2409
      %v2425 = vadd.f32 %v2424, %v2410
      %v2426 = vadd.f32 %v2425, %v2411
      %v2427 = vadd.f32 %v2426, %v2412
      %v2428 = vadd.f32 %v2427, %v2413
      %v2429 = vadd.f32 %v2428, %v2414
      %v2430 = vadd.f32 %v2429, %v2415
      %v2431 = vadd.f32 %v2430, %v2416
      %v2432 = vadd.f32 %v2431, %v2417
      %v2433 = vadd.f32 %v2432, %v2418
      %v2434 = vadd.f32 %v2433, %v2419
      %v2435 = vadd.f32 %v2434, %v2420
      %v2436 = vadd.f32 %v2435, %v2421
      %v2437 = vrot.slane %v2436, 4
      %v2438 = vadd.f32 %v2436, %v2437
      %v2439 = vrot.slane %v2438, 2
      %v2440 = vadd.f32 %v2438, %v2439
      %v2441 = vrot.slane %v2440, 1
      %v2442 = vadd.f32 %v2440, %v2441
      %v2443 = vadd.f32 %v2320, %v2442
      %s2444 = scalar_lea.vmem %s13, 128
      %v2445 = vld [vmem:[%s2444] sm:$0xff]
      %v2446 = vld [vmem:[%s2444 + $0x8] sm:$0xff]
      %v2447 = vld [vmem:[%s2444 + $0x10] sm:$0xff]
      %v2448 = vld [vmem:[%s2444 + $0x18] sm:$0xff]
      %v2449 = vld [vmem:[%s2444 + $0x20] sm:$0xff]
      %v2450 = vld [vmem:[%s2444 + $0x28] sm:$0xff]
      %v2451 = vld [vmem:[%s2444 + $0x30] sm:$0xff]
      %v2452 = vld [vmem:[%s2444 + $0x38] sm:$0xff]
      %v2453 = vld [vmem:[%s2444 + $0x40] sm:$0xff]
      %v2454 = vld [vmem:[%s2444 + $0x48] sm:$0xff]
      %v2455 = vld [vmem:[%s2444 + $0x50] sm:$0xff]
      %v2456 = vld [vmem:[%s2444 + $0x58] sm:$0xff]
      %v2457 = vld [vmem:[%s2444 + $0x60] sm:$0xff]
      %v2458 = vld [vmem:[%s2444 + $0x68] sm:$0xff]
      %v2459 = vld [vmem:[%s2444 + $0x70] sm:$0xff]
      %v2460 = vld [vmem:[%s2444 + $0x78] sm:$0xff]
      %v2461 = vlaneseq
      %v2462 = vshrl.u32 %v2461, 7
      %v2463 = vsub.s32 1, %v2462
      %v2464 = vrot.slane %v2319, %v2463
      %v2465 = vmul.f32 %v1748, %v2464
      %v2466 = vmul.f32 %v1753, %v2464
      %v2467 = vmul.f32 %v1758, %v2464
      %v2468 = vmul.f32 %v1763, %v2464
      %v2469 = vmul.f32 %v1768, %v2464
      %v2470 = vmul.f32 %v1773, %v2464
      %v2471 = vmul.f32 %v1778, %v2464
      %v2472 = vmul.f32 %v1783, %v2464
      %v2473 = vmul.f32 %v1788, %v2464
      %v2474 = vmul.f32 %v1793, %v2464
      %v2475 = vmul.f32 %v1798, %v2464
      %v2476 = vmul.f32 %v1803, %v2464
      %v2477 = vmul.f32 %v1808, %v2464
      %v2478 = vmul.f32 %v1813, %v2464
      %v2479 = vmul.f32 %v1818, %v2464
      %v2480 = vmul.f32 %v1823, %v2464
      %v2481 = vsel %vm2357, %v2465, 0.0
      %2482 = vadd.xlane.f32.xlu0 %v2481
      %v2483 = vpop.xlane.xlu0 %2482
      %v2484 = vsel %vm2357, %v2466, 0.0
      %2485 = vadd.xlane.f32.xlu0 %v2484
      %v2486 = vpop.xlane.xlu0 %2485
      %v2487 = vsel %vm2357, %v2467, 0.0
      %2488 = vadd.xlane.f32.xlu0 %v2487
      %v2489 = vpop.xlane.xlu0 %2488
      %v2490 = vsel %vm2357, %v2468, 0.0
      %2491 = vadd.xlane.f32.xlu0 %v2490
      %v2492 = vpop.xlane.xlu0 %2491
      %v2493 = vsel %vm2357, %v2469, 0.0
      %2494 = vadd.xlane.f32.xlu0 %v2493
      %v2495 = vpop.xlane.xlu0 %2494
      %v2496 = vsel %vm2357, %v2470, 0.0
      %2497 = vadd.xlane.f32.xlu0 %v2496
      %v2498 = vpop.xlane.xlu0 %2497
      %v2499 = vsel %vm2357, %v2471, 0.0
      %2500 = vadd.xlane.f32.xlu0 %v2499
      %v2501 = vpop.xlane.xlu0 %2500
      %v2502 = vsel %vm2357, %v2472, 0.0
      %2503 = vadd.xlane.f32.xlu0 %v2502
      %v2504 = vpop.xlane.xlu0 %2503
      %v2505 = vsel %vm2357, %v2473, 0.0
      %2506 = vadd.xlane.f32.xlu0 %v2505
      %v2507 = vpop.xlane.xlu0 %2506
      %v2508 = vsel %vm2357, %v2474, 0.0
      %2509 = vadd.xlane.f32.xlu0 %v2508
      %v2510 = vpop.xlane.xlu0 %2509
      %v2511 = vsel %vm2357, %v2475, 0.0
      %2512 = vadd.xlane.f32.xlu0 %v2511
      %v2513 = vpop.xlane.xlu0 %2512
      %v2514 = vsel %vm2357, %v2476, 0.0
      %2515 = vadd.xlane.f32.xlu0 %v2514
      %v2516 = vpop.xlane.xlu0 %2515
      %v2517 = vsel %vm2357, %v2477, 0.0
      %2518 = vadd.xlane.f32.xlu0 %v2517
      %v2519 = vpop.xlane.xlu0 %2518
      %v2520 = vsel %vm2357, %v2478, 0.0
      %2521 = vadd.xlane.f32.xlu0 %v2520
      %v2522 = vpop.xlane.xlu0 %2521
      %v2523 = vsel %vm2357, %v2479, 0.0
      %2524 = vadd.xlane.f32.xlu0 %v2523
      %v2525 = vpop.xlane.xlu0 %2524
      %v2526 = vsel %vm2357, %v2480, 0.0
      %2527 = vadd.xlane.f32.xlu0 %v2526
      %v2528 = vpop.xlane.xlu0 %2527
      %v2529 = vmul.f32 %v2483, %v2445
      %v2530 = vmul.f32 %v2486, %v2446
      %v2531 = vmul.f32 %v2489, %v2447
      %v2532 = vmul.f32 %v2492, %v2448
      %v2533 = vmul.f32 %v2495, %v2449
      %v2534 = vmul.f32 %v2498, %v2450
      %v2535 = vmul.f32 %v2501, %v2451
      %v2536 = vmul.f32 %v2504, %v2452
      %v2537 = vmul.f32 %v2507, %v2453
      %v2538 = vmul.f32 %v2510, %v2454
      %v2539 = vmul.f32 %v2513, %v2455
      %v2540 = vmul.f32 %v2516, %v2456
      %v2541 = vmul.f32 %v2519, %v2457
      %v2542 = vmul.f32 %v2522, %v2458
      %v2543 = vmul.f32 %v2525, %v2459
      %v2544 = vmul.f32 %v2528, %v2460
      %v2545 = vadd.f32 %v2529, %v2530
      %v2546 = vadd.f32 %v2545, %v2531
      %v2547 = vadd.f32 %v2546, %v2532
      %v2548 = vadd.f32 %v2547, %v2533
      %v2549 = vadd.f32 %v2548, %v2534
      %v2550 = vadd.f32 %v2549, %v2535
      %v2551 = vadd.f32 %v2550, %v2536
      %v2552 = vadd.f32 %v2551, %v2537
      %v2553 = vadd.f32 %v2552, %v2538
      %v2554 = vadd.f32 %v2553, %v2539
      %v2555 = vadd.f32 %v2554, %v2540
      %v2556 = vadd.f32 %v2555, %v2541
      %v2557 = vadd.f32 %v2556, %v2542
      %v2558 = vadd.f32 %v2557, %v2543
      %v2559 = vadd.f32 %v2558, %v2544
      %v2560 = vrot.slane %v2559, 4
      %v2561 = vadd.f32 %v2559, %v2560
      %v2562 = vrot.slane %v2561, 2
      %v2563 = vadd.f32 %v2561, %v2562
      %v2564 = vrot.slane %v2563, 1
      %v2565 = vadd.f32 %v2563, %v2564
      %v2566 = vadd.f32 %v2443, %v2565
      %v2567 = vadd.f32 %v779, %v780
      %2568 = vadd.xlane.f32.xlu0 %v2567
      %v2569 = vpop.xlane.xlu0 %2568
      %v2570 = vadd.f32 %v781, %v782
      %2571 = vadd.xlane.f32.xlu0 %v2570
      %v2572 = vpop.xlane.xlu0 %2571
      %v2573 = vadd.f32 %v783, %v784
      %2574 = vadd.xlane.f32.xlu0 %v2573
      %v2575 = vpop.xlane.xlu0 %2574
      %v2576 = vadd.f32 %v785, %v786
      %2577 = vadd.xlane.f32.xlu0 %v2576
      %v2578 = vpop.xlane.xlu0 %2577
      %v2579 = vadd.f32 %v787, %v788
      %2580 = vadd.xlane.f32.xlu0 %v2579
      %v2581 = vpop.xlane.xlu0 %2580
      %v2582 = vadd.f32 %v789, %v790
      %2583 = vadd.xlane.f32.xlu0 %v2582
      %v2584 = vpop.xlane.xlu0 %2583
      %v2585 = vadd.f32 %v791, %v792
      %2586 = vadd.xlane.f32.xlu0 %v2585
      %v2587 = vpop.xlane.xlu0 %2586
      %v2588 = vadd.f32 %v793, %v794
      %2589 = vadd.xlane.f32.xlu0 %v2588
      %v2590 = vpop.xlane.xlu0 %2589
      %v2591 = vadd.f32 %v795, %v796
      %2592 = vadd.xlane.f32.xlu0 %v2591
      %v2593 = vpop.xlane.xlu0 %2592
      %v2594 = vadd.f32 %v797, %v798
      %2595 = vadd.xlane.f32.xlu0 %v2594
      %v2596 = vpop.xlane.xlu0 %2595
      %v2597 = vadd.f32 %v799, %v800
      %2598 = vadd.xlane.f32.xlu0 %v2597
      %v2599 = vpop.xlane.xlu0 %2598
      %v2600 = vadd.f32 %v801, %v802
      %2601 = vadd.xlane.f32.xlu0 %v2600
      %v2602 = vpop.xlane.xlu0 %2601
      %v2603 = vadd.f32 %v803, %v804
      %2604 = vadd.xlane.f32.xlu0 %v2603
      %v2605 = vpop.xlane.xlu0 %2604
      %v2606 = vadd.f32 %v805, %v806
      %2607 = vadd.xlane.f32.xlu0 %v2606
      %v2608 = vpop.xlane.xlu0 %2607
      %v2609 = vadd.f32 %v807, %v808
      %2610 = vadd.xlane.f32.xlu0 %v2609
      %v2611 = vpop.xlane.xlu0 %2610
      %v2612 = vadd.f32 %v809, %v810
      %2613 = vadd.xlane.f32.xlu0 %v2612
      %v2614 = vpop.xlane.xlu0 %2613
      %v2615 = vrcp.pop 256.0
      %v2616 = vmul.f32 %v2569, %v2615
      %v2617 = vmul.f32 %v2572, %v2615
      %v2618 = vmul.f32 %v2575, %v2615
      %v2619 = vmul.f32 %v2578, %v2615
      %v2620 = vmul.f32 %v2581, %v2615
      %v2621 = vmul.f32 %v2584, %v2615
      %v2622 = vmul.f32 %v2587, %v2615
      %v2623 = vmul.f32 %v2590, %v2615
      %v2624 = vmul.f32 %v2593, %v2615
      %v2625 = vmul.f32 %v2596, %v2615
      %v2626 = vmul.f32 %v2599, %v2615
      %v2627 = vmul.f32 %v2602, %v2615
      %v2628 = vmul.f32 %v2605, %v2615
      %v2629 = vmul.f32 %v2608, %v2615
      %v2630 = vmul.f32 %v2611, %v2615
      %v2631 = vmul.f32 %v2614, %v2615
      %v2632 = vld [vmem:[%s17] sm:$0x1]
      %s2633 = scalar_lea.vmem %s13, 256
      %v2634 = vld [vmem:[%s2633] sm:$0xff]
      %v2635 = vld [vmem:[%s2633 + $0x8] sm:$0xff]
      %v2636 = vld [vmem:[%s2633 + $0x10] sm:$0xff]
      %v2637 = vld [vmem:[%s2633 + $0x18] sm:$0xff]
      %v2638 = vld [vmem:[%s2633 + $0x20] sm:$0xff]
      %v2639 = vld [vmem:[%s2633 + $0x28] sm:$0xff]
      %v2640 = vld [vmem:[%s2633 + $0x30] sm:$0xff]
      %v2641 = vld [vmem:[%s2633 + $0x38] sm:$0xff]
      %v2642 = vld [vmem:[%s2633 + $0x40] sm:$0xff]
      %v2643 = vld [vmem:[%s2633 + $0x48] sm:$0xff]
      %v2644 = vld [vmem:[%s2633 + $0x50] sm:$0xff]
      %v2645 = vld [vmem:[%s2633 + $0x58] sm:$0xff]
      %v2646 = vld [vmem:[%s2633 + $0x60] sm:$0xff]
      %v2647 = vld [vmem:[%s2633 + $0x68] sm:$0xff]
      %v2648 = vld [vmem:[%s2633 + $0x70] sm:$0xff]
      %v2649 = vld [vmem:[%s2633 + $0x78] sm:$0xff]
      %v2650 = vlaneseq
      %v2651 = vshrl.u32 %v2650, 7
      %v2652 = vsub.s32 2, %v2651
      %v2653 = vrot.slane %v2319, %v2652
      %v2654 = vmul.f32 %v1748, %v2653
      %v2655 = vmul.f32 %v1753, %v2653
      %v2656 = vmul.f32 %v1758, %v2653
      %v2657 = vmul.f32 %v1763, %v2653
      %v2658 = vmul.f32 %v1768, %v2653
      %v2659 = vmul.f32 %v1773, %v2653
      %v2660 = vmul.f32 %v1778, %v2653
      %v2661 = vmul.f32 %v1783, %v2653
      %v2662 = vmul.f32 %v1788, %v2653
      %v2663 = vmul.f32 %v1793, %v2653
      %v2664 = vmul.f32 %v1798, %v2653
      %v2665 = vmul.f32 %v1803, %v2653
      %v2666 = vmul.f32 %v1808, %v2653
      %v2667 = vmul.f32 %v1813, %v2653
      %v2668 = vmul.f32 %v1818, %v2653
      %v2669 = vmul.f32 %v1823, %v2653
      %v2670 = vsel %vm2357, %v2654, 0.0
      %2671 = vadd.xlane.f32.xlu0 %v2670
      %v2672 = vpop.xlane.xlu0 %2671
      %v2673 = vsel %vm2357, %v2655, 0.0
      %2674 = vadd.xlane.f32.xlu0 %v2673
      %v2675 = vpop.xlane.xlu0 %2674
      %v2676 = vsel %vm2357, %v2656, 0.0
      %2677 = vadd.xlane.f32.xlu0 %v2676
      %v2678 = vpop.xlane.xlu0 %2677
      %v2679 = vsel %vm2357, %v2657, 0.0
      %2680 = vadd.xlane.f32.xlu0 %v2679
      %v2681 = vpop.xlane.xlu0 %2680
      %v2682 = vsel %vm2357, %v2658, 0.0
      %2683 = vadd.xlane.f32.xlu0 %v2682
      %v2684 = vpop.xlane.xlu0 %2683
      %v2685 = vsel %vm2357, %v2659, 0.0
      %2686 = vadd.xlane.f32.xlu0 %v2685
      %v2687 = vpop.xlane.xlu0 %2686
      %v2688 = vsel %vm2357, %v2660, 0.0
      %2689 = vadd.xlane.f32.xlu0 %v2688
      %v2690 = vpop.xlane.xlu0 %2689
      %v2691 = vsel %vm2357, %v2661, 0.0
      %2692 = vadd.xlane.f32.xlu0 %v2691
      %v2693 = vpop.xlane.xlu0 %2692
      %v2694 = vsel %vm2357, %v2662, 0.0
      %2695 = vadd.xlane.f32.xlu0 %v2694
      %v2696 = vpop.xlane.xlu0 %2695
      %v2697 = vsel %vm2357, %v2663, 0.0
      %2698 = vadd.xlane.f32.xlu0 %v2697
      %v2699 = vpop.xlane.xlu0 %2698
      %v2700 = vsel %vm2357, %v2664, 0.0
      %2701 = vadd.xlane.f32.xlu0 %v2700
      %v2702 = vpop.xlane.xlu0 %2701
      %v2703 = vsel %vm2357, %v2665, 0.0
      %2704 = vadd.xlane.f32.xlu0 %v2703
      %v2705 = vpop.xlane.xlu0 %2704
      %v2706 = vsel %vm2357, %v2666, 0.0
      %2707 = vadd.xlane.f32.xlu0 %v2706
      %v2708 = vpop.xlane.xlu0 %2707
      %v2709 = vsel %vm2357, %v2667, 0.0
      %2710 = vadd.xlane.f32.xlu0 %v2709
      %v2711 = vpop.xlane.xlu0 %2710
      %v2712 = vsel %vm2357, %v2668, 0.0
      %2713 = vadd.xlane.f32.xlu0 %v2712
      %v2714 = vpop.xlane.xlu0 %2713
      %v2715 = vsel %vm2357, %v2669, 0.0
      %2716 = vadd.xlane.f32.xlu0 %v2715
      %v2717 = vpop.xlane.xlu0 %2716
      %v2718 = vmul.f32 %v2672, %v2634
      %v2719 = vmul.f32 %v2675, %v2635
      %v2720 = vmul.f32 %v2678, %v2636
      %v2721 = vmul.f32 %v2681, %v2637
      %v2722 = vmul.f32 %v2684, %v2638
      %v2723 = vmul.f32 %v2687, %v2639
      %v2724 = vmul.f32 %v2690, %v2640
      %v2725 = vmul.f32 %v2693, %v2641
      %v2726 = vmul.f32 %v2696, %v2642
      %v2727 = vmul.f32 %v2699, %v2643
      %v2728 = vmul.f32 %v2702, %v2644
      %v2729 = vmul.f32 %v2705, %v2645
      %v2730 = vmul.f32 %v2708, %v2646
      %v2731 = vmul.f32 %v2711, %v2647
      %v2732 = vmul.f32 %v2714, %v2648
      %v2733 = vmul.f32 %v2717, %v2649
      %v2734 = vadd.f32 %v2718, %v2719
      %v2735 = vadd.f32 %v2734, %v2720
      %v2736 = vadd.f32 %v2735, %v2721
      %v2737 = vadd.f32 %v2736, %v2722
      %v2738 = vadd.f32 %v2737, %v2723
      %v2739 = vadd.f32 %v2738, %v2724
      %v2740 = vadd.f32 %v2739, %v2725
      %v2741 = vadd.f32 %v2740, %v2726
      %v2742 = vadd.f32 %v2741, %v2727
      %v2743 = vadd.f32 %v2742, %v2728
      %v2744 = vadd.f32 %v2743, %v2729
      %v2745 = vadd.f32 %v2744, %v2730
      %v2746 = vadd.f32 %v2745, %v2731
      %v2747 = vadd.f32 %v2746, %v2732
      %v2748 = vadd.f32 %v2747, %v2733
      %v2749 = vrot.slane %v2748, 4
      %v2750 = vadd.f32 %v2748, %v2749
      %v2751 = vrot.slane %v2750, 2
      %v2752 = vadd.f32 %v2750, %v2751
      %v2753 = vrot.slane %v2752, 1
      %v2754 = vadd.f32 %v2752, %v2753
      %v2755 = vadd.f32 %v2632, %v2754
      %v2756 = vld [vmem:[%s16] sm:$0xff]
      %v2757 = vld [vmem:[%s16 + $0x8] sm:$0xff]
      %v2758 = vld [vmem:[%s16 + $0x10] sm:$0xff]
      %v2759 = vld [vmem:[%s16 + $0x18] sm:$0xff]
      %v2760 = vld [vmem:[%s16 + $0x20] sm:$0xff]
      %v2761 = vld [vmem:[%s16 + $0x28] sm:$0xff]
      %v2762 = vld [vmem:[%s16 + $0x30] sm:$0xff]
      %v2763 = vld [vmem:[%s16 + $0x38] sm:$0xff]
      %v2764 = vld [vmem:[%s16 + $0x40] sm:$0xff]
      %v2765 = vld [vmem:[%s16 + $0x48] sm:$0xff]
      %v2766 = vld [vmem:[%s16 + $0x50] sm:$0xff]
      %v2767 = vld [vmem:[%s16 + $0x58] sm:$0xff]
      %v2768 = vld [vmem:[%s16 + $0x60] sm:$0xff]
      %v2769 = vld [vmem:[%s16 + $0x68] sm:$0xff]
      %v2770 = vld [vmem:[%s16 + $0x70] sm:$0xff]
      %v2771 = vld [vmem:[%s16 + $0x78] sm:$0xff]
      %v2772 = vmul.f32 %v2616, %v2756
      %v2773 = vmul.f32 %v2617, %v2757
      %v2774 = vmul.f32 %v2618, %v2758
      %v2775 = vmul.f32 %v2619, %v2759
      %v2776 = vmul.f32 %v2620, %v2760
      %v2777 = vmul.f32 %v2621, %v2761
      %v2778 = vmul.f32 %v2622, %v2762
      %v2779 = vmul.f32 %v2623, %v2763
      %v2780 = vmul.f32 %v2624, %v2764
      %v2781 = vmul.f32 %v2625, %v2765
      %v2782 = vmul.f32 %v2626, %v2766
      %v2783 = vmul.f32 %v2627, %v2767
      %v2784 = vmul.f32 %v2628, %v2768
      %v2785 = vmul.f32 %v2629, %v2769
      %v2786 = vmul.f32 %v2630, %v2770
      %v2787 = vmul.f32 %v2631, %v2771
      %v2788 = vadd.f32 %v2772, %v2773
      %v2789 = vadd.f32 %v2788, %v2774
      %v2790 = vadd.f32 %v2789, %v2775
      %v2791 = vadd.f32 %v2790, %v2776
      %v2792 = vadd.f32 %v2791, %v2777
      %v2793 = vadd.f32 %v2792, %v2778
      %v2794 = vadd.f32 %v2793, %v2779
      %v2795 = vadd.f32 %v2794, %v2780
      %v2796 = vadd.f32 %v2795, %v2781
      %v2797 = vadd.f32 %v2796, %v2782
      %v2798 = vadd.f32 %v2797, %v2783
      %v2799 = vadd.f32 %v2798, %v2784
      %v2800 = vadd.f32 %v2799, %v2785
      %v2801 = vadd.f32 %v2800, %v2786
      %v2802 = vadd.f32 %v2801, %v2787
      %v2803 = vrot.slane %v2802, 4
      %v2804 = vadd.f32 %v2802, %v2803
      %v2805 = vrot.slane %v2804, 2
      %v2806 = vadd.f32 %v2804, %v2805
      %v2807 = vrot.slane %v2806, 1
      %v2808 = vadd.f32 %v2806, %v2807
      %v2809 = vadd.f32 %v2755, %v2808
      %v2810 = vadd.f32 %v715, %v716
      %v2811 = vadd.f32 %v2810, %v717
      %v2812 = vadd.f32 %v2811, %v718
      %v2813 = vadd.f32 %v2812, %v719
      %v2814 = vadd.f32 %v2813, %v720
      %v2815 = vadd.f32 %v2814, %v721
      %v2816 = vadd.f32 %v2815, %v722
      %2817 = vadd.xlane.f32.xlu0 %v2816
      %v2818 = vpop.xlane.xlu0 %2817
      %v2819 = vadd.f32 %v723, %v724
      %v2820 = vadd.f32 %v2819, %v725
      %v2821 = vadd.f32 %v2820, %v726
      %v2822 = vadd.f32 %v2821, %v727
      %v2823 = vadd.f32 %v2822, %v728
      %v2824 = vadd.f32 %v2823, %v729
      %v2825 = vadd.f32 %v2824, %v730
      %2826 = vadd.xlane.f32.xlu0 %v2825
      %v2827 = vpop.xlane.xlu0 %2826
      %v2828 = vadd.f32 %v731, %v732
      %v2829 = vadd.f32 %v2828, %v733
      %v2830 = vadd.f32 %v2829, %v734
      %v2831 = vadd.f32 %v2830, %v735
      %v2832 = vadd.f32 %v2831, %v736
      %v2833 = vadd.f32 %v2832, %v737
      %v2834 = vadd.f32 %v2833, %v738
      %2835 = vadd.xlane.f32.xlu0 %v2834
      %v2836 = vpop.xlane.xlu0 %2835
      %v2837 = vadd.f32 %v739, %v740
      %v2838 = vadd.f32 %v2837, %v741
      %v2839 = vadd.f32 %v2838, %v742
      %v2840 = vadd.f32 %v2839, %v743
      %v2841 = vadd.f32 %v2840, %v744
      %v2842 = vadd.f32 %v2841, %v745
      %v2843 = vadd.f32 %v2842, %v746
      %2844 = vadd.xlane.f32.xlu0 %v2843
      %v2845 = vpop.xlane.xlu0 %2844
      %v2846 = vadd.f32 %v747, %v748
      %v2847 = vadd.f32 %v2846, %v749
      %v2848 = vadd.f32 %v2847, %v750
      %v2849 = vadd.f32 %v2848, %v751
      %v2850 = vadd.f32 %v2849, %v752
      %v2851 = vadd.f32 %v2850, %v753
      %v2852 = vadd.f32 %v2851, %v754
      %2853 = vadd.xlane.f32.xlu0 %v2852
      %v2854 = vpop.xlane.xlu0 %2853
      %v2855 = vadd.f32 %v755, %v756
      %v2856 = vadd.f32 %v2855, %v757
      %v2857 = vadd.f32 %v2856, %v758
      %v2858 = vadd.f32 %v2857, %v759
      %v2859 = vadd.f32 %v2858, %v760
      %v2860 = vadd.f32 %v2859, %v761
      %v2861 = vadd.f32 %v2860, %v762
      %2862 = vadd.xlane.f32.xlu0 %v2861
      %v2863 = vpop.xlane.xlu0 %2862
      %v2864 = vadd.f32 %v763, %v764
      %v2865 = vadd.f32 %v2864, %v765
      %v2866 = vadd.f32 %v2865, %v766
      %v2867 = vadd.f32 %v2866, %v767
      %v2868 = vadd.f32 %v2867, %v768
      %v2869 = vadd.f32 %v2868, %v769
      %v2870 = vadd.f32 %v2869, %v770
      %2871 = vadd.xlane.f32.xlu0 %v2870
      %v2872 = vpop.xlane.xlu0 %2871
      %v2873 = vadd.f32 %v771, %v772
      %v2874 = vadd.f32 %v2873, %v773
      %v2875 = vadd.f32 %v2874, %v774
      %v2876 = vadd.f32 %v2875, %v775
      %v2877 = vadd.f32 %v2876, %v776
      %v2878 = vadd.f32 %v2877, %v777
      %v2879 = vadd.f32 %v2878, %v778
      %2880 = vadd.xlane.f32.xlu0 %v2879
      %v2881 = vpop.xlane.xlu0 %2880
      %v2882 = vrcp.pop 1024.0
      %v2883 = vmul.f32 %v2818, %v2882
      %v2884 = vmul.f32 %v2827, %v2882
      %v2885 = vmul.f32 %v2836, %v2882
      %v2886 = vmul.f32 %v2845, %v2882
      %v2887 = vmul.f32 %v2854, %v2882
      %v2888 = vmul.f32 %v2863, %v2882
      %v2889 = vmul.f32 %v2872, %v2882
      %v2890 = vmul.f32 %v2881, %v2882
      %v2891 = vld [vmem:[%s15] sm:$0x3]
      %v2893 = vlaneseq
      %v2894 = vshrl.u32 %v2893, 7
      %v2895 = vsub.s32 0, %v2894
      %v2896 = vrot.slane %v2891, %v2895
      %v2897 = vlaneseq
      %v2898 = vshrl.u32 %v2897, 7
      %v2899 = vsub.s32 1, %v2898
      %v2900 = vrot.slane %v2891, %v2899
      %v2903 = vmul.f32 %v779, %v2896
      %v2904 = vmul.f32 %v780, %v2900
      %v2905 = vmul.f32 %v781, %v2896
      %v2906 = vmul.f32 %v782, %v2900
      %v2907 = vmul.f32 %v783, %v2896
      %v2908 = vmul.f32 %v784, %v2900
      %v2909 = vmul.f32 %v785, %v2896
      %v2910 = vmul.f32 %v786, %v2900
      %v2911 = vmul.f32 %v787, %v2896
      %v2912 = vmul.f32 %v788, %v2900
      %v2913 = vmul.f32 %v789, %v2896
      %v2914 = vmul.f32 %v790, %v2900
      %v2915 = vmul.f32 %v791, %v2896
      %v2916 = vmul.f32 %v792, %v2900
      %v2917 = vmul.f32 %v793, %v2896
      %v2918 = vmul.f32 %v794, %v2900
      %v2919 = vmul.f32 %v795, %v2896
      %v2920 = vmul.f32 %v796, %v2900
      %v2921 = vmul.f32 %v797, %v2896
      %v2922 = vmul.f32 %v798, %v2900
      %v2923 = vmul.f32 %v799, %v2896
      %v2924 = vmul.f32 %v800, %v2900
      %v2925 = vmul.f32 %v801, %v2896
      %v2926 = vmul.f32 %v802, %v2900
      %v2927 = vmul.f32 %v803, %v2896
      %v2928 = vmul.f32 %v804, %v2900
      %v2929 = vmul.f32 %v805, %v2896
      %v2930 = vmul.f32 %v806, %v2900
      %v2931 = vmul.f32 %v807, %v2896
      %v2932 = vmul.f32 %v808, %v2900
      %v2933 = vmul.f32 %v809, %v2896
      %v2934 = vmul.f32 %v810, %v2900
      %v2935 = vadd.f32 %v2903, %v2904
      %2936 = vadd.xlane.f32.xlu0 %v2935
      %v2937 = vpop.xlane.xlu0 %2936
      %v2938 = vadd.f32 %v2905, %v2906
      %2939 = vadd.xlane.f32.xlu0 %v2938
      %v2940 = vpop.xlane.xlu0 %2939
      %v2941 = vadd.f32 %v2907, %v2908
      %2942 = vadd.xlane.f32.xlu0 %v2941
      %v2943 = vpop.xlane.xlu0 %2942
      %v2944 = vadd.f32 %v2909, %v2910
      %2945 = vadd.xlane.f32.xlu0 %v2944
      %v2946 = vpop.xlane.xlu0 %2945
      %v2947 = vadd.f32 %v2911, %v2912
      %2948 = vadd.xlane.f32.xlu0 %v2947
      %v2949 = vpop.xlane.xlu0 %2948
      %v2950 = vadd.f32 %v2913, %v2914
      %2951 = vadd.xlane.f32.xlu0 %v2950
      %v2952 = vpop.xlane.xlu0 %2951
      %v2953 = vadd.f32 %v2915, %v2916
      %2954 = vadd.xlane.f32.xlu0 %v2953
      %v2955 = vpop.xlane.xlu0 %2954
      %v2956 = vadd.f32 %v2917, %v2918
      %2957 = vadd.xlane.f32.xlu0 %v2956
      %v2958 = vpop.xlane.xlu0 %2957
      %v2959 = vadd.f32 %v2919, %v2920
      %2960 = vadd.xlane.f32.xlu0 %v2959
      %v2961 = vpop.xlane.xlu0 %2960
      %v2962 = vadd.f32 %v2921, %v2922
      %2963 = vadd.xlane.f32.xlu0 %v2962
      %v2964 = vpop.xlane.xlu0 %2963
      %v2965 = vadd.f32 %v2923, %v2924
      %2966 = vadd.xlane.f32.xlu0 %v2965
      %v2967 = vpop.xlane.xlu0 %2966
      %v2968 = vadd.f32 %v2925, %v2926
      %2969 = vadd.xlane.f32.xlu0 %v2968
      %v2970 = vpop.xlane.xlu0 %2969
      %v2971 = vadd.f32 %v2927, %v2928
      %2972 = vadd.xlane.f32.xlu0 %v2971
      %v2973 = vpop.xlane.xlu0 %2972
      %v2974 = vadd.f32 %v2929, %v2930
      %2975 = vadd.xlane.f32.xlu0 %v2974
      %v2976 = vpop.xlane.xlu0 %2975
      %v2977 = vadd.f32 %v2931, %v2932
      %2978 = vadd.xlane.f32.xlu0 %v2977
      %v2979 = vpop.xlane.xlu0 %2978
      %v2980 = vadd.f32 %v2933, %v2934
      %2981 = vadd.xlane.f32.xlu0 %v2980
      %v2982 = vpop.xlane.xlu0 %2981
      %v2983 = vld [vmem:[%s20] sm:$0x1]
      %s2984 = scalar_lea.vmem %s13, 384
      %v2985 = vld [vmem:[%s2984] sm:$0xff]
      %v2986 = vld [vmem:[%s2984 + $0x8] sm:$0xff]
      %v2987 = vld [vmem:[%s2984 + $0x10] sm:$0xff]
      %v2988 = vld [vmem:[%s2984 + $0x18] sm:$0xff]
      %v2989 = vld [vmem:[%s2984 + $0x20] sm:$0xff]
      %v2990 = vld [vmem:[%s2984 + $0x28] sm:$0xff]
      %v2991 = vld [vmem:[%s2984 + $0x30] sm:$0xff]
      %v2992 = vld [vmem:[%s2984 + $0x38] sm:$0xff]
      %v2993 = vld [vmem:[%s2984 + $0x40] sm:$0xff]
      %v2994 = vld [vmem:[%s2984 + $0x48] sm:$0xff]
      %v2995 = vld [vmem:[%s2984 + $0x50] sm:$0xff]
      %v2996 = vld [vmem:[%s2984 + $0x58] sm:$0xff]
      %v2997 = vld [vmem:[%s2984 + $0x60] sm:$0xff]
      %v2998 = vld [vmem:[%s2984 + $0x68] sm:$0xff]
      %v2999 = vld [vmem:[%s2984 + $0x70] sm:$0xff]
      %v3000 = vld [vmem:[%s2984 + $0x78] sm:$0xff]
      %v3001 = vlaneseq
      %v3002 = vshrl.u32 %v3001, 7
      %v3003 = vsub.s32 3, %v3002
      %v3004 = vrot.slane %v2319, %v3003
      %v3005 = vmul.f32 %v1748, %v3004
      %v3006 = vmul.f32 %v1753, %v3004
      %v3007 = vmul.f32 %v1758, %v3004
      %v3008 = vmul.f32 %v1763, %v3004
      %v3009 = vmul.f32 %v1768, %v3004
      %v3010 = vmul.f32 %v1773, %v3004
      %v3011 = vmul.f32 %v1778, %v3004
      %v3012 = vmul.f32 %v1783, %v3004
      %v3013 = vmul.f32 %v1788, %v3004
      %v3014 = vmul.f32 %v1793, %v3004
      %v3015 = vmul.f32 %v1798, %v3004
      %v3016 = vmul.f32 %v1803, %v3004
      %v3017 = vmul.f32 %v1808, %v3004
      %v3018 = vmul.f32 %v1813, %v3004
      %v3019 = vmul.f32 %v1818, %v3004
      %v3020 = vmul.f32 %v1823, %v3004
      %v3021 = vsel %vm2357, %v3005, 0.0
      %3022 = vadd.xlane.f32.xlu0 %v3021
      %v3023 = vpop.xlane.xlu0 %3022
      %v3024 = vsel %vm2357, %v3006, 0.0
      %3025 = vadd.xlane.f32.xlu0 %v3024
      %v3026 = vpop.xlane.xlu0 %3025
      %v3027 = vsel %vm2357, %v3007, 0.0
      %3028 = vadd.xlane.f32.xlu0 %v3027
      %v3029 = vpop.xlane.xlu0 %3028
      %v3030 = vsel %vm2357, %v3008, 0.0
      %3031 = vadd.xlane.f32.xlu0 %v3030
      %v3032 = vpop.xlane.xlu0 %3031
      %v3033 = vsel %vm2357, %v3009, 0.0
      %3034 = vadd.xlane.f32.xlu0 %v3033
      %v3035 = vpop.xlane.xlu0 %3034
      %v3036 = vsel %vm2357, %v3010, 0.0
      %3037 = vadd.xlane.f32.xlu0 %v3036
      %v3038 = vpop.xlane.xlu0 %3037
      %v3039 = vsel %vm2357, %v3011, 0.0
      %3040 = vadd.xlane.f32.xlu0 %v3039
      %v3041 = vpop.xlane.xlu0 %3040
      %v3042 = vsel %vm2357, %v3012, 0.0
      %3043 = vadd.xlane.f32.xlu0 %v3042
      %v3044 = vpop.xlane.xlu0 %3043
      %v3045 = vsel %vm2357, %v3013, 0.0
      %3046 = vadd.xlane.f32.xlu0 %v3045
      %v3047 = vpop.xlane.xlu0 %3046
      %v3048 = vsel %vm2357, %v3014, 0.0
      %3049 = vadd.xlane.f32.xlu0 %v3048
      %v3050 = vpop.xlane.xlu0 %3049
      %v3051 = vsel %vm2357, %v3015, 0.0
      %3052 = vadd.xlane.f32.xlu0 %v3051
      %v3053 = vpop.xlane.xlu0 %3052
      %v3054 = vsel %vm2357, %v3016, 0.0
      %3055 = vadd.xlane.f32.xlu0 %v3054
      %v3056 = vpop.xlane.xlu0 %3055
      %v3057 = vsel %vm2357, %v3017, 0.0
      %3058 = vadd.xlane.f32.xlu0 %v3057
      %v3059 = vpop.xlane.xlu0 %3058
      %v3060 = vsel %vm2357, %v3018, 0.0
      %3061 = vadd.xlane.f32.xlu0 %v3060
      %v3062 = vpop.xlane.xlu0 %3061
      %v3063 = vsel %vm2357, %v3019, 0.0
      %3064 = vadd.xlane.f32.xlu0 %v3063
      %v3065 = vpop.xlane.xlu0 %3064
      %v3066 = vsel %vm2357, %v3020, 0.0
      %3067 = vadd.xlane.f32.xlu0 %v3066
      %v3068 = vpop.xlane.xlu0 %3067
      %v3069 = vmul.f32 %v3023, %v2985
      %v3070 = vmul.f32 %v3026, %v2986
      %v3071 = vmul.f32 %v3029, %v2987
      %v3072 = vmul.f32 %v3032, %v2988
      %v3073 = vmul.f32 %v3035, %v2989
      %v3074 = vmul.f32 %v3038, %v2990
      %v3075 = vmul.f32 %v3041, %v2991
      %v3076 = vmul.f32 %v3044, %v2992
      %v3077 = vmul.f32 %v3047, %v2993
      %v3078 = vmul.f32 %v3050, %v2994
      %v3079 = vmul.f32 %v3053, %v2995
      %v3080 = vmul.f32 %v3056, %v2996
      %v3081 = vmul.f32 %v3059, %v2997
      %v3082 = vmul.f32 %v3062, %v2998
      %v3083 = vmul.f32 %v3065, %v2999
      %v3084 = vmul.f32 %v3068, %v3000
      %v3085 = vadd.f32 %v3069, %v3070
      %v3086 = vadd.f32 %v3085, %v3071
      %v3087 = vadd.f32 %v3086, %v3072
      %v3088 = vadd.f32 %v3087, %v3073
      %v3089 = vadd.f32 %v3088, %v3074
      %v3090 = vadd.f32 %v3089, %v3075
      %v3091 = vadd.f32 %v3090, %v3076
      %v3092 = vadd.f32 %v3091, %v3077
      %v3093 = vadd.f32 %v3092, %v3078
      %v3094 = vadd.f32 %v3093, %v3079
      %v3095 = vadd.f32 %v3094, %v3080
      %v3096 = vadd.f32 %v3095, %v3081
      %v3097 = vadd.f32 %v3096, %v3082
      %v3098 = vadd.f32 %v3097, %v3083
      %v3099 = vadd.f32 %v3098, %v3084
      %v3100 = vrot.slane %v3099, 4
      %v3101 = vadd.f32 %v3099, %v3100
      %v3102 = vrot.slane %v3101, 2
      %v3103 = vadd.f32 %v3101, %v3102
      %v3104 = vrot.slane %v3103, 1
      %v3105 = vadd.f32 %v3103, %v3104
      %v3106 = vadd.f32 %v2983, %v3105
      %v3107 = vld [vmem:[%s18] sm:$0xff]
      %v3108 = vld [vmem:[%s18 + $0x8] sm:$0xff]
      %v3109 = vld [vmem:[%s18 + $0x10] sm:$0xff]
      %v3110 = vld [vmem:[%s18 + $0x18] sm:$0xff]
      %v3111 = vld [vmem:[%s18 + $0x20] sm:$0xff]
      %v3112 = vld [vmem:[%s18 + $0x28] sm:$0xff]
      %v3113 = vld [vmem:[%s18 + $0x30] sm:$0xff]
      %v3114 = vld [vmem:[%s18 + $0x38] sm:$0xff]
      %v3115 = vld [vmem:[%s18 + $0x40] sm:$0xff]
      %v3116 = vld [vmem:[%s18 + $0x48] sm:$0xff]
      %v3117 = vld [vmem:[%s18 + $0x50] sm:$0xff]
      %v3118 = vld [vmem:[%s18 + $0x58] sm:$0xff]
      %v3119 = vld [vmem:[%s18 + $0x60] sm:$0xff]
      %v3120 = vld [vmem:[%s18 + $0x68] sm:$0xff]
      %v3121 = vld [vmem:[%s18 + $0x70] sm:$0xff]
      %v3122 = vld [vmem:[%s18 + $0x78] sm:$0xff]
      %v3123 = vmul.f32 %v2937, %v3107
      %v3124 = vmul.f32 %v2940, %v3108
      %v3125 = vmul.f32 %v2943, %v3109
      %v3126 = vmul.f32 %v2946, %v3110
      %v3127 = vmul.f32 %v2949, %v3111
      %v3128 = vmul.f32 %v2952, %v3112
      %v3129 = vmul.f32 %v2955, %v3113
      %v3130 = vmul.f32 %v2958, %v3114
      %v3131 = vmul.f32 %v2961, %v3115
      %v3132 = vmul.f32 %v2964, %v3116
      %v3133 = vmul.f32 %v2967, %v3117
      %v3134 = vmul.f32 %v2970, %v3118
      %v3135 = vmul.f32 %v2973, %v3119
      %v3136 = vmul.f32 %v2976, %v3120
      %v3137 = vmul.f32 %v2979, %v3121
      %v3138 = vmul.f32 %v2982, %v3122
      %v3139 = vadd.f32 %v3123, %v3124
      %v3140 = vadd.f32 %v3139, %v3125
      %v3141 = vadd.f32 %v3140, %v3126
      %v3142 = vadd.f32 %v3141, %v3127
      %v3143 = vadd.f32 %v3142, %v3128
      %v3144 = vadd.f32 %v3143, %v3129
      %v3145 = vadd.f32 %v3144, %v3130
      %v3146 = vadd.f32 %v3145, %v3131
      %v3147 = vadd.f32 %v3146, %v3132
      %v3148 = vadd.f32 %v3147, %v3133
      %v3149 = vadd.f32 %v3148, %v3134
      %v3150 = vadd.f32 %v3149, %v3135
      %v3151 = vadd.f32 %v3150, %v3136
      %v3152 = vadd.f32 %v3151, %v3137
      %v3153 = vadd.f32 %v3152, %v3138
      %v3154 = vrot.slane %v3153, 4
      %v3155 = vadd.f32 %v3153, %v3154
      %v3156 = vrot.slane %v3155, 2
      %v3157 = vadd.f32 %v3155, %v3156
      %v3158 = vrot.slane %v3157, 1
      %v3159 = vadd.f32 %v3157, %v3158
      %v3160 = vadd.f32 %v3106, %v3159
      %v3161 = vld [vmem:[%s19] sm:$0xff]
      %v3162 = vld [vmem:[%s19 + $0x8] sm:$0xff]
      %v3163 = vld [vmem:[%s19 + $0x10] sm:$0xff]
      %v3164 = vld [vmem:[%s19 + $0x18] sm:$0xff]
      %v3165 = vld [vmem:[%s19 + $0x20] sm:$0xff]
      %v3166 = vld [vmem:[%s19 + $0x28] sm:$0xff]
      %v3167 = vld [vmem:[%s19 + $0x30] sm:$0xff]
      %v3168 = vld [vmem:[%s19 + $0x38] sm:$0xff]
      %v3169 = vmul.f32 %v2883, %v3161
      %v3170 = vmul.f32 %v2884, %v3162
      %v3171 = vmul.f32 %v2885, %v3163
      %v3172 = vmul.f32 %v2886, %v3164
      %v3173 = vmul.f32 %v2887, %v3165
      %v3174 = vmul.f32 %v2888, %v3166
      %v3175 = vmul.f32 %v2889, %v3167
      %v3176 = vmul.f32 %v2890, %v3168
      %v3177 = vadd.f32 %v3169, %v3170
      %v3178 = vadd.f32 %v3177, %v3171
      %v3179 = vadd.f32 %v3178, %v3172
      %v3180 = vadd.f32 %v3179, %v3173
      %v3181 = vadd.f32 %v3180, %v3174
      %v3182 = vadd.f32 %v3181, %v3175
      %v3183 = vadd.f32 %v3182, %v3176
      %v3184 = vrot.slane %v3183, 4
      %v3185 = vadd.f32 %v3183, %v3184
      %v3186 = vrot.slane %v3185, 2
      %v3187 = vadd.f32 %v3185, %v3186
      %v3188 = vrot.slane %v3187, 1
      %v3189 = vadd.f32 %v3187, %v3188
      %v3190 = vadd.f32 %v3160, %v3189
      %3191 = vst [vmem:[%s714] sm:$0x1] %v3190
      %3192 = vst [vmem:[%s714 + $0x1] sm:$0x1] %v2809
      %3193 = vst [vmem:[%s714 + $0x2] sm:$0x1] %v2566
      %3194 = vst [vmem:[%s714 + $0x3] sm:$0x1] %v2318
      %p3195 = scmp.lt.s32.totalorder %s32, 1
      %s3196 = scalar_select %p3195, %s32, 1
      %s3197 = smul.addr %s3196, 4
      %s3198 = scalar_lea.vmem %s21, %s3197
      // Predicated region
      $region105: #{fpn_forward.1} parent=103 // pred_check
        %p3199 = pneg %p511
      $region106: #{fpn_forward.1} parent=103 // pred_check_branch
        %3201 = sbr.rel (%p3199) target = $region108
      $region107: #{fpn_forward.1} parent=103 // pred_region
        _
      $region108: #{fpn_forward.1} parent=103 // pred_fallthru
        _
    $region104: #{fpn_forward.1} parent=5 // pred_fallthru
      _
    %p3202 = scmp.le.s32.totalorder 2, %s27
    // Predicated region
    $region109: #{fpn_forward.1} parent=5 // pred_check
      %p3203 = pneg %p3202
    $region110: #{fpn_forward.1} parent=5 // pred_check_branch
      %3205 = sbr.rel (%p3203) target = $region112
    $region111: #{fpn_forward.1} parent=5 // pred_region
      %s3206 = ssub.s32 %s27, 2
      // Predicated region
      $region113: #{fpn_forward.1} parent=111 // pred_check
        %p3207 = pneg %p517
      $region114: #{fpn_forward.1} parent=111 // pred_check_branch
        %3209 = sbr.rel (%p3207) target = $region116
      $region115: #{fpn_forward.1} parent=111 // pred_region
        %p3210 = scmp.lt.s32.totalorder %s33, 1
        %s3211 = scalar_select %p3210, %s33, 1
        %s3212 = smul.addr %s3211, 4
        %s3213 = scalar_lea.vmem %s21, %s3212
      $region116: #{fpn_forward.1} parent=111 // pred_fallthru
        _
    $region112: #{fpn_forward.1} parent=5 // pred_fallthru
      _
  $region6: #{fpn_forward.1} parent=0 // loop_footer
    %s31 = sadd.s32 1, %s27
  $region7: #{fpn_forward.1} parent=0 // loop_footer_branch
    %26 = sbr.rel target = $region3
  $region8: #{fpn_forward.1} parent=0 // loop_exit
    _

</llo_original>
